<compile_context>
chip_gen: v5e
topology: v5e:2x2
jax: 0.10.0
libtpu: 0.0.40
codegen_flags: <defaults>
</compile_context>

<pallas_src>
import math
import functools

import jax
import jax.numpy as jnp
from jax.experimental import pallas as pl
from jax.experimental.pallas import tpu as pltpu


# ----------------------------- helpers -----------------------------

_GELU_C = 0.7978845608028654  # sqrt(2/pi)
_VMEM_LIMIT = 32 * 1024 * 1024          # explicit scoped-VMEM cap (above v5e default)
_BLOCK_BUDGET = 8 * 1024 * 1024         # per-grid-step footprint target (x2 double-buffer)


def _gelu(x):
    return 0.5 * x * (1.0 + jnp.tanh(_GELU_C * (x + 0.044715 * x * x * x)))


def _choose_hw_tile(hw, per_lane_bytes):
    """Largest lane-dense tile (multiple of 128) that divides H*W and keeps the
    per-grid-step VMEM footprint under budget; full-size fallback otherwise."""
    for t in (2048, 1024, 512, 256, 128):
        if hw % t == 0 and t * per_lane_bytes <= _BLOCK_BUDGET:
            return t
    return hw


def _choose_mode_tile(m_total):
    # Tile the mode (lane) axis only when it is big enough to stay lane-dense;
    # otherwise one block per weight group (low/high) — the 2-step group grid
    # still pipelines the weight DMA.
    for t in (512, 256, 128):
        if m_total % t == 0:
            return t
    return m_total


# ----------------------------- Pallas kernels -----------------------------

def _stage1_kernel(x_ref, w1_ref, b1_ref, ws_ref, bs_ref, h_ref, x2_ref, sc_ref):
    # x: (Cin_tot, THW) channel-first tile.  One HBM read of x produces:
    #   h  = gelu(x)        (FNO branch / FFT input)
    #   x2 = conv1(h)       1x1 conv == W1 @ h
    #   sc = shortcut(x)    1x1 conv == Ws @ x
    # Weights are bf16; matmuls accumulate in f32 on the MXU.
    x = x_ref[...]
    h = _gelu(x)
    h_ref[...] = h
    h_bf = h.astype(jnp.bfloat16)
    x_bf = x.astype(jnp.bfloat16)
    x2_ref[...] = (jnp.dot(w1_ref[...], h_bf, preferred_element_type=jnp.float32)
                   + b1_ref[...])
    sc_ref[...] = (jnp.dot(ws_ref[...], x_bf, preferred_element_type=jnp.float32)
                   + bs_ref[...])


def _stage2_kernel(x1_ref, x2_ref, sc_ref, scale_ref, shift_ref, w2_ref, b2_ref,
                   h2_ref, part_ref):
    # out = x1 + x2 ; h2 = gelu(out*(1+scale)+shift) ; part = conv2(h2) + shortcut
    out = x1_ref[...] + x2_ref[...]                           # (Cout, THW)
    h = _gelu(out * (1.0 + scale_ref[...]) + shift_ref[...])  # scale/shift: (Cout, 1)
    h2_ref[...] = h
    part_ref[...] = (jnp.dot(w2_ref[...], h.astype(jnp.bfloat16),
                             preferred_element_type=jnp.float32)
                     + b2_ref[...] + sc_ref[...])


def _spectral_kernel(xr_ref, xi_ref, er_ref, ei_ref, wr_ref, wi_ref, or_ref, oi_ref):
    # Complex spectral mixing for one weight group (low/high rows) and one mode
    # tile, in mode-last layout (modes on the 128-lane axis):
    #   a[b,i,m]  = x_ft[b,i,m] * emb[b,m]            (complex multiply)
    #   out[b,o,m] = sum_i a[b,i,m] * W[i,o,m]        (per-mode complex contraction)
    # Channels are small, so the contraction runs on the VPU (broadcast-multiply
    # + add, unrolled over Cin) instead of a loop of tiny padded MXU matmuls.
    xr = xr_ref[...]                       # (B, Cin, MT) f32
    xi = xi_ref[...]
    er = er_ref[...]                       # (B, 1, MT)  f32
    ei = ei_ref[...]
    ar = xr * er - xi * ei
    ai = xr * ei + xi * er
    wr = wr_ref[...].astype(jnp.float32)   # (Cin, Cout, MT), stored bf16
    wi = wi_ref[...].astype(jnp.float32)

    b, cin, mt = xr.shape
    cout = wr.shape[1]
    acc_r = jnp.zeros((b, cout, mt), jnp.float32)
    acc_i = jnp.zeros((b, cout, mt), jnp.float32)
    for i in range(cin):                   # static unroll; Cin is small
        ari = ar[:, i, :][:, None, :]      # (B, 1, MT)
        aii = ai[:, i, :][:, None, :]
        wri = wr[i][None, :, :]            # (1, Cout, MT)
        wii = wi[i][None, :, :]
        acc_r = acc_r + ari * wri - aii * wii
        acc_i = acc_i + ari * wii + aii * wri
    or_ref[...] = acc_r
    oi_ref[...] = acc_i


# ----------------------------- Pallas wrappers -----------------------------

def stage1_pallas(x_flat, w1, b1, ws, bs, thw):
    B, cin, HW = x_flat.shape
    cout = w1.shape[0]
    grid = (B, HW // thw)
    in_act = pl.BlockSpec((None, cin, thw), lambda b, t: (b, 0, t))
    out_act_c = pl.BlockSpec((None, cout, thw), lambda b, t: (b, 0, t))
    w_spec = pl.BlockSpec((cout, cin), lambda b, t: (0, 0))
    b_spec = pl.BlockSpec((cout, 1), lambda b, t: (0, 0))
    return pl.pallas_call(
        _stage1_kernel,
        grid=grid,
        in_specs=[in_act, w_spec, b_spec, w_spec, b_spec],
        out_specs=[in_act, out_act_c, out_act_c],
        out_shape=[
            jax.ShapeDtypeStruct((B, cin, HW), jnp.float32),
            jax.ShapeDtypeStruct((B, cout, HW), jnp.float32),
            jax.ShapeDtypeStruct((B, cout, HW), jnp.float32),
        ],
        compiler_params=pltpu.CompilerParams(
            dimension_semantics=("parallel", "parallel"),
            vmem_limit_bytes=_VMEM_LIMIT),
    )(x_flat, w1, b1, ws, bs)


def stage2_pallas(x1, x2, sc, scale, shift, w2, b2, thw):
    B, cout, HW = x1.shape
    grid = (B, HW // thw)
    act = pl.BlockSpec((None, cout, thw), lambda b, t: (b, 0, t))
    vec = pl.BlockSpec((None, cout, 1), lambda b, t: (b, 0, 0))
    w_spec = pl.BlockSpec((cout, cout), lambda b, t: (0, 0))
    b_spec = pl.BlockSpec((cout, 1), lambda b, t: (0, 0))
    return pl.pallas_call(
        _stage2_kernel,
        grid=grid,
        in_specs=[act, act, act, vec, vec, w_spec, b_spec],
        out_specs=[act, act],
        out_shape=[jax.ShapeDtypeStruct((B, cout, HW), jnp.float32),
                   jax.ShapeDtypeStruct((B, cout, HW), jnp.float32)],
        compiler_params=pltpu.CompilerParams(
            dimension_semantics=("parallel", "parallel"),
            vmem_limit_bytes=_VMEM_LIMIT),
    )(x1, x2, sc, scale, shift, w2, b2)


def spectral_mix_pallas(xr, xi, er, ei, wr, wi):
    nb, B, cin, M = xr.shape      # nb = 2 weight groups (low / high rows)
    cout = wr.shape[2]
    mt = _choose_mode_tile(M)
    grid = (nb, M // mt)
    x_spec = pl.BlockSpec((None, B, cin, mt), lambda k, m: (k, 0, 0, m))
    e_spec = pl.BlockSpec((None, B, 1, mt), lambda k, m: (k, 0, 0, m))
    w_spec = pl.BlockSpec((None, cin, cout, mt), lambda k, m: (k, 0, 0, m))
    o_spec = pl.BlockSpec((None, B, cout, mt), lambda k, m: (k, 0, 0, m))
    return pl.pallas_call(
        _spectral_kernel,
        grid=grid,
        in_specs=[x_spec, x_spec, e_spec, e_spec, w_spec, w_spec],
        out_specs=[o_spec, o_spec],
        out_shape=[jax.ShapeDtypeStruct((nb, B, cout, M), jnp.float32),
                   jax.ShapeDtypeStruct((nb, B, cout, M), jnp.float32)],
        compiler_params=pltpu.CompilerParams(
            dimension_semantics=("parallel", "parallel"),
            vmem_limit_bytes=_VMEM_LIMIT),
    )(xr, xi, er, ei, wr, wi)


# ----------------------------- FNO spectral conv -----------------------------

def fno_conv2d(h_flat, femb, fp, H, W):
    """FNOConv2d.forward given the precomputed FreqLinear output.

    h_flat : (B, Cin, H*W) float32, channel-first flat spatial layout
    femb   : (B, m1, m2, 2, 2) — FreqLinear output; [..., k, 0]/[..., k, 1] are
             the real/imag parts of emb_{k+1} (matches torch.view_as_complex).
    fp     : prepared spectral weights, mode-last, both weight groups stacked.
    """
    B, cin, HW = h_flat.shape
    cout, m1, m2 = fp["cout"], fp["m1"], fp["m2"]
    Wf = W // 2 + 1
    n1 = min(H // 2, m1)
    n2 = min(Wf, m2)
    # PyTorch's broadcast/einsum requires retained modes == modes1/modes2.
    assert n1 == m1 and n2 == m2, "need H//2 >= modes1 and W//2+1 >= modes2"
    M = m1 * m2

    # TODO(synk): no Pallas FFT primitive — rfft2/irfft2 stay in XLA.
    x_ft = jnp.fft.rfft2(h_flat.reshape(B, cin, H, W), norm="ortho")  # (B,Cin,H,Wf)

    # Retained-mode gather: static slices in the natural layout + contiguous
    # reshapes only — no transposes are materialized.
    s_low = x_ft[:, :, :n1, :n2]
    s_high = x_ft[:, :, H - n1:, :n2]
    xr = jnp.stack([jnp.real(s_low), jnp.real(s_high)]).reshape(2, B, cin, M)
    xi = jnp.stack([jnp.imag(s_low), jnp.imag(s_high)]).reshape(2, B, cin, M)
    er = jnp.stack([femb[..., 0, 0], femb[..., 1, 0]]).reshape(2, B, 1, M)
    ei = jnp.stack([femb[..., 0, 1], femb[..., 1, 1]]).reshape(2, B, 1, M)

    or_, oi_ = spectral_mix_pallas(xr, xi, er, ei, fp["wr"], fp["wi"])

    # Scatter back into the (pre-zeroed) spectrum with static-offset updates.
    o_r = or_.reshape(2, B, cout, n1, n2)
    o_i = oi_.reshape(2, B, cout, n1, n2)
    zeros = jnp.zeros((B, cout, H, Wf), jnp.float32)
    out_r = zeros.at[:, :, :n1, :n2].set(o_r[0]).at[:, :, H - n1:, :n2].set(o_r[1])
    out_i = zeros.at[:, :, :n1, :n2].set(o_i[0]).at[:, :, H - n1:, :n2].set(o_i[1])
    out_ft = jax.lax.complex(out_r, out_i)

    y = jnp.fft.irfft2(out_ft, s=(H, W), norm="ortho")
    return y.reshape(B, cout, H * W).astype(jnp.float32)


# ----------------------------- Module forward -----------------------------

def fourier_up_block_forward(params, x, emb):
    """FourierUpBlock.forward (has_attn=False, norm=False, scale_shift_norm=True)."""
    B, cin_tot, H, W = x.shape
    cout = params["cout"]
    m1, m2 = params["m1"], params["m2"]
    HW = H * W
    M = m1 * m2

    x_flat = x.reshape(B, cin_tot, HW)   # channel-first flat layout (no transpose)

    # Fused cond-embedding matmul [FreqLinear_1 | FreqLinear_2 | cond_emb Linear]:
    # a few-KB matmul — plain jnp so XLA fuses the downstream reshapes/slices.
    cond = jnp.dot(emb, params["cond_w"]) + params["cond_b"]
    mm = 4 * M
    femb1 = cond[:, :mm].reshape(B, m1, m2, 2, 2)
    femb2 = cond[:, mm:2 * mm].reshape(B, m1, m2, 2, 2)
    ce = cond[:, 2 * mm:]
    scale = ce[:, :cout].reshape(B, cout, 1)
    shift = ce[:, cout:].reshape(B, cout, 1)

    # HW tile: f32 bytes of all blocks touched per grid step, per lane.
    per_lane = 4 * max(2 * cin_tot + 2 * cout, 5 * cout)
    thw = _choose_hw_tile(HW, per_lane)

    # Stage 1 (fused): h = gelu(norm1(x)); x2 = conv1(h); sc = shortcut(x)
    h, x2, sc = stage1_pallas(x_flat, params["conv1_w"], params["conv1_b"],
                              params["sc_w"], params["sc_b"], thw)

    # x1 = fourier1(h, emb)
    x1 = fno_conv2d(h, femb1, params["f1"], H, W)

    # Stage 2 (fused): h2 = gelu((x1+x2)*(1+scale)+shift); part = conv2(h2)+sc
    h2, part = stage2_pallas(x1, x2, sc, scale, shift,
                             params["conv2_w"], params["conv2_b"], thw)

    # y1 = fourier2(h2, emb); out = y1 + part (plain jnp add: fused by XLA into
    # the irfft2 epilogue, no extra HBM pass / kernel launch).
    y1 = fno_conv2d(h2, femb2, params["f2"], H, W)
    out = y1 + part

    # attention = Identity (has_attn=False)
    return out.reshape(B, cout, H, W)


# ----------------------------- Parameters -----------------------------

def init_params(key, in_channels, out_channels, cond_channels, modes1, modes2):
    """Deterministic synthetic init (shapes match the PyTorch module's __init__).

    Note: the PyTorch code initializes FreqLinear weights and the imaginary parts
    of the spectral weights to exactly zero; small random values are used here so
    every code path is exercised.
    """
    c_in_tot = in_channels + out_channels
    keys = jax.random.split(key, 24)
    it = iter(keys)

    def rn(shape, scale):
        return scale * jax.random.normal(next(it), shape, dtype=jnp.float32)

    def fno(cin, cout_):
        w_scale = 1.0 / (cin * cout_)
        fl_scale = 1.0 / (cond_channels + 4 * modes1 * modes2)
        return {
            "w1r": rn((cin, cout_, modes1, modes2), w_scale),
            "w1i": rn((cin, cout_, modes1, modes2), w_scale),
            "w2r": rn((cin, cout_, modes1, modes2), w_scale),
            "w2i": rn((cin, cout_, modes1, modes2), w_scale),
            "freq_w": rn((cond_channels, 4 * modes1 * modes2), fl_scale),
            "freq_b": jnp.zeros((1, 4 * modes1 * modes2), jnp.float32),
        }

    return {
        "f1": fno(c_in_tot, out_channels),
        "f2": fno(out_channels, out_channels),
        # 1x1 convs stored as (Cout, Cin) (PyTorch Conv2d layout without k-dims)
        "conv1_w": rn((out_channels, c_in_tot), 1.0 / math.sqrt(c_in_tot)),
        "conv1_b": jnp.zeros((out_channels,), jnp.float32),
        "conv2_w": rn((out_channels, out_channels), 1.0 / math.sqrt(out_channels)),
        "conv2_b": jnp.zeros((out_channels,), jnp.float32),
        "sc_w": rn((out_channels, c_in_tot), 1.0 / math.sqrt(c_in_tot)),
        "sc_b": jnp.zeros((out_channels,), jnp.float32),
        "cemb_w": rn((cond_channels, 2 * out_channels), 1.0 / math.sqrt(cond_channels)),
        "cemb_b": jnp.zeros((1, 2 * out_channels), jnp.float32),
    }


def prepare_params(raw, modes1, modes2, out_channels):
    """One-time (outside the hot path) re-layout:
       - spectral weights -> mode-last (2, Cin, Cout, M) bf16 (pure reshape + cast);
       - FreqLinear (x2) + cond_emb weights fused into one matmul;
       - conv / shortcut weights -> bf16; biases as (Cout, 1) columns."""
    M = modes1 * modes2

    def prep_fno(f, cin):
        def mode_last(w):   # (Cin, Cout, m1, m2) -> (Cin, Cout, M): contiguous reshape
            return w.reshape(cin, out_channels, M)
        return {
            "wr": jnp.stack([mode_last(f["w1r"]), mode_last(f["w2r"])]).astype(jnp.bfloat16),
            "wi": jnp.stack([mode_last(f["w1i"]), mode_last(f["w2i"])]).astype(jnp.bfloat16),
            "cout": out_channels, "m1": modes1, "m2": modes2,
        }

    cin1 = raw["conv1_w"].shape[1]
    return {
        "f1": prep_fno(raw["f1"], cin1),
        "f2": prep_fno(raw["f2"], out_channels),
        "conv1_w": raw["conv1_w"].astype(jnp.bfloat16),
        "conv1_b": raw["conv1_b"].reshape(-1, 1),
        "conv2_w": raw["conv2_w"].astype(jnp.bfloat16),
        "conv2_b": raw["conv2_b"].reshape(-1, 1),
        "sc_w": raw["sc_w"].astype(jnp.bfloat16),
        "sc_b": raw["sc_b"].reshape(-1, 1),
        "cond_w": jnp.concatenate(
            [raw["f1"]["freq_w"], raw["f2"]["freq_w"], raw["cemb_w"]], axis=1),
        "cond_b": jnp.concatenate(
            [raw["f1"]["freq_b"], raw["f2"]["freq_b"], raw["cemb_b"]], axis=1),
        "cout": out_channels, "m1": modes1, "m2": modes2,
    }


# ----------------------------- Main -----------------------------

if __name__ == "__main__":
    B = 2
    in_channels = 4
    out_channels = 8
    cond_channels = 16
    modes1 = modes2 = 4
    H = W = 16

    key = jax.random.PRNGKey(0)
    kp, kx, ke = jax.random.split(key, 3)

    raw = init_params(kp, in_channels, out_channels, cond_channels, modes1, modes2)
    params = prepare_params(raw, modes1, modes2, out_channels)

    # FourierUpBlock input: skip-concatenated features (in_channels + out_channels)
    x = jax.random.normal(kx, (B, in_channels + out_channels, H, W), dtype=jnp.float32)
    emb = jax.random.normal(ke, (B, cond_channels), dtype=jnp.float32)

    fwd = jax.jit(functools.partial(fourier_up_block_forward, params))
    out = jax.block_until_ready(fwd(x, emb))

    assert out.shape == (B, out_channels, H, W), out.shape
    assert out.dtype == jnp.float32
    assert bool(jnp.all(jnp.isfinite(out)))
    print("KERNEL_OK")
</pallas_src>

<mosaic_0001>
module attributes {stable_mosaic.version = 11 : i64} {
  func.func @_stage1_kernel(%arg0: i32, %arg1: i32, %arg2: memref<1x12x256xf32, #tpu.memory_space<vmem>>, %arg3: memref<8x12xbf16, #tpu.memory_space<vmem>>, %arg4: memref<8x1xf32, #tpu.memory_space<vmem>>, %arg5: memref<8x12xbf16, #tpu.memory_space<vmem>>, %arg6: memref<8x1xf32, #tpu.memory_space<vmem>>, %arg7: memref<1x12x256xf32, #tpu.memory_space<vmem>>, %arg8: memref<1x8x256xf32, #tpu.memory_space<vmem>>, %arg9: memref<1x8x256xf32, #tpu.memory_space<vmem>>) attributes {dimension_semantics = [#tpu.dimension_semantics<parallel>, #tpu.dimension_semantics<parallel>], iteration_bounds = array<i64: 2, 1>, scalar_prefetch = 0 : i64, scratch_operands = 0 : i64, tpu.core_type = #tpu.core_type<tc>, window_params = [{transform_indices = @transform_0, window_bounds = array<i64: 1, 12, 256>}, {pipeline_mode = #tpu.pipeline_mode<synchronous>, transform_indices = @transform_1, window_bounds = array<i64: 8, 12>}, {pipeline_mode = #tpu.pipeline_mode<synchronous>, transform_indices = @transform_2, window_bounds = array<i64: 8, 1>}, {pipeline_mode = #tpu.pipeline_mode<synchronous>, transform_indices = @transform_3, window_bounds = array<i64: 8, 12>}, {pipeline_mode = #tpu.pipeline_mode<synchronous>, transform_indices = @transform_4, window_bounds = array<i64: 8, 1>}, {transform_indices = @transform_5, window_bounds = array<i64: 1, 12, 256>}, {transform_indices = @transform_6, window_bounds = array<i64: 1, 8, 256>}, {transform_indices = @transform_7, window_bounds = array<i64: 1, 8, 256>}]} {
    %c0 = arith.constant 0 : index
    %c0_0 = arith.constant 0 : index
    %c0_1 = arith.constant 0 : index
    %0 = vector.load %arg2[%c0, %c0_0, %c0_1] : memref<1x12x256xf32, #tpu.memory_space<vmem>>, vector<1x12x256xf32>
    %1 = vector.shape_cast %0 : vector<1x12x256xf32> to vector<12x256xf32>
    %cst = arith.constant 5.000000e-01 : f32
    %2 = vector.broadcast %cst : f32 to vector<12x256xf32>
    %3 = arith.mulf %2, %1 : vector<12x256xf32>
    %cst_2 = arith.constant 4.471500e-02 : f32
    %4 = vector.broadcast %cst_2 : f32 to vector<12x256xf32>
    %5 = arith.mulf %4, %1 : vector<12x256xf32>
    %6 = arith.mulf %5, %1 : vector<12x256xf32>
    %7 = arith.mulf %6, %1 : vector<12x256xf32>
    %8 = arith.addf %1, %7 : vector<12x256xf32>
    %cst_3 = arith.constant 0.797884583 : f32
    %9 = vector.broadcast %cst_3 : f32 to vector<12x256xf32>
    %10 = arith.mulf %9, %8 : vector<12x256xf32>
    %11 = math.tanh %10 : vector<12x256xf32>
    %cst_4 = arith.constant 1.000000e+00 : f32
    %12 = vector.broadcast %cst_4 : f32 to vector<12x256xf32>
    %13 = arith.addf %12, %11 : vector<12x256xf32>
    %14 = arith.mulf %3, %13 : vector<12x256xf32>
    %c0_5 = arith.constant 0 : index
    %c0_6 = arith.constant 0 : index
    %c0_7 = arith.constant 0 : index
    %15 = vector.load %arg7[%c0_5, %c0_6, %c0_7] : memref<1x12x256xf32, #tpu.memory_space<vmem>>, vector<1x12x256xf32>
    %16 = vector.shape_cast %15 : vector<1x12x256xf32> to vector<12x256xf32>
    %17 = vector.shape_cast %14 : vector<12x256xf32> to vector<1x12x256xf32>
    tpu.vector_store %arg7[%c0_5, %c0_6, %c0_7], %17 {strides = array<i32>} : memref<1x12x256xf32, #tpu.memory_space<vmem>>, vector<1x12x256xf32>,
    %18 = arith.truncf %14 : vector<12x256xf32> to vector<12x256xbf16>
    %19 = arith.truncf %1 : vector<12x256xf32> to vector<12x256xbf16>
    %c0_8 = arith.constant 0 : index
    %c0_9 = arith.constant 0 : index
    %20 = vector.load %arg3[%c0_8, %c0_9] : memref<8x12xbf16, #tpu.memory_space<vmem>>, vector<8x12xbf16>
    %cst_10 = arith.constant dense<0.000000e+00> : vector<8x256xf32>
    %21 = tpu.matmul %20, %18, %cst_10 {dimension_numbers = #tpu.dot_dimension_numbers<[1], [0], [0], [1], [0, 0, 1, 1], [], []>} : vector<8x12xbf16>, vector<12x256xbf16>, vector<8x256xf32> -> vector<8x256xf32>
    %c0_11 = arith.constant 0 : index
    %c0_12 = arith.constant 0 : index
    %22 = vector.load %arg4[%c0_11, %c0_12] : memref<8x1xf32, #tpu.memory_space<vmem>>, vector<8x1xf32>
    %23 = vector.broadcast %22 : vector<8x1xf32> to vector<8x256xf32>
    %24 = arith.addf %21, %23 : vector<8x256xf32>
    %c0_13 = arith.constant 0 : index
    %c0_14 = arith.constant 0 : index
    %c0_15 = arith.constant 0 : index
    %25 = vector.load %arg8[%c0_13, %c0_14, %c0_15] : memref<1x8x256xf32, #tpu.memory_space<vmem>>, vector<1x8x256xf32>
    %26 = vector.shape_cast %25 : vector<1x8x256xf32> to vector<8x256xf32>
    %27 = vector.shape_cast %24 : vector<8x256xf32> to vector<1x8x256xf32>
    tpu.vector_store %arg8[%c0_13, %c0_14, %c0_15], %27 {strides = array<i32>} : memref<1x8x256xf32, #tpu.memory_space<vmem>>, vector<1x8x256xf32>,
    %c0_16 = arith.constant 0 : index
    %c0_17 = arith.constant 0 : index
    %28 = vector.load %arg5[%c0_16, %c0_17] : memref<8x12xbf16, #tpu.memory_space<vmem>>, vector<8x12xbf16>
    %cst_18 = arith.constant dense<0.000000e+00> : vector<8x256xf32>
    %29 = tpu.matmul %28, %19, %cst_18 {dimension_numbers = #tpu.dot_dimension_numbers<[1], [0], [0], [1], [0, 0, 1, 1], [], []>} : vector<8x12xbf16>, vector<12x256xbf16>, vector<8x256xf32> -> vector<8x256xf32>
    %c0_19 = arith.constant 0 : index
    %c0_20 = arith.constant 0 : index
    %30 = vector.load %arg6[%c0_19, %c0_20] : memref<8x1xf32, #tpu.memory_space<vmem>>, vector<8x1xf32>
    %31 = vector.broadcast %30 : vector<8x1xf32> to vector<8x256xf32>
    %32 = arith.addf %29, %31 : vector<8x256xf32>
    %c0_21 = arith.constant 0 : index
    %c0_22 = arith.constant 0 : index
    %c0_23 = arith.constant 0 : index
    %33 = vector.load %arg9[%c0_21, %c0_22, %c0_23] : memref<1x8x256xf32, #tpu.memory_space<vmem>>, vector<1x8x256xf32>
    %34 = vector.shape_cast %33 : vector<1x8x256xf32> to vector<8x256xf32>
    %35 = vector.shape_cast %32 : vector<8x256xf32> to vector<1x8x256xf32>
    tpu.vector_store %arg9[%c0_21, %c0_22, %c0_23], %35 {strides = array<i32>} : memref<1x8x256xf32, #tpu.memory_space<vmem>>, vector<1x8x256xf32>,
    return
  }
  func.func @transform_0(%arg0: i32, %arg1: i32) -> (i32, i32, i32) {
    %c0_i32 = arith.constant 0 : i32
    %c0_i32_0 = arith.constant 0 : i32
    return %arg0, %c0_i32, %arg1 : i32, i32, i32
  }
  func.func @transform_1(%arg0: i32, %arg1: i32) -> (i32, i32) {
    %c0_i32 = arith.constant 0 : i32
    %c0_i32_0 = arith.constant 0 : i32
    %c0_i32_1 = arith.constant 0 : i32
    return %c0_i32, %c0_i32_0 : i32, i32
  }
  func.func @transform_2(%arg0: i32, %arg1: i32) -> (i32, i32) {
    %c0_i32 = arith.constant 0 : i32
    %c0_i32_0 = arith.constant 0 : i32
    %c0_i32_1 = arith.constant 0 : i32
    return %c0_i32, %c0_i32_0 : i32, i32
  }
  func.func @transform_3(%arg0: i32, %arg1: i32) -> (i32, i32) {
    %c0_i32 = arith.constant 0 : i32
    %c0_i32_0 = arith.constant 0 : i32
    %c0_i32_1 = arith.constant 0 : i32
    return %c0_i32, %c0_i32_0 : i32, i32
  }
  func.func @transform_4(%arg0: i32, %arg1: i32) -> (i32, i32) {
    %c0_i32 = arith.constant 0 : i32
    %c0_i32_0 = arith.constant 0 : i32
    %c0_i32_1 = arith.constant 0 : i32
    return %c0_i32, %c0_i32_0 : i32, i32
  }
  func.func @transform_5(%arg0: i32, %arg1: i32) -> (i32, i32, i32) {
    %c0_i32 = arith.constant 0 : i32
    %c0_i32_0 = arith.constant 0 : i32
    return %arg0, %c0_i32, %arg1 : i32, i32, i32
  }
  func.func @transform_6(%arg0: i32, %arg1: i32) -> (i32, i32, i32) {
    %c0_i32 = arith.constant 0 : i32
    %c0_i32_0 = arith.constant 0 : i32
    return %arg0, %c0_i32, %arg1 : i32, i32, i32
  }
  func.func @transform_7(%arg0: i32, %arg1: i32) -> (i32, i32, i32) {
    %c0_i32 = arith.constant 0 : i32
    %c0_i32_0 = arith.constant 0 : i32
    return %arg0, %c0_i32, %arg1 : i32, i32, i32
  }
}

module attributes {stable_mosaic.version = 11 : i64} {
  func.func @_spectral_kernel(%arg0: i32, %arg1: i32, %arg2: memref<1x2x12x16xf32, #tpu.memory_space<vmem>>, %arg3: memref<1x2x12x16xf32, #tpu.memory_space<vmem>>, %arg4: memref<1x2x1x16xf32, #tpu.memory_space<vmem>>, %arg5: memref<1x2x1x16xf32, #tpu.memory_space<vmem>>, %arg6: memref<1x12x8x16xbf16, #tpu.memory_space<vmem>>, %arg7: memref<1x12x8x16xbf16, #tpu.memory_space<vmem>>, %arg8: memref<1x2x8x16xf32, #tpu.memory_space<vmem>>, %arg9: memref<1x2x8x16xf32, #tpu.memory_space<vmem>>) attributes {dimension_semantics = [#tpu.dimension_semantics<parallel>, #tpu.dimension_semantics<parallel>], iteration_bounds = array<i64: 2, 1>, scalar_prefetch = 0 : i64, scratch_operands = 0 : i64, tpu.core_type = #tpu.core_type<tc>, window_params = [{transform_indices = @transform_0, window_bounds = array<i64: 1, 2, 12, 16>}, {transform_indices = @transform_1, window_bounds = array<i64: 1, 2, 12, 16>}, {transform_indices = @transform_2, window_bounds = array<i64: 1, 2, 1, 16>}, {transform_indices = @transform_3, window_bounds = array<i64: 1, 2, 1, 16>}, {transform_indices = @transform_4, window_bounds = array<i64: 1, 12, 8, 16>}, {transform_indices = @transform_5, window_bounds = array<i64: 1, 12, 8, 16>}, {transform_indices = @transform_6, window_bounds = array<i64: 1, 2, 8, 16>}, {transform_indices = @transform_7, window_bounds = array<i64: 1, 2, 8, 16>}]} {
    %c0 = arith.constant 0 : index
    %c0_0 = arith.constant 0 : index
    %c0_1 = arith.constant 0 : index
    %c0_2 = arith.constant 0 : index
    %0 = vector.load %arg2[%c0, %c0_0, %c0_1, %c0_2] : memref<1x2x12x16xf32, #tpu.memory_space<vmem>>, vector<1x2x12x16xf32>
    %1 = vector.shape_cast %0 : vector<1x2x12x16xf32> to vector<2x12x16xf32>
    %c0_3 = arith.constant 0 : index
    %c0_4 = arith.constant 0 : index
    %c0_5 = arith.constant 0 : index
    %c0_6 = arith.constant 0 : index
    %2 = vector.load %arg3[%c0_3, %c0_4, %c0_5, %c0_6] : memref<1x2x12x16xf32, #tpu.memory_space<vmem>>, vector<1x2x12x16xf32>
    %3 = vector.shape_cast %2 : vector<1x2x12x16xf32> to vector<2x12x16xf32>
    %c0_7 = arith.constant 0 : index
    %c0_8 = arith.constant 0 : index
    %c0_9 = arith.constant 0 : index
    %c0_10 = arith.constant 0 : index
    %4 = vector.load %arg4[%c0_7, %c0_8, %c0_9, %c0_10] : memref<1x2x1x16xf32, #tpu.memory_space<vmem>>, vector<1x2x1x16xf32>
    %5 = vector.shape_cast %4 : vector<1x2x1x16xf32> to vector<2x1x16xf32>
    %c0_11 = arith.constant 0 : index
    %c0_12 = arith.constant 0 : index
    %c0_13 = arith.constant 0 : index
    %c0_14 = arith.constant 0 : index
    %6 = vector.load %arg5[%c0_11, %c0_12, %c0_13, %c0_14] : memref<1x2x1x16xf32, #tpu.memory_space<vmem>>, vector<1x2x1x16xf32>
    %7 = vector.shape_cast %6 : vector<1x2x1x16xf32> to vector<2x1x16xf32>
    %8 = vector.broadcast %5 : vector<2x1x16xf32> to vector<2x12x16xf32>
    %9 = arith.mulf %1, %8 : vector<2x12x16xf32>
    %10 = vector.broadcast %7 : vector<2x1x16xf32> to vector<2x12x16xf32>
    %11 = arith.mulf %3, %10 : vector<2x12x16xf32>
    %12 = arith.subf %9, %11 : vector<2x12x16xf32>
    %13 = vector.broadcast %7 : vector<2x1x16xf32> to vector<2x12x16xf32>
    %14 = arith.mulf %1, %13 : vector<2x12x16xf32>
    %15 = vector.broadcast %5 : vector<2x1x16xf32> to vector<2x12x16xf32>
    %16 = arith.mulf %3, %15 : vector<2x12x16xf32>
    %17 = arith.addf %14, %16 : vector<2x12x16xf32>
    %c0_15 = arith.constant 0 : index
    %c0_16 = arith.constant 0 : index
    %c0_17 = arith.constant 0 : index
    %c0_18 = arith.constant 0 : index
    %18 = vector.load %arg6[%c0_15, %c0_16, %c0_17, %c0_18] : memref<1x12x8x16xbf16, #tpu.memory_space<vmem>>, vector<1x12x8x16xbf16>
    %19 = vector.shape_cast %18 : vector<1x12x8x16xbf16> to vector<12x8x16xbf16>
    %20 = arith.extf %19 : vector<12x8x16xbf16> to vector<12x8x16xf32>
    %c0_19 = arith.constant 0 : index
    %c0_20 = arith.constant 0 : index
    %c0_21 = arith.constant 0 : index
    %c0_22 = arith.constant 0 : index
    %21 = vector.load %arg7[%c0_19, %c0_20, %c0_21, %c0_22] : memref<1x12x8x16xbf16, #tpu.memory_space<vmem>>, vector<1x12x8x16xbf16>
    %22 = vector.shape_cast %21 : vector<1x12x8x16xbf16> to vector<12x8x16xbf16>
    %23 = arith.extf %22 : vector<12x8x16xbf16> to vector<12x8x16xf32>
    %cst = arith.constant 0.000000e+00 : f32
    %24 = vector.broadcast %cst : f32 to vector<2x8x16xf32>
    %cst_23 = arith.constant 0.000000e+00 : f32
    %25 = vector.broadcast %cst_23 : f32 to vector<2x8x16xf32>
    %26 = vector.extract_strided_slice %12 {offsets = [0, 0, 0], sizes = [2, 1, 16], strides = [1, 1, 1]} : vector<2x12x16xf32> to vector<2x1x16xf32>
    %27 = vector.shape_cast %26 : vector<2x1x16xf32> to vector<2x16xf32>
    %28 = vector.shape_cast %27 : vector<2x16xf32> to vector<2x1x16xf32>
    %29 = vector.extract_strided_slice %17 {offsets = [0, 0, 0], sizes = [2, 1, 16], strides = [1, 1, 1]} : vector<2x12x16xf32> to vector<2x1x16xf32>
    %30 = vector.shape_cast %29 : vector<2x1x16xf32> to vector<2x16xf32>
    %31 = vector.shape_cast %30 : vector<2x16xf32> to vector<2x1x16xf32>
    %32 = vector.extract_strided_slice %20 {offsets = [0, 0, 0], sizes = [1, 8, 16], strides = [1, 1, 1]} : vector<12x8x16xf32> to vector<1x8x16xf32>
    %33 = vector.shape_cast %32 : vector<1x8x16xf32> to vector<8x16xf32>
    %34 = vector.shape_cast %33 : vector<8x16xf32> to vector<1x8x16xf32>
    %35 = vector.extract_strided_slice %23 {offsets = [0, 0, 0], sizes = [1, 8, 16], strides = [1, 1, 1]} : vector<12x8x16xf32> to vector<1x8x16xf32>
    %36 = vector.shape_cast %35 : vector<1x8x16xf32> to vector<8x16xf32>
    %37 = vector.shape_cast %36 : vector<8x16xf32> to vector<1x8x16xf32>
    %38 = vector.broadcast %28 : vector<2x1x16xf32> to vector<2x8x16xf32>
    %39 = vector.broadcast %34 : vector<1x8x16xf32> to vector<2x8x16xf32>
    %40 = arith.mulf %38, %39 : vector<2x8x16xf32>
    %41 = arith.addf %24, %40 : vector<2x8x16xf32>
    %42 = vector.broadcast %31 : vector<2x1x16xf32> to vector<2x8x16xf32>
    %43 = vector.broadcast %37 : vector<1x8x16xf32> to vector<2x8x16xf32>
    %44 = arith.mulf %42, %43 : vector<2x8x16xf32>
    %45 = arith.subf %41, %44 : vector<2x8x16xf32>
    %46 = vector.broadcast %28 : vector<2x1x16xf32> to vector<2x8x16xf32>
    %47 = vector.broadcast %37 : vector<1x8x16xf32> to vector<2x8x16xf32>
    %48 = arith.mulf %46, %47 : vector<2x8x16xf32>
    %49 = arith.addf %25, %48 : vector<2x8x16xf32>
    %50 = vector.broadcast %31 : vector<2x1x16xf32> to vector<2x8x16xf32>
    %51 = vector.broadcast %34 : vector<1x8x16xf32> to vector<2x8x16xf32>
    %52 = arith.mulf %50, %51 : vector<2x8x16xf32>
    %53 = arith.addf %49, %52 : vector<2x8x16xf32>
    %54 = vector.extract_strided_slice %12 {offsets = [0, 1, 0], sizes = [2, 1, 16], strides = [1, 1, 1]} : vector<2x12x16xf32> to vector<2x1x16xf32>
    %55 = vector.shape_cast %54 : vector<2x1x16xf32> to vector<2x16xf32>
    %56 = vector.shape_cast %55 : vector<2x16xf32> to vector<2x1x16xf32>
    %57 = vector.extract_strided_slice %17 {offsets = [0, 1, 0], sizes = [2, 1, 16], strides = [1, 1, 1]} : vector<2x12x16xf32> to vector<2x1x16xf32>
    %58 = vector.shape_cast %57 : vector<2x1x16xf32> to vector<2x16xf32>
    %59 = vector.shape_cast %58 : vector<2x16xf32> to vector<2x1x16xf32>
    %60 = vector.extract_strided_slice %20 {offsets = [1, 0, 0], sizes = [1, 8, 16], strides = [1, 1, 1]} : vector<12x8x16xf32> to vector<1x8x16xf32>
    %61 = vector.shape_cast %60 : vector<1x8x16xf32> to vector<8x16xf32>
    %62 = vector.shape_cast %61 : vector<8x16xf32> to vector<1x8x16xf32>
    %63 = vector.extract_strided_slice %23 {offsets = [1, 0, 0], sizes = [1, 8, 16], strides = [1, 1, 1]} : vector<12x8x16xf32> to vector<1x8x16xf32>
    %64 = vector.shape_cast %63 : vector<1x8x16xf32> to vector<8x16xf32>
    %65 = vector.shape_cast %64 : vector<8x16xf32> to vector<1x8x16xf32>
    %66 = vector.broadcast %56 : vector<2x1x16xf32> to vector<2x8x16xf32>
    %67 = vector.broadcast %62 : vector<1x8x16xf32> to vector<2x8x16xf32>
    %68 = arith.mulf %66, %67 : vector<2x8x16xf32>
    %69 = arith.addf %45, %68 : vector<2x8x16xf32>
    %70 = vector.broadcast %59 : vector<2x1x16xf32> to vector<2x8x16xf32>
    %71 = vector.broadcast %65 : vector<1x8x16xf32> to vector<2x8x16xf32>
    %72 = arith.mulf %70, %71 : vector<2x8x16xf32>
    %73 = arith.subf %69, %72 : vector<2x8x16xf32>
    %74 = vector.broadcast %56 : vector<2x1x16xf32> to vector<2x8x16xf32>
    %75 = vector.broadcast %65 : vector<1x8x16xf32> to vector<2x8x16xf32>
    %76 = arith.mulf %74, %75 : vector<2x8x16xf32>
    %77 = arith.addf %53, %76 : vector<2x8x16xf32>
    %78 = vector.broadcast %59 : vector<2x1x16xf32> to vector<2x8x16xf32>
    %79 = vector.broadcast %62 : vector<1x8x16xf32> to vector<2x8x16xf32>
    %80 = arith.mulf %78, %79 : vector<2x8x16xf32>
    %81 = arith.addf %77, %80 : vector<2x8x16xf32>
    %82 = vector.extract_strided_slice %12 {offsets = [0, 2, 0], sizes = [2, 1, 16], strides = [1, 1, 1]} : vector<2x12x16xf32> to vector<2x1x16xf32>
    %83 = vector.shape_cast %82 : vector<2x1x16xf32> to vector<2x16xf32>
    %84 = vector.shape_cast %83 : vector<2x16xf32> to vector<2x1x16xf32>
    %85 = vector.extract_strided_slice %17 {offsets = [0, 2, 0], sizes = [2, 1, 16], strides = [1, 1, 1]} : vector<2x12x16xf32> to vector<2x1x16xf32>
    %86 = vector.shape_cast %85 : vector<2x1x16xf32> to vector<2x16xf32>
    %87 = vector.shape_cast %86 : vector<2x16xf32> to vector<2x1x16xf32>
    %88 = vector.extract_strided_slice %20 {offsets = [2, 0, 0], sizes = [1, 8, 16], strides = [1, 1, 1]} : vector<12x8x16xf32> to vector<1x8x16xf32>
    %89 = vector.shape_cast %88 : vector<1x8x16xf32> to vector<8x16xf32>
    %90 = vector.shape_cast %89 : vector<8x16xf32> to vector<1x8x16xf32>
    %91 = vector.extract_strided_slice %23 {offsets = [2, 0, 0], sizes = [1, 8, 16], strides = [1, 1, 1]} : vector<12x8x16xf32> to vector<1x8x16xf32>
    %92 = vector.shape_cast %91 : vector<1x8x16xf32> to vector<8x16xf32>
    %93 = vector.shape_cast %92 : vector<8x16xf32> to vector<1x8x16xf32>
    %94 = vector.broadcast %84 : vector<2x1x16xf32> to vector<2x8x16xf32>
    %95 = vector.broadcast %90 : vector<1x8x16xf32> to vector<2x8x16xf32>
    %96 = arith.mulf %94, %95 : vector<2x8x16xf32>
    %97 = arith.addf %73, %96 : vector<2x8x16xf32>
    %98 = vector.broadcast %87 : vector<2x1x16xf32> to vector<2x8x16xf32>
    %99 = vector.broadcast %93 : vector<1x8x16xf32> to vector<2x8x16xf32>
    %100 = arith.mulf %98, %99 : vector<2x8x16xf32>
    %101 = arith.subf %97, %100 : vector<2x8x16xf32>
    %102 = vector.broadcast %84 : vector<2x1x16xf32> to vector<2x8x16xf32>
    %103 = vector.broadcast %93 : vector<1x8x16xf32> to vector<2x8x16xf32>
    %104 = arith.mulf %102, %103 : vector<2x8x16xf32>
    %105 = arith.addf %81, %104 : vector<2x8x16xf32>
    %106 = vector.broadcast %87 : vector<2x1x16xf32> to vector<2x8x16xf32>
    %107 = vector.broadcast %90 : vector<1x8x16xf32> to vector<2x8x16xf32>
    %108 = arith.mulf %106, %107 : vector<2x8x16xf32>
    %109 = arith.addf %105, %108 : vector<2x8x16xf32>
    %110 = vector.extract_strided_slice %12 {offsets = [0, 3, 0], sizes = [2, 1, 16], strides = [1, 1, 1]} : vector<2x12x16xf32> to vector<2x1x16xf32>
    %111 = vector.shape_cast %110 : vector<2x1x16xf32> to vector<2x16xf32>
    %112 = vector.shape_cast %111 : vector<2x16xf32> to vector<2x1x16xf32>
    %113 = vector.extract_strided_slice %17 {offsets = [0, 3, 0], sizes = [2, 1, 16], strides = [1, 1, 1]} : vector<2x12x16xf32> to vector<2x1x16xf32>
    %114 = vector.shape_cast %113 : vector<2x1x16xf32> to vector<2x16xf32>
    %115 = vector.shape_cast %114 : vector<2x16xf32> to vector<2x1x16xf32>
    %116 = vector.extract_strided_slice %20 {offsets = [3, 0, 0], sizes = [1, 8, 16], strides = [1, 1, 1]} : vector<12x8x16xf32> to vector<1x8x16xf32>
    %117 = vector.shape_cast %116 : vector<1x8x16xf32> to vector<8x16xf32>
    %118 = vector.shape_cast %117 : vector<8x16xf32> to vector<1x8x16xf32>
    %119 = vector.extract_strided_slice %23 {offsets = [3, 0, 0], sizes = [1, 8, 16], strides = [1, 1, 1]} : vector<12x8x16xf32> to vector<1x8x16xf32>
    %120 = vector.shape_cast %119 : vector<1x8x16xf32> to vector<8x16xf32>
    %121 = vector.shape_cast %120 : vector<8x16xf32> to vector<1x8x16xf32>
    %122 = vector.broadcast %112 : vector<2x1x16xf32> to vector<2x8x16xf32>
    %123 = vector.broadcast %118 : vector<1x8x16xf32> to vector<2x8x16xf32>
    %124 = arith.mulf %122, %123 : vector<2x8x16xf32>
    %125 = arith.addf %101, %124 : vector<2x8x16xf32>
    %126 = vector.broadcast %115 : vector<2x1x16xf32> to vector<2x8x16xf32>
    %127 = vector.broadcast %121 : vector<1x8x16xf32> to vector<2x8x16xf32>
    %128 = arith.mulf %126, %127 : vector<2x8x16xf32>
    %129 = arith.subf %125, %128 : vector<2x8x16xf32>
    %130 = vector.broadcast %112 : vector<2x1x16xf32> to vector<2x8x16xf32>
    %131 = vector.broadcast %121 : vector<1x8x16xf32> to vector<2x8x16xf32>
    %132 = arith.mulf %130, %131 : vector<2x8x16xf32>
    %133 = arith.addf %109, %132 : vector<2x8x16xf32>
    %134 = vector.broadcast %115 : vector<2x1x16xf32> to vector<2x8x16xf32>
    %135 = vector.broadcast %118 : vector<1x8x16xf32> to vector<2x8x16xf32>
    %136 = arith.mulf %134, %135 : vector<2x8x16xf32>
    %137 = arith.addf %133, %136 : vector<2x8x16xf32>
    %138 = vector.extract_strided_slice %12 {offsets = [0, 4, 0], sizes = [2, 1, 16], strides = [1, 1, 1]} : vector<2x12x16xf32> to vector<2x1x16xf32>
    %139 = vector.shape_cast %138 : vector<2x1x16xf32> to vector<2x16xf32>
    %140 = vector.shape_cast %139 : vector<2x16xf32> to vector<2x1x16xf32>
    %141 = vector.extract_strided_slice %17 {offsets = [0, 4, 0], sizes = [2, 1, 16], strides = [1, 1, 1]} : vector<2x12x16xf32> to vector<2x1x16xf32>
    %142 = vector.shape_cast %141 : vector<2x1x16xf32> to vector<2x16xf32>
    %143 = vector.shape_cast %142 : vector<2x16xf32> to vector<2x1x16xf32>
    %144 = vector.extract_strided_slice %20 {offsets = [4, 0, 0], sizes = [1, 8, 16], strides = [1, 1, 1]} : vector<12x8x16xf32> to vector<1x8x16xf32>
    %145 = vector.shape_cast %144 : vector<1x8x16xf32> to vector<8x16xf32>
    %146 = vector.shape_cast %145 : vector<8x16xf32> to vector<1x8x16xf32>
    %147 = vector.extract_strided_slice %23 {offsets = [4, 0, 0], sizes = [1, 8, 16], strides = [1, 1, 1]} : vector<12x8x16xf32> to vector<1x8x16xf32>
    %148 = vector.shape_cast %147 : vector<1x8x16xf32> to vector<8x16xf32>
    %149 = vector.shape_cast %148 : vector<8x16xf32> to vector<1x8x16xf32>
    %150 = vector.broadcast %140 : vector<2x1x16xf32> to vector<2x8x16xf32>
    %151 = vector.broadcast %146 : vector<1x8x16xf32> to vector<2x8x16xf32>
    %152 = arith.mulf %150, %151 : vector<2x8x16xf32>
    %153 = arith.addf %129, %152 : vector<2x8x16xf32>
    %154 = vector.broadcast %143 : vector<2x1x16xf32> to vector<2x8x16xf32>
    %155 = vector.broadcast %149 : vector<1x8x16xf32> to vector<2x8x16xf32>
    %156 = arith.mulf %154, %155 : vector<2x8x16xf32>
    %157 = arith.subf %153, %156 : vector<2x8x16xf32>
    %158 = vector.broadcast %140 : vector<2x1x16xf32> to vector<2x8x16xf32>
    %159 = vector.broadcast %149 : vector<1x8x16xf32> to vector<2x8x16xf32>
    %160 = arith.mulf %158, %159 : vector<2x8x16xf32>
    %161 = arith.addf %137, %160 : vector<2x8x16xf32>
    %162 = vector.broadcast %143 : vector<2x1x16xf32> to vector<2x8x16xf32>
    %163 = vector.broadcast %146 : vector<1x8x16xf32> to vector<2x8x16xf32>
    %164 = arith.mulf %162, %163 : vector<2x8x16xf32>
    %165 = arith.addf %161, %164 : vector<2x8x16xf32>
    %166 = vector.extract_strided_slice %12 {offsets = [0, 5, 0], sizes = [2, 1, 16], strides = [1, 1, 1]} : vector<2x12x16xf32> to vector<2x1x16xf32>
    %167 = vector.shape_cast %166 : vector<2x1x16xf32> to vector<2x16xf32>
    %168 = vector.shape_cast %167 : vector<2x16xf32> to vector<2x1x16xf32>
    %169 = vector.extract_strided_slice %17 {offsets = [0, 5, 0], sizes = [2, 1, 16], strides = [1, 1, 1]} : vector<2x12x16xf32> to vector<2x1x16xf32>
    %170 = vector.shape_cast %169 : vector<2x1x16xf32> to vector<2x16xf32>
    %171 = vector.shape_cast %170 : vector<2x16xf32> to vector<2x1x16xf32>
    %172 = vector.extract_strided_slice %20 {offsets = [5, 0, 0], sizes = [1, 8, 16], strides = [1, 1, 1]} : vector<12x8x16xf32> to vector<1x8x16xf32>
    %173 = vector.shape_cast %172 : vector<1x8x16xf32> to vector<8x16xf32>
    %174 = vector.shape_cast %173 : vector<8x16xf32> to vector<1x8x16xf32>
    %175 = vector.extract_strided_slice %23 {offsets = [5, 0, 0], sizes = [1, 8, 16], strides = [1, 1, 1]} : vector<12x8x16xf32> to vector<1x8x16xf32>
    %176 = vector.shape_cast %175 : vector<1x8x16xf32> to vector<8x16xf32>
    %177 = vector.shape_cast %176 : vector<8x16xf32> to vector<1x8x16xf32>
    %178 = vector.broadcast %168 : vector<2x1x16xf32> to vector<2x8x16xf32>
    %179 = vector.broadcast %174 : vector<1x8x16xf32> to vector<2x8x16xf32>
    %180 = arith.mulf %178, %179 : vector<2x8x16xf32>
    %181 = arith.addf %157, %180 : vector<2x8x16xf32>
    %182 = vector.broadcast %171 : vector<2x1x16xf32> to vector<2x8x16xf32>
    %183 = vector.broadcast %177 : vector<1x8x16xf32> to vector<2x8x16xf32>
    %184 = arith.mulf %182, %183 : vector<2x8x16xf32>
    %185 = arith.subf %181, %184 : vector<2x8x16xf32>
    %186 = vector.broadcast %168 : vector<2x1x16xf32> to vector<2x8x16xf32>
    %187 = vector.broadcast %177 : vector<1x8x16xf32> to vector<2x8x16xf32>
    %188 = arith.mulf %186, %187 : vector<2x8x16xf32>
    %189 = arith.addf %165, %188 : vector<2x8x16xf32>
    %190 = vector.broadcast %171 : vector<2x1x16xf32> to vector<2x8x16xf32>
    %191 = vector.broadcast %174 : vector<1x8x16xf32> to vector<2x8x16xf32>
    %192 = arith.mulf %190, %191 : vector<2x8x16xf32>
    %193 = arith.addf %189, %192 : vector<2x8x16xf32>
    %194 = vector.extract_strided_slice %12 {offsets = [0, 6, 0], sizes = [2, 1, 16], strides = [1, 1, 1]} : vector<2x12x16xf32> to vector<2x1x16xf32>
    %195 = vector.shape_cast %194 : vector<2x1x16xf32> to vector<2x16xf32>
    %196 = vector.shape_cast %195 : vector<2x16xf32> to vector<2x1x16xf32>
    %197 = vector.extract_strided_slice %17 {offsets = [0, 6, 0], sizes = [2, 1, 16], strides = [1, 1, 1]} : vector<2x12x16xf32> to vector<2x1x16xf32>
    %198 = vector.shape_cast %197 : vector<2x1x16xf32> to vector<2x16xf32>
    %199 = vector.shape_cast %198 : vector<2x16xf32> to vector<2x1x16xf32>
    %200 = vector.extract_strided_slice %20 {offsets = [6, 0, 0], sizes = [1, 8, 16], strides = [1, 1, 1]} : vector<12x8x16xf32> to vector<1x8x16xf32>
    %201 = vector.shape_cast %200 : vector<1x8x16xf32> to vector<8x16xf32>
    %202 = vector.shape_cast %201 : vector<8x16xf32> to vector<1x8x16xf32>
    %203 = vector.extract_strided_slice %23 {offsets = [6, 0, 0], sizes = [1, 8, 16], strides = [1, 1, 1]} : vector<12x8x16xf32> to vector<1x8x16xf32>
    %204 = vector.shape_cast %203 : vector<1x8x16xf32> to vector<8x16xf32>
    %205 = vector.shape_cast %204 : vector<8x16xf32> to vector<1x8x16xf32>
    %206 = vector.broadcast %196 : vector<2x1x16xf32> to vector<2x8x16xf32>
    %207 = vector.broadcast %202 : vector<1x8x16xf32> to vector<2x8x16xf32>
    %208 = arith.mulf %206, %207 : vector<2x8x16xf32>
    %209 = arith.addf %185, %208 : vector<2x8x16xf32>
    %210 = vector.broadcast %199 : vector<2x1x16xf32> to vector<2x8x16xf32>
    %211 = vector.broadcast %205 : vector<1x8x16xf32> to vector<2x8x16xf32>
    %212 = arith.mulf %210, %211 : vector<2x8x16xf32>
    %213 = arith.subf %209, %212 : vector<2x8x16xf32>
    %214 = vector.broadcast %196 : vector<2x1x16xf32> to vector<2x8x16xf32>
    %215 = vector.broadcast %205 : vector<1x8x16xf32> to vector<2x8x16xf32>
    %216 = arith.mulf %214, %215 : vector<2x8x16xf32>
    %217 = arith.addf %193, %216 : vector<2x8x16xf32>
    %218 = vector.broadcast %199 : vector<2x1x16xf32> to vector<2x8x16xf32>
    %219 = vector.broadcast %202 : vector<1x8x16xf32> to vector<2x8x16xf32>
    %220 = arith.mulf %218, %219 : vector<2x8x16xf32>
    %221 = arith.addf %217, %220 : vector<2x8x16xf32>
    %222 = vector.extract_strided_slice %12 {offsets = [0, 7, 0], sizes = [2, 1, 16], strides = [1, 1, 1]} : vector<2x12x16xf32> to vector<2x1x16xf32>
    %223 = vector.shape_cast %222 : vector<2x1x16xf32> to vector<2x16xf32>
    %224 = vector.shape_cast %223 : vector<2x16xf32> to vector<2x1x16xf32>
    %225 = vector.extract_strided_slice %17 {offsets = [0, 7, 0], sizes = [2, 1, 16], strides = [1, 1, 1]} : vector<2x12x16xf32> to vector<2x1x16xf32>
    %226 = vector.shape_cast %225 : vector<2x1x16xf32> to vector<2x16xf32>
    %227 = vector.shape_cast %226 : vector<2x16xf32> to vector<2x1x16xf32>
    %228 = vector.extract_strided_slice %20 {offsets = [7, 0, 0], sizes = [1, 8, 16], strides = [1, 1, 1]} : vector<12x8x16xf32> to vector<1x8x16xf32>
    %229 = vector.shape_cast %228 : vector<1x8x16xf32> to vector<8x16xf32>
    %230 = vector.shape_cast %229 : vector<8x16xf32> to vector<1x8x16xf32>
    %231 = vector.extract_strided_slice %23 {offsets = [7, 0, 0], sizes = [1, 8, 16], strides = [1, 1, 1]} : vector<12x8x16xf32> to vector<1x8x16xf32>
    %232 = vector.shape_cast %231 : vector<1x8x16xf32> to vector<8x16xf32>
    %233 = vector.shape_cast %232 : vector<8x16xf32> to vector<1x8x16xf32>
    %234 = vector.broadcast %224 : vector<2x1x16xf32> to vector<2x8x16xf32>
    %235 = vector.broadcast %230 : vector<1x8x16xf32> to vector<2x8x16xf32>
    %236 = arith.mulf %234, %235 : vector<2x8x16xf32>
    %237 = arith.addf %213, %236 : vector<2x8x16xf32>
    %238 = vector.broadcast %227 : vector<2x1x16xf32> to vector<2x8x16xf32>
    %239 = vector.broadcast %233 : vector<1x8x16xf32> to vector<2x8x16xf32>
    %240 = arith.mulf %238, %239 : vector<2x8x16xf32>
    %241 = arith.subf %237, %240 : vector<2x8x16xf32>
    %242 = vector.broadcast %224 : vector<2x1x16xf32> to vector<2x8x16xf32>
    %243 = vector.broadcast %233 : vector<1x8x16xf32> to vector<2x8x16xf32>
    %244 = arith.mulf %242, %243 : vector<2x8x16xf32>
    %245 = arith.addf %221, %244 : vector<2x8x16xf32>
    %246 = vector.broadcast %227 : vector<2x1x16xf32> to vector<2x8x16xf32>
    %247 = vector.broadcast %230 : vector<1x8x16xf32> to vector<2x8x16xf32>
    %248 = arith.mulf %246, %247 : vector<2x8x16xf32>
    %249 = arith.addf %245, %248 : vector<2x8x16xf32>
    %250 = vector.extract_strided_slice %12 {offsets = [0, 8, 0], sizes = [2, 1, 16], strides = [1, 1, 1]} : vector<2x12x16xf32> to vector<2x1x16xf32>
    %251 = vector.shape_cast %250 : vector<2x1x16xf32> to vector<2x16xf32>
    %252 = vector.shape_cast %251 : vector<2x16xf32> to vector<2x1x16xf32>
    %253 = vector.extract_strided_slice %17 {offsets = [0, 8, 0], sizes = [2, 1, 16], strides = [1, 1, 1]} : vector<2x12x16xf32> to vector<2x1x16xf32>
    %254 = vector.shape_cast %253 : vector<2x1x16xf32> to vector<2x16xf32>
    %255 = vector.shape_cast %254 : vector<2x16xf32> to vector<2x1x16xf32>
    %256 = vector.extract_strided_slice %20 {offsets = [8, 0, 0], sizes = [1, 8, 16], strides = [1, 1, 1]} : vector<12x8x16xf32> to vector<1x8x16xf32>
    %257 = vector.shape_cast %256 : vector<1x8x16xf32> to vector<8x16xf32>
    %258 = vector.shape_cast %257 : vector<8x16xf32> to vector<1x8x16xf32>
    %259 = vector.extract_strided_slice %23 {offsets = [8, 0, 0], sizes = [1, 8, 16], strides = [1, 1, 1]} : vector<12x8x16xf32> to vector<1x8x16xf32>
    %260 = vector.shape_cast %259 : vector<1x8x16xf32> to vector<8x16xf32>
    %261 = vector.shape_cast %260 : vector<8x16xf32> to vector<1x8x16xf32>
    %262 = vector.broadcast %252 : vector<2x1x16xf32> to vector<2x8x16xf32>
    %263 = vector.broadcast %258 : vector<1x8x16xf32> to vector<2x8x16xf32>
    %264 = arith.mulf %262, %263 : vector<2x8x16xf32>
    %265 = arith.addf %241, %264 : vector<2x8x16xf32>
    %266 = vector.broadcast %255 : vector<2x1x16xf32> to vector<2x8x16xf32>
    %267 = vector.broadcast %261 : vector<1x8x16xf32> to vector<2x8x16xf32>
    %268 = arith.mulf %266, %267 : vector<2x8x16xf32>
    %269 = arith.subf %265, %268 : vector<2x8x16xf32>
    %270 = vector.broadcast %252 : vector<2x1x16xf32> to vector<2x8x16xf32>
    %271 = vector.broadcast %261 : vector<1x8x16xf32> to vector<2x8x16xf32>
    %272 = arith.mulf %270, %271 : vector<2x8x16xf32>
    %273 = arith.addf %249, %272 : vector<2x8x16xf32>
    %274 = vector.broadcast %255 : vector<2x1x16xf32> to vector<2x8x16xf32>
    %275 = vector.broadcast %258 : vector<1x8x16xf32> to vector<2x8x16xf32>
    %276 = arith.mulf %274, %275 : vector<2x8x16xf32>
    %277 = arith.addf %273, %276 : vector<2x8x16xf32>
    %278 = vector.extract_strided_slice %12 {offsets = [0, 9, 0], sizes = [2, 1, 16], strides = [1, 1, 1]} : vector<2x12x16xf32> to vector<2x1x16xf32>
    %279 = vector.shape_cast %278 : vector<2x1x16xf32> to vector<2x16xf32>
    %280 = vector.shape_cast %279 : vector<2x16xf32> to vector<2x1x16xf32>
    %281 = vector.extract_strided_slice %17 {offsets = [0, 9, 0], sizes = [2, 1, 16], strides = [1, 1, 1]} : vector<2x12x16xf32> to vector<2x1x16xf32>
    %282 = vector.shape_cast %281 : vector<2x1x16xf32> to vector<2x16xf32>
    %283 = vector.shape_cast %282 : vector<2x16xf32> to vector<2x1x16xf32>
    %284 = vector.extract_strided_slice %20 {offsets = [9, 0, 0], sizes = [1, 8, 16], strides = [1, 1, 1]} : vector<12x8x16xf32> to vector<1x8x16xf32>
    %285 = vector.shape_cast %284 : vector<1x8x16xf32> to vector<8x16xf32>
    %286 = vector.shape_cast %285 : vector<8x16xf32> to vector<1x8x16xf32>
    %287 = vector.extract_strided_slice %23 {offsets = [9, 0, 0], sizes = [1, 8, 16], strides = [1, 1, 1]} : vector<12x8x16xf32> to vector<1x8x16xf32>
    %288 = vector.shape_cast %287 : vector<1x8x16xf32> to vector<8x16xf32>
    %289 = vector.shape_cast %288 : vector<8x16xf32> to vector<1x8x16xf32>
    %290 = vector.broadcast %280 : vector<2x1x16xf32> to vector<2x8x16xf32>
    %291 = vector.broadcast %286 : vector<1x8x16xf32> to vector<2x8x16xf32>
    %292 = arith.mulf %290, %291 : vector<2x8x16xf32>
    %293 = arith.addf %269, %292 : vector<2x8x16xf32>
    %294 = vector.broadcast %283 : vector<2x1x16xf32> to vector<2x8x16xf32>
    %295 = vector.broadcast %289 : vector<1x8x16xf32> to vector<2x8x16xf32>
    %296 = arith.mulf %294, %295 : vector<2x8x16xf32>
    %297 = arith.subf %293, %296 : vector<2x8x16xf32>
    %298 = vector.broadcast %280 : vector<2x1x16xf32> to vector<2x8x16xf32>
    %299 = vector.broadcast %289 : vector<1x8x16xf32> to vector<2x8x16xf32>
    %300 = arith.mulf %298, %299 : vector<2x8x16xf32>
    %301 = arith.addf %277, %300 : vector<2x8x16xf32>
    %302 = vector.broadcast %283 : vector<2x1x16xf32> to vector<2x8x16xf32>
    %303 = vector.broadcast %286 : vector<1x8x16xf32> to vector<2x8x16xf32>
    %304 = arith.mulf %302, %303 : vector<2x8x16xf32>
    %305 = arith.addf %301, %304 : vector<2x8x16xf32>
    %306 = vector.extract_strided_slice %12 {offsets = [0, 10, 0], sizes = [2, 1, 16], strides = [1, 1, 1]} : vector<2x12x16xf32> to vector<2x1x16xf32>
    %307 = vector.shape_cast %306 : vector<2x1x16xf32> to vector<2x16xf32>
    %308 = vector.shape_cast %307 : vector<2x16xf32> to vector<2x1x16xf32>
    %309 = vector.extract_strided_slice %17 {offsets = [0, 10, 0], sizes = [2, 1, 16], strides = [1, 1, 1]} : vector<2x12x16xf32> to vector<2x1x16xf32>
    %310 = vector.shape_cast %309 : vector<2x1x16xf32> to vector<2x16xf32>
    %311 = vector.shape_cast %310 : vector<2x16xf32> to vector<2x1x16xf32>
    %312 = vector.extract_strided_slice %20 {offsets = [10, 0, 0], sizes = [1, 8, 16], strides = [1, 1, 1]} : vector<12x8x16xf32> to vector<1x8x16xf32>
    %313 = vector.shape_cast %312 : vector<1x8x16xf32> to vector<8x16xf32>
    %314 = vector.shape_cast %313 : vector<8x16xf32> to vector<1x8x16xf32>
    %315 = vector.extract_strided_slice %23 {offsets = [10, 0, 0], sizes = [1, 8, 16], strides = [1, 1, 1]} : vector<12x8x16xf32> to vector<1x8x16xf32>
    %316 = vector.shape_cast %315 : vector<1x8x16xf32> to vector<8x16xf32>
    %317 = vector.shape_cast %316 : vector<8x16xf32> to vector<1x8x16xf32>
    %318 = vector.broadcast %308 : vector<2x1x16xf32> to vector<2x8x16xf32>
    %319 = vector.broadcast %314 : vector<1x8x16xf32> to vector<2x8x16xf32>
    %320 = arith.mulf %318, %319 : vector<2x8x16xf32>
    %321 = arith.addf %297, %320 : vector<2x8x16xf32>
    %322 = vector.broadcast %311 : vector<2x1x16xf32> to vector<2x8x16xf32>
    %323 = vector.broadcast %317 : vector<1x8x16xf32> to vector<2x8x16xf32>
    %324 = arith.mulf %322, %323 : vector<2x8x16xf32>
    %325 = arith.subf %321, %324 : vector<2x8x16xf32>
    %326 = vector.broadcast %308 : vector<2x1x16xf32> to vector<2x8x16xf32>
    %327 = vector.broadcast %317 : vector<1x8x16xf32> to vector<2x8x16xf32>
    %328 = arith.mulf %326, %327 : vector<2x8x16xf32>
    %329 = arith.addf %305, %328 : vector<2x8x16xf32>
    %330 = vector.broadcast %311 : vector<2x1x16xf32> to vector<2x8x16xf32>
    %331 = vector.broadcast %314 : vector<1x8x16xf32> to vector<2x8x16xf32>
    %332 = arith.mulf %330, %331 : vector<2x8x16xf32>
    %333 = arith.addf %329, %332 : vector<2x8x16xf32>
    %334 = vector.extract_strided_slice %12 {offsets = [0, 11, 0], sizes = [2, 1, 16], strides = [1, 1, 1]} : vector<2x12x16xf32> to vector<2x1x16xf32>
    %335 = vector.shape_cast %334 : vector<2x1x16xf32> to vector<2x16xf32>
    %336 = vector.shape_cast %335 : vector<2x16xf32> to vector<2x1x16xf32>
    %337 = vector.extract_strided_slice %17 {offsets = [0, 11, 0], sizes = [2, 1, 16], strides = [1, 1, 1]} : vector<2x12x16xf32> to vector<2x1x16xf32>
    %338 = vector.shape_cast %337 : vector<2x1x16xf32> to vector<2x16xf32>
    %339 = vector.shape_cast %338 : vector<2x16xf32> to vector<2x1x16xf32>
    %340 = vector.extract_strided_slice %20 {offsets = [11, 0, 0], sizes = [1, 8, 16], strides = [1, 1, 1]} : vector<12x8x16xf32> to vector<1x8x16xf32>
    %341 = vector.shape_cast %340 : vector<1x8x16xf32> to vector<8x16xf32>
    %342 = vector.shape_cast %341 : vector<8x16xf32> to vector<1x8x16xf32>
    %343 = vector.extract_strided_slice %23 {offsets = [11, 0, 0], sizes = [1, 8, 16], strides = [1, 1, 1]} : vector<12x8x16xf32> to vector<1x8x16xf32>
    %344 = vector.shape_cast %343 : vector<1x8x16xf32> to vector<8x16xf32>
    %345 = vector.shape_cast %344 : vector<8x16xf32> to vector<1x8x16xf32>
    %346 = vector.broadcast %336 : vector<2x1x16xf32> to vector<2x8x16xf32>
    %347 = vector.broadcast %342 : vector<1x8x16xf32> to vector<2x8x16xf32>
    %348 = arith.mulf %346, %347 : vector<2x8x16xf32>
    %349 = arith.addf %325, %348 : vector<2x8x16xf32>
    %350 = vector.broadcast %339 : vector<2x1x16xf32> to vector<2x8x16xf32>
    %351 = vector.broadcast %345 : vector<1x8x16xf32> to vector<2x8x16xf32>
    %352 = arith.mulf %350, %351 : vector<2x8x16xf32>
    %353 = arith.subf %349, %352 : vector<2x8x16xf32>
    %354 = vector.broadcast %336 : vector<2x1x16xf32> to vector<2x8x16xf32>
    %355 = vector.broadcast %345 : vector<1x8x16xf32> to vector<2x8x16xf32>
    %356 = arith.mulf %354, %355 : vector<2x8x16xf32>
    %357 = arith.addf %333, %356 : vector<2x8x16xf32>
    %358 = vector.broadcast %339 : vector<2x1x16xf32> to vector<2x8x16xf32>
    %359 = vector.broadcast %342 : vector<1x8x16xf32> to vector<2x8x16xf32>
    %360 = arith.mulf %358, %359 : vector<2x8x16xf32>
    %361 = arith.addf %357, %360 : vector<2x8x16xf32>
    %c0_24 = arith.constant 0 : index
    %c0_25 = arith.constant 0 : index
    %c0_26 = arith.constant 0 : index
    %c0_27 = arith.constant 0 : index
    %362 = vector.load %arg8[%c0_24, %c0_25, %c0_26, %c0_27] : memref<1x2x8x16xf32, #tpu.memory_space<vmem>>, vector<1x2x8x16xf32>
    %363 = vector.shape_cast %362 : vector<1x2x8x16xf32> to vector<2x8x16xf32>
    %364 = vector.shape_cast %353 : vector<2x8x16xf32> to vector<1x2x8x16xf32>
    tpu.vector_store %arg8[%c0_24, %c0_25, %c0_26, %c0_27], %364 {strides = array<i32>} : memref<1x2x8x16xf32, #tpu.memory_space<vmem>>, vector<1x2x8x16xf32>,
    %c0_28 = arith.constant 0 : index
    %c0_29 = arith.constant 0 : index
    %c0_30 = arith.constant 0 : index
    %c0_31 = arith.constant 0 : index
    %365 = vector.load %arg9[%c0_28, %c0_29, %c0_30, %c0_31] : memref<1x2x8x16xf32, #tpu.memory_space<vmem>>, vector<1x2x8x16xf32>
    %366 = vector.shape_cast %365 : vector<1x2x8x16xf32> to vector<2x8x16xf32>
    %367 = vector.shape_cast %361 : vector<2x8x16xf32> to vector<1x2x8x16xf32>
    tpu.vector_store %arg9[%c0_28, %c0_29, %c0_30, %c0_31], %367 {strides = array<i32>} : memref<1x2x8x16xf32, #tpu.memory_space<vmem>>, vector<1x2x8x16xf32>,
    return
  }
  func.func @transform_0(%arg0: i32, %arg1: i32) -> (i32, i32, i32, i32) {
    %c0_i32 = arith.constant 0 : i32
    %c0_i32_0 = arith.constant 0 : i32
    %c0_i32_1 = arith.constant 0 : i32
    return %arg0, %c0_i32, %c0_i32_0, %arg1 : i32, i32, i32, i32
  }
  func.func @transform_1(%arg0: i32, %arg1: i32) -> (i32, i32, i32, i32) {
    %c0_i32 = arith.constant 0 : i32
    %c0_i32_0 = arith.constant 0 : i32
    %c0_i32_1 = arith.constant 0 : i32
    return %arg0, %c0_i32, %c0_i32_0, %arg1 : i32, i32, i32, i32
  }
  func.func @transform_2(%arg0: i32, %arg1: i32) -> (i32, i32, i32, i32) {
    %c0_i32 = arith.constant 0 : i32
    %c0_i32_0 = arith.constant 0 : i32
    %c0_i32_1 = arith.constant 0 : i32
    return %arg0, %c0_i32, %c0_i32_0, %arg1 : i32, i32, i32, i32
  }
  func.func @transform_3(%arg0: i32, %arg1: i32) -> (i32, i32, i32, i32) {
    %c0_i32 = arith.constant 0 : i32
    %c0_i32_0 = arith.constant 0 : i32
    %c0_i32_1 = arith.constant 0 : i32
    return %arg0, %c0_i32, %c0_i32_0, %arg1 : i32, i32, i32, i32
  }
  func.func @transform_4(%arg0: i32, %arg1: i32) -> (i32, i32, i32, i32) {
    %c0_i32 = arith.constant 0 : i32
    %c0_i32_0 = arith.constant 0 : i32
    %c0_i32_1 = arith.constant 0 : i32
    return %arg0, %c0_i32, %c0_i32_0, %arg1 : i32, i32, i32, i32
  }
  func.func @transform_5(%arg0: i32, %arg1: i32) -> (i32, i32, i32, i32) {
    %c0_i32 = arith.constant 0 : i32
    %c0_i32_0 = arith.constant 0 : i32
    %c0_i32_1 = arith.constant 0 : i32
    return %arg0, %c0_i32, %c0_i32_0, %arg1 : i32, i32, i32, i32
  }
  func.func @transform_6(%arg0: i32, %arg1: i32) -> (i32, i32, i32, i32) {
    %c0_i32 = arith.constant 0 : i32
    %c0_i32_0 = arith.constant 0 : i32
    %c0_i32_1 = arith.constant 0 : i32
    return %arg0, %c0_i32, %c0_i32_0, %arg1 : i32, i32, i32, i32
  }
  func.func @transform_7(%arg0: i32, %arg1: i32) -> (i32, i32, i32, i32) {
    %c0_i32 = arith.constant 0 : i32
    %c0_i32_0 = arith.constant 0 : i32
    %c0_i32_1 = arith.constant 0 : i32
    return %arg0, %c0_i32, %c0_i32_0, %arg1 : i32, i32, i32, i32
  }
}

module attributes {stable_mosaic.version = 11 : i64} {
  func.func @_stage2_kernel(%arg0: i32, %arg1: i32, %arg2: memref<1x8x256xf32, #tpu.memory_space<vmem>>, %arg3: memref<1x8x256xf32, #tpu.memory_space<vmem>>, %arg4: memref<1x8x256xf32, #tpu.memory_space<vmem>>, %arg5: memref<1x8x1xf32, #tpu.memory_space<vmem>>, %arg6: memref<1x8x1xf32, #tpu.memory_space<vmem>>, %arg7: memref<8x8xbf16, #tpu.memory_space<vmem>>, %arg8: memref<8x1xf32, #tpu.memory_space<vmem>>, %arg9: memref<1x8x256xf32, #tpu.memory_space<vmem>>, %arg10: memref<1x8x256xf32, #tpu.memory_space<vmem>>) attributes {dimension_semantics = [#tpu.dimension_semantics<parallel>, #tpu.dimension_semantics<parallel>], iteration_bounds = array<i64: 2, 1>, scalar_prefetch = 0 : i64, scratch_operands = 0 : i64, tpu.core_type = #tpu.core_type<tc>, window_params = [{transform_indices = @transform_0, window_bounds = array<i64: 1, 8, 256>}, {transform_indices = @transform_1, window_bounds = array<i64: 1, 8, 256>}, {transform_indices = @transform_2, window_bounds = array<i64: 1, 8, 256>}, {transform_indices = @transform_3, window_bounds = array<i64: 1, 8, 1>}, {transform_indices = @transform_4, window_bounds = array<i64: 1, 8, 1>}, {pipeline_mode = #tpu.pipeline_mode<synchronous>, transform_indices = @transform_5, window_bounds = array<i64: 8, 8>}, {pipeline_mode = #tpu.pipeline_mode<synchronous>, transform_indices = @transform_6, window_bounds = array<i64: 8, 1>}, {transform_indices = @transform_7, window_bounds = array<i64: 1, 8, 256>}, {transform_indices = @transform_8, window_bounds = array<i64: 1, 8, 256>}]} {
    %c0 = arith.constant 0 : index
    %c0_0 = arith.constant 0 : index
    %c0_1 = arith.constant 0 : index
    %0 = vector.load %arg2[%c0, %c0_0, %c0_1] : memref<1x8x256xf32, #tpu.memory_space<vmem>>, vector<1x8x256xf32>
    %1 = vector.shape_cast %0 : vector<1x8x256xf32> to vector<8x256xf32>
    %c0_2 = arith.constant 0 : index
    %c0_3 = arith.constant 0 : index
    %c0_4 = arith.constant 0 : index
    %2 = vector.load %arg3[%c0_2, %c0_3, %c0_4] : memref<1x8x256xf32, #tpu.memory_space<vmem>>, vector<1x8x256xf32>
    %3 = vector.shape_cast %2 : vector<1x8x256xf32> to vector<8x256xf32>
    %4 = arith.addf %1, %3 : vector<8x256xf32>
    %c0_5 = arith.constant 0 : index
    %c0_6 = arith.constant 0 : index
    %c0_7 = arith.constant 0 : index
    %5 = vector.load %arg5[%c0_5, %c0_6, %c0_7] : memref<1x8x1xf32, #tpu.memory_space<vmem>>, vector<1x8x1xf32>
    %6 = vector.shape_cast %5 : vector<1x8x1xf32> to vector<8x1xf32>
    %cst = arith.constant 1.000000e+00 : f32
    %7 = vector.broadcast %cst : f32 to vector<8x1xf32>
    %8 = arith.addf %7, %6 : vector<8x1xf32>
    %9 = vector.broadcast %8 : vector<8x1xf32> to vector<8x256xf32>
    %10 = arith.mulf %4, %9 : vector<8x256xf32>
    %c0_8 = arith.constant 0 : index
    %c0_9 = arith.constant 0 : index
    %c0_10 = arith.constant 0 : index
    %11 = vector.load %arg6[%c0_8, %c0_9, %c0_10] : memref<1x8x1xf32, #tpu.memory_space<vmem>>, vector<1x8x1xf32>
    %12 = vector.shape_cast %11 : vector<1x8x1xf32> to vector<8x1xf32>
    %13 = vector.broadcast %12 : vector<8x1xf32> to vector<8x256xf32>
    %14 = arith.addf %10, %13 : vector<8x256xf32>
    %cst_11 = arith.constant 5.000000e-01 : f32
    %15 = vector.broadcast %cst_11 : f32 to vector<8x256xf32>
    %16 = arith.mulf %15, %14 : vector<8x256xf32>
    %cst_12 = arith.constant 4.471500e-02 : f32
    %17 = vector.broadcast %cst_12 : f32 to vector<8x256xf32>
    %18 = arith.mulf %17, %14 : vector<8x256xf32>
    %19 = arith.mulf %18, %14 : vector<8x256xf32>
    %20 = arith.mulf %19, %14 : vector<8x256xf32>
    %21 = arith.addf %14, %20 : vector<8x256xf32>
    %cst_13 = arith.constant 0.797884583 : f32
    %22 = vector.broadcast %cst_13 : f32 to vector<8x256xf32>
    %23 = arith.mulf %22, %21 : vector<8x256xf32>
    %24 = math.tanh %23 : vector<8x256xf32>
    %cst_14 = arith.constant 1.000000e+00 : f32
    %25 = vector.broadcast %cst_14 : f32 to vector<8x256xf32>
    %26 = arith.addf %25, %24 : vector<8x256xf32>
    %27 = arith.mulf %16, %26 : vector<8x256xf32>
    %c0_15 = arith.constant 0 : index
    %c0_16 = arith.constant 0 : index
    %c0_17 = arith.constant 0 : index
    %28 = vector.load %arg9[%c0_15, %c0_16, %c0_17] : memref<1x8x256xf32, #tpu.memory_space<vmem>>, vector<1x8x256xf32>
    %29 = vector.shape_cast %28 : vector<1x8x256xf32> to vector<8x256xf32>
    %30 = vector.shape_cast %27 : vector<8x256xf32> to vector<1x8x256xf32>
    tpu.vector_store %arg9[%c0_15, %c0_16, %c0_17], %30 {strides = array<i32>} : memref<1x8x256xf32, #tpu.memory_space<vmem>>, vector<1x8x256xf32>,
    %c0_18 = arith.constant 0 : index
    %c0_19 = arith.constant 0 : index
    %31 = vector.load %arg7[%c0_18, %c0_19] : memref<8x8xbf16, #tpu.memory_space<vmem>>, vector<8x8xbf16>
    %32 = arith.truncf %27 : vector<8x256xf32> to vector<8x256xbf16>
    %cst_20 = arith.constant dense<0.000000e+00> : vector<8x256xf32>
    %33 = tpu.matmul %31, %32, %cst_20 {dimension_numbers = #tpu.dot_dimension_numbers<[1], [0], [0], [1], [0, 0, 1, 1], [], []>} : vector<8x8xbf16>, vector<8x256xbf16>, vector<8x256xf32> -> vector<8x256xf32>
    %c0_21 = arith.constant 0 : index
    %c0_22 = arith.constant 0 : index
    %34 = vector.load %arg8[%c0_21, %c0_22] : memref<8x1xf32, #tpu.memory_space<vmem>>, vector<8x1xf32>
    %35 = vector.broadcast %34 : vector<8x1xf32> to vector<8x256xf32>
    %36 = arith.addf %33, %35 : vector<8x256xf32>
    %c0_23 = arith.constant 0 : index
    %c0_24 = arith.constant 0 : index
    %c0_25 = arith.constant 0 : index
    %37 = vector.load %arg4[%c0_23, %c0_24, %c0_25] : memref<1x8x256xf32, #tpu.memory_space<vmem>>, vector<1x8x256xf32>
    %38 = vector.shape_cast %37 : vector<1x8x256xf32> to vector<8x256xf32>
    %39 = arith.addf %36, %38 : vector<8x256xf32>
    %c0_26 = arith.constant 0 : index
    %c0_27 = arith.constant 0 : index
    %c0_28 = arith.constant 0 : index
    %40 = vector.load %arg10[%c0_26, %c0_27, %c0_28] : memref<1x8x256xf32, #tpu.memory_space<vmem>>, vector<1x8x256xf32>
    %41 = vector.shape_cast %40 : vector<1x8x256xf32> to vector<8x256xf32>
    %42 = vector.shape_cast %39 : vector<8x256xf32> to vector<1x8x256xf32>
    tpu.vector_store %arg10[%c0_26, %c0_27, %c0_28], %42 {strides = array<i32>} : memref<1x8x256xf32, #tpu.memory_space<vmem>>, vector<1x8x256xf32>,
    return
  }
  func.func @transform_0(%arg0: i32, %arg1: i32) -> (i32, i32, i32) {
    %c0_i32 = arith.constant 0 : i32
    %c0_i32_0 = arith.constant 0 : i32
    return %arg0, %c0_i32, %arg1 : i32, i32, i32
  }
  func.func @transform_1(%arg0: i32, %arg1: i32) -> (i32, i32, i32) {
    %c0_i32 = arith.constant 0 : i32
    %c0_i32_0 = arith.constant 0 : i32
    return %arg0, %c0_i32, %arg1 : i32, i32, i32
  }
  func.func @transform_2(%arg0: i32, %arg1: i32) -> (i32, i32, i32) {
    %c0_i32 = arith.constant 0 : i32
    %c0_i32_0 = arith.constant 0 : i32
    return %arg0, %c0_i32, %arg1 : i32, i32, i32
  }
  func.func @transform_3(%arg0: i32, %arg1: i32) -> (i32, i32, i32) {
    %c0_i32 = arith.constant 0 : i32
    %c0_i32_0 = arith.constant 0 : i32
    %c0_i32_1 = arith.constant 0 : i32
    return %arg0, %c0_i32, %c0_i32_0 : i32, i32, i32
  }
  func.func @transform_4(%arg0: i32, %arg1: i32) -> (i32, i32, i32) {
    %c0_i32 = arith.constant 0 : i32
    %c0_i32_0 = arith.constant 0 : i32
    %c0_i32_1 = arith.constant 0 : i32
    return %arg0, %c0_i32, %c0_i32_0 : i32, i32, i32
  }
  func.func @transform_5(%arg0: i32, %arg1: i32) -> (i32, i32) {
    %c0_i32 = arith.constant 0 : i32
    %c0_i32_0 = arith.constant 0 : i32
    %c0_i32_1 = arith.constant 0 : i32
    return %c0_i32, %c0_i32_0 : i32, i32
  }
  func.func @transform_6(%arg0: i32, %arg1: i32) -> (i32, i32) {
    %c0_i32 = arith.constant 0 : i32
    %c0_i32_0 = arith.constant 0 : i32
    %c0_i32_1 = arith.constant 0 : i32
    return %c0_i32, %c0_i32_0 : i32, i32
  }
  func.func @transform_7(%arg0: i32, %arg1: i32) -> (i32, i32, i32) {
    %c0_i32 = arith.constant 0 : i32
    %c0_i32_0 = arith.constant 0 : i32
    return %arg0, %c0_i32, %arg1 : i32, i32, i32
  }
  func.func @transform_8(%arg0: i32, %arg1: i32) -> (i32, i32, i32) {
    %c0_i32 = arith.constant 0 : i32
    %c0_i32_0 = arith.constant 0 : i32
    return %arg0, %c0_i32, %arg1 : i32, i32, i32
  }
}

module attributes {stable_mosaic.version = 11 : i64} {
  func.func @_spectral_kernel(%arg0: i32, %arg1: i32, %arg2: memref<1x2x8x16xf32, #tpu.memory_space<vmem>>, %arg3: memref<1x2x8x16xf32, #tpu.memory_space<vmem>>, %arg4: memref<1x2x1x16xf32, #tpu.memory_space<vmem>>, %arg5: memref<1x2x1x16xf32, #tpu.memory_space<vmem>>, %arg6: memref<1x8x8x16xbf16, #tpu.memory_space<vmem>>, %arg7: memref<1x8x8x16xbf16, #tpu.memory_space<vmem>>, %arg8: memref<1x2x8x16xf32, #tpu.memory_space<vmem>>, %arg9: memref<1x2x8x16xf32, #tpu.memory_space<vmem>>) attributes {dimension_semantics = [#tpu.dimension_semantics<parallel>, #tpu.dimension_semantics<parallel>], iteration_bounds = array<i64: 2, 1>, scalar_prefetch = 0 : i64, scratch_operands = 0 : i64, tpu.core_type = #tpu.core_type<tc>, window_params = [{transform_indices = @transform_0, window_bounds = array<i64: 1, 2, 8, 16>}, {transform_indices = @transform_1, window_bounds = array<i64: 1, 2, 8, 16>}, {transform_indices = @transform_2, window_bounds = array<i64: 1, 2, 1, 16>}, {transform_indices = @transform_3, window_bounds = array<i64: 1, 2, 1, 16>}, {transform_indices = @transform_4, window_bounds = array<i64: 1, 8, 8, 16>}, {transform_indices = @transform_5, window_bounds = array<i64: 1, 8, 8, 16>}, {transform_indices = @transform_6, window_bounds = array<i64: 1, 2, 8, 16>}, {transform_indices = @transform_7, window_bounds = array<i64: 1, 2, 8, 16>}]} {
    %c0 = arith.constant 0 : index
    %c0_0 = arith.constant 0 : index
    %c0_1 = arith.constant 0 : index
    %c0_2 = arith.constant 0 : index
    %0 = vector.load %arg2[%c0, %c0_0, %c0_1, %c0_2] : memref<1x2x8x16xf32, #tpu.memory_space<vmem>>, vector<1x2x8x16xf32>
    %1 = vector.shape_cast %0 : vector<1x2x8x16xf32> to vector<2x8x16xf32>
    %c0_3 = arith.constant 0 : index
    %c0_4 = arith.constant 0 : index
    %c0_5 = arith.constant 0 : index
    %c0_6 = arith.constant 0 : index
    %2 = vector.load %arg3[%c0_3, %c0_4, %c0_5, %c0_6] : memref<1x2x8x16xf32, #tpu.memory_space<vmem>>, vector<1x2x8x16xf32>
    %3 = vector.shape_cast %2 : vector<1x2x8x16xf32> to vector<2x8x16xf32>
    %c0_7 = arith.constant 0 : index
    %c0_8 = arith.constant 0 : index
    %c0_9 = arith.constant 0 : index
    %c0_10 = arith.constant 0 : index
    %4 = vector.load %arg4[%c0_7, %c0_8, %c0_9, %c0_10] : memref<1x2x1x16xf32, #tpu.memory_space<vmem>>, vector<1x2x1x16xf32>
    %5 = vector.shape_cast %4 : vector<1x2x1x16xf32> to vector<2x1x16xf32>
    %c0_11 = arith.constant 0 : index
    %c0_12 = arith.constant 0 : index
    %c0_13 = arith.constant 0 : index
    %c0_14 = arith.constant 0 : index
    %6 = vector.load %arg5[%c0_11, %c0_12, %c0_13, %c0_14] : memref<1x2x1x16xf32, #tpu.memory_space<vmem>>, vector<1x2x1x16xf32>
    %7 = vector.shape_cast %6 : vector<1x2x1x16xf32> to vector<2x1x16xf32>
    %8 = vector.broadcast %5 : vector<2x1x16xf32> to vector<2x8x16xf32>
    %9 = arith.mulf %1, %8 : vector<2x8x16xf32>
    %10 = vector.broadcast %7 : vector<2x1x16xf32> to vector<2x8x16xf32>
    %11 = arith.mulf %3, %10 : vector<2x8x16xf32>
    %12 = arith.subf %9, %11 : vector<2x8x16xf32>
    %13 = vector.broadcast %7 : vector<2x1x16xf32> to vector<2x8x16xf32>
    %14 = arith.mulf %1, %13 : vector<2x8x16xf32>
    %15 = vector.broadcast %5 : vector<2x1x16xf32> to vector<2x8x16xf32>
    %16 = arith.mulf %3, %15 : vector<2x8x16xf32>
    %17 = arith.addf %14, %16 : vector<2x8x16xf32>
    %c0_15 = arith.constant 0 : index
    %c0_16 = arith.constant 0 : index
    %c0_17 = arith.constant 0 : index
    %c0_18 = arith.constant 0 : index
    %18 = vector.load %arg6[%c0_15, %c0_16, %c0_17, %c0_18] : memref<1x8x8x16xbf16, #tpu.memory_space<vmem>>, vector<1x8x8x16xbf16>
    %19 = vector.shape_cast %18 : vector<1x8x8x16xbf16> to vector<8x8x16xbf16>
    %20 = arith.extf %19 : vector<8x8x16xbf16> to vector<8x8x16xf32>
    %c0_19 = arith.constant 0 : index
    %c0_20 = arith.constant 0 : index
    %c0_21 = arith.constant 0 : index
    %c0_22 = arith.constant 0 : index
    %21 = vector.load %arg7[%c0_19, %c0_20, %c0_21, %c0_22] : memref<1x8x8x16xbf16, #tpu.memory_space<vmem>>, vector<1x8x8x16xbf16>
    %22 = vector.shape_cast %21 : vector<1x8x8x16xbf16> to vector<8x8x16xbf16>
    %23 = arith.extf %22 : vector<8x8x16xbf16> to vector<8x8x16xf32>
    %cst = arith.constant 0.000000e+00 : f32
    %24 = vector.broadcast %cst : f32 to vector<2x8x16xf32>
    %cst_23 = arith.constant 0.000000e+00 : f32
    %25 = vector.broadcast %cst_23 : f32 to vector<2x8x16xf32>
    %26 = vector.extract_strided_slice %12 {offsets = [0, 0, 0], sizes = [2, 1, 16], strides = [1, 1, 1]} : vector<2x8x16xf32> to vector<2x1x16xf32>
    %27 = vector.shape_cast %26 : vector<2x1x16xf32> to vector<2x16xf32>
    %28 = vector.shape_cast %27 : vector<2x16xf32> to vector<2x1x16xf32>
    %29 = vector.extract_strided_slice %17 {offsets = [0, 0, 0], sizes = [2, 1, 16], strides = [1, 1, 1]} : vector<2x8x16xf32> to vector<2x1x16xf32>
    %30 = vector.shape_cast %29 : vector<2x1x16xf32> to vector<2x16xf32>
    %31 = vector.shape_cast %30 : vector<2x16xf32> to vector<2x1x16xf32>
    %32 = vector.extract_strided_slice %20 {offsets = [0, 0, 0], sizes = [1, 8, 16], strides = [1, 1, 1]} : vector<8x8x16xf32> to vector<1x8x16xf32>
    %33 = vector.shape_cast %32 : vector<1x8x16xf32> to vector<8x16xf32>
    %34 = vector.shape_cast %33 : vector<8x16xf32> to vector<1x8x16xf32>
    %35 = vector.extract_strided_slice %23 {offsets = [0, 0, 0], sizes = [1, 8, 16], strides = [1, 1, 1]} : vector<8x8x16xf32> to vector<1x8x16xf32>
    %36 = vector.shape_cast %35 : vector<1x8x16xf32> to vector<8x16xf32>
    %37 = vector.shape_cast %36 : vector<8x16xf32> to vector<1x8x16xf32>
    %38 = vector.broadcast %28 : vector<2x1x16xf32> to vector<2x8x16xf32>
    %39 = vector.broadcast %34 : vector<1x8x16xf32> to vector<2x8x16xf32>
    %40 = arith.mulf %38, %39 : vector<2x8x16xf32>
    %41 = arith.addf %24, %40 : vector<2x8x16xf32>
    %42 = vector.broadcast %31 : vector<2x1x16xf32> to vector<2x8x16xf32>
    %43 = vector.broadcast %37 : vector<1x8x16xf32> to vector<2x8x16xf32>
    %44 = arith.mulf %42, %43 : vector<2x8x16xf32>
    %45 = arith.subf %41, %44 : vector<2x8x16xf32>
    %46 = vector.broadcast %28 : vector<2x1x16xf32> to vector<2x8x16xf32>
    %47 = vector.broadcast %37 : vector<1x8x16xf32> to vector<2x8x16xf32>
    %48 = arith.mulf %46, %47 : vector<2x8x16xf32>
    %49 = arith.addf %25, %48 : vector<2x8x16xf32>
    %50 = vector.broadcast %31 : vector<2x1x16xf32> to vector<2x8x16xf32>
    %51 = vector.broadcast %34 : vector<1x8x16xf32> to vector<2x8x16xf32>
    %52 = arith.mulf %50, %51 : vector<2x8x16xf32>
    %53 = arith.addf %49, %52 : vector<2x8x16xf32>
    %54 = vector.extract_strided_slice %12 {offsets = [0, 1, 0], sizes = [2, 1, 16], strides = [1, 1, 1]} : vector<2x8x16xf32> to vector<2x1x16xf32>
    %55 = vector.shape_cast %54 : vector<2x1x16xf32> to vector<2x16xf32>
    %56 = vector.shape_cast %55 : vector<2x16xf32> to vector<2x1x16xf32>
    %57 = vector.extract_strided_slice %17 {offsets = [0, 1, 0], sizes = [2, 1, 16], strides = [1, 1, 1]} : vector<2x8x16xf32> to vector<2x1x16xf32>
    %58 = vector.shape_cast %57 : vector<2x1x16xf32> to vector<2x16xf32>
    %59 = vector.shape_cast %58 : vector<2x16xf32> to vector<2x1x16xf32>
    %60 = vector.extract_strided_slice %20 {offsets = [1, 0, 0], sizes = [1, 8, 16], strides = [1, 1, 1]} : vector<8x8x16xf32> to vector<1x8x16xf32>
    %61 = vector.shape_cast %60 : vector<1x8x16xf32> to vector<8x16xf32>
    %62 = vector.shape_cast %61 : vector<8x16xf32> to vector<1x8x16xf32>
    %63 = vector.extract_strided_slice %23 {offsets = [1, 0, 0], sizes = [1, 8, 16], strides = [1, 1, 1]} : vector<8x8x16xf32> to vector<1x8x16xf32>
    %64 = vector.shape_cast %63 : vector<1x8x16xf32> to vector<8x16xf32>
    %65 = vector.shape_cast %64 : vector<8x16xf32> to vector<1x8x16xf32>
    %66 = vector.broadcast %56 : vector<2x1x16xf32> to vector<2x8x16xf32>
    %67 = vector.broadcast %62 : vector<1x8x16xf32> to vector<2x8x16xf32>
    %68 = arith.mulf %66, %67 : vector<2x8x16xf32>
    %69 = arith.addf %45, %68 : vector<2x8x16xf32>
    %70 = vector.broadcast %59 : vector<2x1x16xf32> to vector<2x8x16xf32>
    %71 = vector.broadcast %65 : vector<1x8x16xf32> to vector<2x8x16xf32>
    %72 = arith.mulf %70, %71 : vector<2x8x16xf32>
    %73 = arith.subf %69, %72 : vector<2x8x16xf32>
    %74 = vector.broadcast %56 : vector<2x1x16xf32> to vector<2x8x16xf32>
    %75 = vector.broadcast %65 : vector<1x8x16xf32> to vector<2x8x16xf32>
    %76 = arith.mulf %74, %75 : vector<2x8x16xf32>
    %77 = arith.addf %53, %76 : vector<2x8x16xf32>
    %78 = vector.broadcast %59 : vector<2x1x16xf32> to vector<2x8x16xf32>
    %79 = vector.broadcast %62 : vector<1x8x16xf32> to vector<2x8x16xf32>
    %80 = arith.mulf %78, %79 : vector<2x8x16xf32>
    %81 = arith.addf %77, %80 : vector<2x8x16xf32>
    %82 = vector.extract_strided_slice %12 {offsets = [0, 2, 0], sizes = [2, 1, 16], strides = [1, 1, 1]} : vector<2x8x16xf32> to vector<2x1x16xf32>
    %83 = vector.shape_cast %82 : vector<2x1x16xf32> to vector<2x16xf32>
    %84 = vector.shape_cast %83 : vector<2x16xf32> to vector<2x1x16xf32>
    %85 = vector.extract_strided_slice %17 {offsets = [0, 2, 0], sizes = [2, 1, 16], strides = [1, 1, 1]} : vector<2x8x16xf32> to vector<2x1x16xf32>
    %86 = vector.shape_cast %85 : vector<2x1x16xf32> to vector<2x16xf32>
    %87 = vector.shape_cast %86 : vector<2x16xf32> to vector<2x1x16xf32>
    %88 = vector.extract_strided_slice %20 {offsets = [2, 0, 0], sizes = [1, 8, 16], strides = [1, 1, 1]} : vector<8x8x16xf32> to vector<1x8x16xf32>
    %89 = vector.shape_cast %88 : vector<1x8x16xf32> to vector<8x16xf32>
    %90 = vector.shape_cast %89 : vector<8x16xf32> to vector<1x8x16xf32>
    %91 = vector.extract_strided_slice %23 {offsets = [2, 0, 0], sizes = [1, 8, 16], strides = [1, 1, 1]} : vector<8x8x16xf32> to vector<1x8x16xf32>
    %92 = vector.shape_cast %91 : vector<1x8x16xf32> to vector<8x16xf32>
    %93 = vector.shape_cast %92 : vector<8x16xf32> to vector<1x8x16xf32>
    %94 = vector.broadcast %84 : vector<2x1x16xf32> to vector<2x8x16xf32>
    %95 = vector.broadcast %90 : vector<1x8x16xf32> to vector<2x8x16xf32>
    %96 = arith.mulf %94, %95 : vector<2x8x16xf32>
    %97 = arith.addf %73, %96 : vector<2x8x16xf32>
    %98 = vector.broadcast %87 : vector<2x1x16xf32> to vector<2x8x16xf32>
    %99 = vector.broadcast %93 : vector<1x8x16xf32> to vector<2x8x16xf32>
    %100 = arith.mulf %98, %99 : vector<2x8x16xf32>
    %101 = arith.subf %97, %100 : vector<2x8x16xf32>
    %102 = vector.broadcast %84 : vector<2x1x16xf32> to vector<2x8x16xf32>
    %103 = vector.broadcast %93 : vector<1x8x16xf32> to vector<2x8x16xf32>
    %104 = arith.mulf %102, %103 : vector<2x8x16xf32>
    %105 = arith.addf %81, %104 : vector<2x8x16xf32>
    %106 = vector.broadcast %87 : vector<2x1x16xf32> to vector<2x8x16xf32>
    %107 = vector.broadcast %90 : vector<1x8x16xf32> to vector<2x8x16xf32>
    %108 = arith.mulf %106, %107 : vector<2x8x16xf32>
    %109 = arith.addf %105, %108 : vector<2x8x16xf32>
    %110 = vector.extract_strided_slice %12 {offsets = [0, 3, 0], sizes = [2, 1, 16], strides = [1, 1, 1]} : vector<2x8x16xf32> to vector<2x1x16xf32>
    %111 = vector.shape_cast %110 : vector<2x1x16xf32> to vector<2x16xf32>
    %112 = vector.shape_cast %111 : vector<2x16xf32> to vector<2x1x16xf32>
    %113 = vector.extract_strided_slice %17 {offsets = [0, 3, 0], sizes = [2, 1, 16], strides = [1, 1, 1]} : vector<2x8x16xf32> to vector<2x1x16xf32>
    %114 = vector.shape_cast %113 : vector<2x1x16xf32> to vector<2x16xf32>
    %115 = vector.shape_cast %114 : vector<2x16xf32> to vector<2x1x16xf32>
    %116 = vector.extract_strided_slice %20 {offsets = [3, 0, 0], sizes = [1, 8, 16], strides = [1, 1, 1]} : vector<8x8x16xf32> to vector<1x8x16xf32>
    %117 = vector.shape_cast %116 : vector<1x8x16xf32> to vector<8x16xf32>
    %118 = vector.shape_cast %117 : vector<8x16xf32> to vector<1x8x16xf32>
    %119 = vector.extract_strided_slice %23 {offsets = [3, 0, 0], sizes = [1, 8, 16], strides = [1, 1, 1]} : vector<8x8x16xf32> to vector<1x8x16xf32>
    %120 = vector.shape_cast %119 : vector<1x8x16xf32> to vector<8x16xf32>
    %121 = vector.shape_cast %120 : vector<8x16xf32> to vector<1x8x16xf32>
    %122 = vector.broadcast %112 : vector<2x1x16xf32> to vector<2x8x16xf32>
    %123 = vector.broadcast %118 : vector<1x8x16xf32> to vector<2x8x16xf32>
    %124 = arith.mulf %122, %123 : vector<2x8x16xf32>
    %125 = arith.addf %101, %124 : vector<2x8x16xf32>
    %126 = vector.broadcast %115 : vector<2x1x16xf32> to vector<2x8x16xf32>
    %127 = vector.broadcast %121 : vector<1x8x16xf32> to vector<2x8x16xf32>
    %128 = arith.mulf %126, %127 : vector<2x8x16xf32>
    %129 = arith.subf %125, %128 : vector<2x8x16xf32>
    %130 = vector.broadcast %112 : vector<2x1x16xf32> to vector<2x8x16xf32>
    %131 = vector.broadcast %121 : vector<1x8x16xf32> to vector<2x8x16xf32>
    %132 = arith.mulf %130, %131 : vector<2x8x16xf32>
    %133 = arith.addf %109, %132 : vector<2x8x16xf32>
    %134 = vector.broadcast %115 : vector<2x1x16xf32> to vector<2x8x16xf32>
    %135 = vector.broadcast %118 : vector<1x8x16xf32> to vector<2x8x16xf32>
    %136 = arith.mulf %134, %135 : vector<2x8x16xf32>
    %137 = arith.addf %133, %136 : vector<2x8x16xf32>
    %138 = vector.extract_strided_slice %12 {offsets = [0, 4, 0], sizes = [2, 1, 16], strides = [1, 1, 1]} : vector<2x8x16xf32> to vector<2x1x16xf32>
    %139 = vector.shape_cast %138 : vector<2x1x16xf32> to vector<2x16xf32>
    %140 = vector.shape_cast %139 : vector<2x16xf32> to vector<2x1x16xf32>
    %141 = vector.extract_strided_slice %17 {offsets = [0, 4, 0], sizes = [2, 1, 16], strides = [1, 1, 1]} : vector<2x8x16xf32> to vector<2x1x16xf32>
    %142 = vector.shape_cast %141 : vector<2x1x16xf32> to vector<2x16xf32>
    %143 = vector.shape_cast %142 : vector<2x16xf32> to vector<2x1x16xf32>
    %144 = vector.extract_strided_slice %20 {offsets = [4, 0, 0], sizes = [1, 8, 16], strides = [1, 1, 1]} : vector<8x8x16xf32> to vector<1x8x16xf32>
    %145 = vector.shape_cast %144 : vector<1x8x16xf32> to vector<8x16xf32>
    %146 = vector.shape_cast %145 : vector<8x16xf32> to vector<1x8x16xf32>
    %147 = vector.extract_strided_slice %23 {offsets = [4, 0, 0], sizes = [1, 8, 16], strides = [1, 1, 1]} : vector<8x8x16xf32> to vector<1x8x16xf32>
    %148 = vector.shape_cast %147 : vector<1x8x16xf32> to vector<8x16xf32>
    %149 = vector.shape_cast %148 : vector<8x16xf32> to vector<1x8x16xf32>
    %150 = vector.broadcast %140 : vector<2x1x16xf32> to vector<2x8x16xf32>
    %151 = vector.broadcast %146 : vector<1x8x16xf32> to vector<2x8x16xf32>
    %152 = arith.mulf %150, %151 : vector<2x8x16xf32>
    %153 = arith.addf %129, %152 : vector<2x8x16xf32>
    %154 = vector.broadcast %143 : vector<2x1x16xf32> to vector<2x8x16xf32>
    %155 = vector.broadcast %149 : vector<1x8x16xf32> to vector<2x8x16xf32>
    %156 = arith.mulf %154, %155 : vector<2x8x16xf32>
    %157 = arith.subf %153, %156 : vector<2x8x16xf32>
    %158 = vector.broadcast %140 : vector<2x1x16xf32> to vector<2x8x16xf32>
    %159 = vector.broadcast %149 : vector<1x8x16xf32> to vector<2x8x16xf32>
    %160 = arith.mulf %158, %159 : vector<2x8x16xf32>
    %161 = arith.addf %137, %160 : vector<2x8x16xf32>
    %162 = vector.broadcast %143 : vector<2x1x16xf32> to vector<2x8x16xf32>
    %163 = vector.broadcast %146 : vector<1x8x16xf32> to vector<2x8x16xf32>
    %164 = arith.mulf %162, %163 : vector<2x8x16xf32>
    %165 = arith.addf %161, %164 : vector<2x8x16xf32>
    %166 = vector.extract_strided_slice %12 {offsets = [0, 5, 0], sizes = [2, 1, 16], strides = [1, 1, 1]} : vector<2x8x16xf32> to vector<2x1x16xf32>
    %167 = vector.shape_cast %166 : vector<2x1x16xf32> to vector<2x16xf32>
    %168 = vector.shape_cast %167 : vector<2x16xf32> to vector<2x1x16xf32>
    %169 = vector.extract_strided_slice %17 {offsets = [0, 5, 0], sizes = [2, 1, 16], strides = [1, 1, 1]} : vector<2x8x16xf32> to vector<2x1x16xf32>
    %170 = vector.shape_cast %169 : vector<2x1x16xf32> to vector<2x16xf32>
    %171 = vector.shape_cast %170 : vector<2x16xf32> to vector<2x1x16xf32>
    %172 = vector.extract_strided_slice %20 {offsets = [5, 0, 0], sizes = [1, 8, 16], strides = [1, 1, 1]} : vector<8x8x16xf32> to vector<1x8x16xf32>
    %173 = vector.shape_cast %172 : vector<1x8x16xf32> to vector<8x16xf32>
    %174 = vector.shape_cast %173 : vector<8x16xf32> to vector<1x8x16xf32>
    %175 = vector.extract_strided_slice %23 {offsets = [5, 0, 0], sizes = [1, 8, 16], strides = [1, 1, 1]} : vector<8x8x16xf32> to vector<1x8x16xf32>
    %176 = vector.shape_cast %175 : vector<1x8x16xf32> to vector<8x16xf32>
    %177 = vector.shape_cast %176 : vector<8x16xf32> to vector<1x8x16xf32>
    %178 = vector.broadcast %168 : vector<2x1x16xf32> to vector<2x8x16xf32>
    %179 = vector.broadcast %174 : vector<1x8x16xf32> to vector<2x8x16xf32>
    %180 = arith.mulf %178, %179 : vector<2x8x16xf32>
    %181 = arith.addf %157, %180 : vector<2x8x16xf32>
    %182 = vector.broadcast %171 : vector<2x1x16xf32> to vector<2x8x16xf32>
    %183 = vector.broadcast %177 : vector<1x8x16xf32> to vector<2x8x16xf32>
    %184 = arith.mulf %182, %183 : vector<2x8x16xf32>
    %185 = arith.subf %181, %184 : vector<2x8x16xf32>
    %186 = vector.broadcast %168 : vector<2x1x16xf32> to vector<2x8x16xf32>
    %187 = vector.broadcast %177 : vector<1x8x16xf32> to vector<2x8x16xf32>
    %188 = arith.mulf %186, %187 : vector<2x8x16xf32>
    %189 = arith.addf %165, %188 : vector<2x8x16xf32>
    %190 = vector.broadcast %171 : vector<2x1x16xf32> to vector<2x8x16xf32>
    %191 = vector.broadcast %174 : vector<1x8x16xf32> to vector<2x8x16xf32>
    %192 = arith.mulf %190, %191 : vector<2x8x16xf32>
    %193 = arith.addf %189, %192 : vector<2x8x16xf32>
    %194 = vector.extract_strided_slice %12 {offsets = [0, 6, 0], sizes = [2, 1, 16], strides = [1, 1, 1]} : vector<2x8x16xf32> to vector<2x1x16xf32>
    %195 = vector.shape_cast %194 : vector<2x1x16xf32> to vector<2x16xf32>
    %196 = vector.shape_cast %195 : vector<2x16xf32> to vector<2x1x16xf32>
    %197 = vector.extract_strided_slice %17 {offsets = [0, 6, 0], sizes = [2, 1, 16], strides = [1, 1, 1]} : vector<2x8x16xf32> to vector<2x1x16xf32>
    %198 = vector.shape_cast %197 : vector<2x1x16xf32> to vector<2x16xf32>
    %199 = vector.shape_cast %198 : vector<2x16xf32> to vector<2x1x16xf32>
    %200 = vector.extract_strided_slice %20 {offsets = [6, 0, 0], sizes = [1, 8, 16], strides = [1, 1, 1]} : vector<8x8x16xf32> to vector<1x8x16xf32>
    %201 = vector.shape_cast %200 : vector<1x8x16xf32> to vector<8x16xf32>
    %202 = vector.shape_cast %201 : vector<8x16xf32> to vector<1x8x16xf32>
    %203 = vector.extract_strided_slice %23 {offsets = [6, 0, 0], sizes = [1, 8, 16], strides = [1, 1, 1]} : vector<8x8x16xf32> to vector<1x8x16xf32>
    %204 = vector.shape_cast %203 : vector<1x8x16xf32> to vector<8x16xf32>
    %205 = vector.shape_cast %204 : vector<8x16xf32> to vector<1x8x16xf32>
    %206 = vector.broadcast %196 : vector<2x1x16xf32> to vector<2x8x16xf32>
    %207 = vector.broadcast %202 : vector<1x8x16xf32> to vector<2x8x16xf32>
    %208 = arith.mulf %206, %207 : vector<2x8x16xf32>
    %209 = arith.addf %185, %208 : vector<2x8x16xf32>
    %210 = vector.broadcast %199 : vector<2x1x16xf32> to vector<2x8x16xf32>
    %211 = vector.broadcast %205 : vector<1x8x16xf32> to vector<2x8x16xf32>
    %212 = arith.mulf %210, %211 : vector<2x8x16xf32>
    %213 = arith.subf %209, %212 : vector<2x8x16xf32>
    %214 = vector.broadcast %196 : vector<2x1x16xf32> to vector<2x8x16xf32>
    %215 = vector.broadcast %205 : vector<1x8x16xf32> to vector<2x8x16xf32>
    %216 = arith.mulf %214, %215 : vector<2x8x16xf32>
    %217 = arith.addf %193, %216 : vector<2x8x16xf32>
    %218 = vector.broadcast %199 : vector<2x1x16xf32> to vector<2x8x16xf32>
    %219 = vector.broadcast %202 : vector<1x8x16xf32> to vector<2x8x16xf32>
    %220 = arith.mulf %218, %219 : vector<2x8x16xf32>
    %221 = arith.addf %217, %220 : vector<2x8x16xf32>
    %222 = vector.extract_strided_slice %12 {offsets = [0, 7, 0], sizes = [2, 1, 16], strides = [1, 1, 1]} : vector<2x8x16xf32> to vector<2x1x16xf32>
    %223 = vector.shape_cast %222 : vector<2x1x16xf32> to vector<2x16xf32>
    %224 = vector.shape_cast %223 : vector<2x16xf32> to vector<2x1x16xf32>
    %225 = vector.extract_strided_slice %17 {offsets = [0, 7, 0], sizes = [2, 1, 16], strides = [1, 1, 1]} : vector<2x8x16xf32> to vector<2x1x16xf32>
    %226 = vector.shape_cast %225 : vector<2x1x16xf32> to vector<2x16xf32>
    %227 = vector.shape_cast %226 : vector<2x16xf32> to vector<2x1x16xf32>
    %228 = vector.extract_strided_slice %20 {offsets = [7, 0, 0], sizes = [1, 8, 16], strides = [1, 1, 1]} : vector<8x8x16xf32> to vector<1x8x16xf32>
    %229 = vector.shape_cast %228 : vector<1x8x16xf32> to vector<8x16xf32>
    %230 = vector.shape_cast %229 : vector<8x16xf32> to vector<1x8x16xf32>
    %231 = vector.extract_strided_slice %23 {offsets = [7, 0, 0], sizes = [1, 8, 16], strides = [1, 1, 1]} : vector<8x8x16xf32> to vector<1x8x16xf32>
    %232 = vector.shape_cast %231 : vector<1x8x16xf32> to vector<8x16xf32>
    %233 = vector.shape_cast %232 : vector<8x16xf32> to vector<1x8x16xf32>
    %234 = vector.broadcast %224 : vector<2x1x16xf32> to vector<2x8x16xf32>
    %235 = vector.broadcast %230 : vector<1x8x16xf32> to vector<2x8x16xf32>
    %236 = arith.mulf %234, %235 : vector<2x8x16xf32>
    %237 = arith.addf %213, %236 : vector<2x8x16xf32>
    %238 = vector.broadcast %227 : vector<2x1x16xf32> to vector<2x8x16xf32>
    %239 = vector.broadcast %233 : vector<1x8x16xf32> to vector<2x8x16xf32>
    %240 = arith.mulf %238, %239 : vector<2x8x16xf32>
    %241 = arith.subf %237, %240 : vector<2x8x16xf32>
    %242 = vector.broadcast %224 : vector<2x1x16xf32> to vector<2x8x16xf32>
    %243 = vector.broadcast %233 : vector<1x8x16xf32> to vector<2x8x16xf32>
    %244 = arith.mulf %242, %243 : vector<2x8x16xf32>
    %245 = arith.addf %221, %244 : vector<2x8x16xf32>
    %246 = vector.broadcast %227 : vector<2x1x16xf32> to vector<2x8x16xf32>
    %247 = vector.broadcast %230 : vector<1x8x16xf32> to vector<2x8x16xf32>
    %248 = arith.mulf %246, %247 : vector<2x8x16xf32>
    %249 = arith.addf %245, %248 : vector<2x8x16xf32>
    %c0_24 = arith.constant 0 : index
    %c0_25 = arith.constant 0 : index
    %c0_26 = arith.constant 0 : index
    %c0_27 = arith.constant 0 : index
    %250 = vector.load %arg8[%c0_24, %c0_25, %c0_26, %c0_27] : memref<1x2x8x16xf32, #tpu.memory_space<vmem>>, vector<1x2x8x16xf32>
    %251 = vector.shape_cast %250 : vector<1x2x8x16xf32> to vector<2x8x16xf32>
    %252 = vector.shape_cast %241 : vector<2x8x16xf32> to vector<1x2x8x16xf32>
    tpu.vector_store %arg8[%c0_24, %c0_25, %c0_26, %c0_27], %252 {strides = array<i32>} : memref<1x2x8x16xf32, #tpu.memory_space<vmem>>, vector<1x2x8x16xf32>,
    %c0_28 = arith.constant 0 : index
    %c0_29 = arith.constant 0 : index
    %c0_30 = arith.constant 0 : index
    %c0_31 = arith.constant 0 : index
    %253 = vector.load %arg9[%c0_28, %c0_29, %c0_30, %c0_31] : memref<1x2x8x16xf32, #tpu.memory_space<vmem>>, vector<1x2x8x16xf32>
    %254 = vector.shape_cast %253 : vector<1x2x8x16xf32> to vector<2x8x16xf32>
    %255 = vector.shape_cast %249 : vector<2x8x16xf32> to vector<1x2x8x16xf32>
    tpu.vector_store %arg9[%c0_28, %c0_29, %c0_30, %c0_31], %255 {strides = array<i32>} : memref<1x2x8x16xf32, #tpu.memory_space<vmem>>, vector<1x2x8x16xf32>,
    return
  }
  func.func @transform_0(%arg0: i32, %arg1: i32) -> (i32, i32, i32, i32) {
    %c0_i32 = arith.constant 0 : i32
    %c0_i32_0 = arith.constant 0 : i32
    %c0_i32_1 = arith.constant 0 : i32
    return %arg0, %c0_i32, %c0_i32_0, %arg1 : i32, i32, i32, i32
  }
  func.func @transform_1(%arg0: i32, %arg1: i32) -> (i32, i32, i32, i32) {
    %c0_i32 = arith.constant 0 : i32
    %c0_i32_0 = arith.constant 0 : i32
    %c0_i32_1 = arith.constant 0 : i32
    return %arg0, %c0_i32, %c0_i32_0, %arg1 : i32, i32, i32, i32
  }
  func.func @transform_2(%arg0: i32, %arg1: i32) -> (i32, i32, i32, i32) {
    %c0_i32 = arith.constant 0 : i32
    %c0_i32_0 = arith.constant 0 : i32
    %c0_i32_1 = arith.constant 0 : i32
    return %arg0, %c0_i32, %c0_i32_0, %arg1 : i32, i32, i32, i32
  }
  func.func @transform_3(%arg0: i32, %arg1: i32) -> (i32, i32, i32, i32) {
    %c0_i32 = arith.constant 0 : i32
    %c0_i32_0 = arith.constant 0 : i32
    %c0_i32_1 = arith.constant 0 : i32
    return %arg0, %c0_i32, %c0_i32_0, %arg1 : i32, i32, i32, i32
  }
  func.func @transform_4(%arg0: i32, %arg1: i32) -> (i32, i32, i32, i32) {
    %c0_i32 = arith.constant 0 : i32
    %c0_i32_0 = arith.constant 0 : i32
    %c0_i32_1 = arith.constant 0 : i32
    return %arg0, %c0_i32, %c0_i32_0, %arg1 : i32, i32, i32, i32
  }
  func.func @transform_5(%arg0: i32, %arg1: i32) -> (i32, i32, i32, i32) {
    %c0_i32 = arith.constant 0 : i32
    %c0_i32_0 = arith.constant 0 : i32
    %c0_i32_1 = arith.constant 0 : i32
    return %arg0, %c0_i32, %c0_i32_0, %arg1 : i32, i32, i32, i32
  }
  func.func @transform_6(%arg0: i32, %arg1: i32) -> (i32, i32, i32, i32) {
    %c0_i32 = arith.constant 0 : i32
    %c0_i32_0 = arith.constant 0 : i32
    %c0_i32_1 = arith.constant 0 : i32
    return %arg0, %c0_i32, %c0_i32_0, %arg1 : i32, i32, i32, i32
  }
  func.func @transform_7(%arg0: i32, %arg1: i32) -> (i32, i32, i32, i32) {
    %c0_i32 = arith.constant 0 : i32
    %c0_i32_0 = arith.constant 0 : i32
    %c0_i32_1 = arith.constant 0 : i32
    return %arg0, %c0_i32, %c0_i32_0, %arg1 : i32, i32, i32, i32
  }
}

</mosaic_0001>

<llo_original>
// kernel: fourier_up_block_forward.4
$region0: #{fourier_up_block_forward.4}
  #allocation0 [shape = 'u32[]', space=smem, size = 0x4, offset = 0x4, fixed_abs, tag = 'smem constant byte address 0x4 - core index']
  #allocation1 [shape = 'u32[72,128]{1,0:T(1,128)}', space=vmem, size = 0x9000, scoped, tag = 'internal scratch']
  %s0 = inlined_call_operand.vmem [shape: f32[2,12,256], index: 0, kind: input, shape index: {}]
  %s1 = inlined_call_operand.vmem [shape: bf16[8,12], index: 1, kind: input, shape index: {}]
  %s2 = inlined_call_operand.vmem [shape: f32[8,1], index: 2, kind: input, shape index: {}, may-alias: {2,4}]
  %s3 = inlined_call_operand.vmem [shape: bf16[8,12], index: 3, kind: input, shape index: {}]
  %s4 = inlined_call_operand.vmem [shape: f32[8,1], index: 4, kind: input, shape index: {}, may-alias: {2,4}]
  %s5 = inlined_call_operand.vmem [shape: f32[2,12,256], index: 5, kind: output, shape index: {0}]
  %s6 = inlined_call_operand.vmem [shape: f32[2,8,256], index: 6, kind: output, shape index: {1}]
  %s7 = inlined_call_operand.vmem [shape: f32[2,8,256], index: 7, kind: output, shape index: {2}]
  %8 = xla_tuple %s5, %s6, %s7
  %s9 = sld [smem:[#allocation0]]
  $region69: #{fourier_up_block_forward.4} parent=0
    _
  %s11 = ssub.s32 1, %s9
  %s12 = scalar_select 0, %s11, %s9
  loop: start=0, step=1, limit=4
  $region2: #{fourier_up_block_forward.4} parent=0 // loop_pre_header
    _
  $region3: #{fourier_up_block_forward.4} parent=0 // loop_header
    %s14 = sphi 0, %s18
    %p15 = scmp.ge.s32.totalorder %s14, 4
    %s21 = sphi 0, %s33
    %s22 = sphi 0, %s29
    %s23 = sphi 0, %s21
    %s24 = sphi 0, %s22
    %s25 = sphi 0, %s23
    %s26 = sphi 0, %s24
    %s38 = sphi 0, %s40
    %s41 = sphi 0, %s38
    %s42 = sphi 0, %s41
    %s58 = sphi 0, %s42
    %s62 = sphi 0, %s62
    %s64 = sphi 0, %s62
    %s65 = sphi 0, %s64
    %s79 = sphi 0, %s65
    %s83 = sphi 0, %s83
    %s85 = sphi 0, %s83
    %s86 = sphi 0, %s85
    %s100 = sphi 0, %s86
    %s104 = sphi 0, %s104
    %s106 = sphi 0, %s104
    %s107 = sphi 0, %s106
    %s121 = sphi 0, %s107
    %s125 = sphi 0, %s125
    %s127 = sphi 0, %s125
    %s128 = sphi 0, %s127
    %s142 = sphi 0, %s128
    %s150 = sphi 0, %s152
    %s153 = sphi 0, %s150
    %s154 = sphi 0, %s153
    %s170 = sphi 0, %s154
    %s178 = sphi 0, %s180
    %s181 = sphi 0, %s178
    %s182 = sphi 0, %s181
    %s198 = sphi 0, %s182
    %s206 = sphi 0, %s208
    %s209 = sphi 0, %s206
    %s210 = sphi 0, %s209
    %s226 = sphi 0, %s210
  $region4: #{fourier_up_block_forward.4} parent=0 // loop_header_branch
    %17 = sbr.rel (%p15) target = $region8
  $region5: #{fourier_up_block_forward.4} parent=0 // loop_body
    %s19 = ssub.s32 %s14, 1
    %s20 = ssub.s32 %s14, 2
    %s27 = sadd.s32 1, %s22
    %p28 = scmp.ge.s32.totalorder %s27, 1
    %s29 = scalar_select %p28, 0, %s27
    %s30 = sadd.s32 1, %s21
    %s31 = scalar_select %p28, %s30, %s21
    %p32 = scmp.ge.s32.totalorder %s31, 2
    %s33 = scalar_select %p32, 0, %s31
    %s34 = ssub.s32 %s21, %s33
    %s35 = ssub.s32 %s22, %s29
    %s36 = sor.u32 %s34, %s35
    %p37 = scmp.eq.s32.totalorder %s36, 0
    %s39 = sadd.s32 %s38, 1
    %s40 = scalar_select %p37, %s38, %s39
    %p43 = pneg %p37
    %p44 = scmp.eq.s32.totalorder %s14, 1
    %p45 = por %p43, %p44
    %p46 = scmp.ne.s32.totalorder %s38, %s41
    %p47 = scmp.eq.s32.totalorder %s14, 0
    %p48 = por %p46, %p47
    %p49 = scmp.ne.s32.totalorder %s38, %s41
    %p50 = scmp.eq.s32.totalorder %s19, 1
    %p51 = por %p49, %p50
    %p52 = scmp.ne.s32.totalorder %s41, %s42
    %p53 = scmp.eq.s32.totalorder %s19, 0
    %p54 = por %p52, %p53
    %p55 = scmp.ne.s32.totalorder %s41, %s42
    %p56 = scmp.eq.s32.totalorder %s20, 1
    %p57 = por %p55, %p56
    %p59 = scmp.ne.s32.totalorder %s42, %s58
    %p60 = scmp.eq.s32.totalorder %s20, 0
    %p61 = por %p59, %p60
    %s63 = sadd.s32 %s62, 1
    %p66 = scmp.eq.s32.totalorder %s14, 1
    %p67 = scmp.ne.s32.totalorder %s62, %s64
    %p68 = scmp.eq.s32.totalorder %s14, 0
    %p69 = por %p67, %p68
    %p70 = scmp.ne.s32.totalorder %s62, %s64
    %p71 = scmp.eq.s32.totalorder %s19, 1
    %p72 = por %p70, %p71
    %p73 = scmp.ne.s32.totalorder %s64, %s65
    %p74 = scmp.eq.s32.totalorder %s19, 0
    %p75 = por %p73, %p74
    %p76 = scmp.ne.s32.totalorder %s64, %s65
    %p77 = scmp.eq.s32.totalorder %s20, 1
    %p78 = por %p76, %p77
    %p80 = scmp.ne.s32.totalorder %s65, %s79
    %p81 = scmp.eq.s32.totalorder %s20, 0
    %p82 = por %p80, %p81
    %s84 = sadd.s32 %s83, 1
    %p87 = scmp.eq.s32.totalorder %s14, 1
    %p88 = scmp.ne.s32.totalorder %s83, %s85
    %p89 = scmp.eq.s32.totalorder %s14, 0
    %p90 = por %p88, %p89
    %p91 = scmp.ne.s32.totalorder %s83, %s85
    %p92 = scmp.eq.s32.totalorder %s19, 1
    %p93 = por %p91, %p92
    %p94 = scmp.ne.s32.totalorder %s85, %s86
    %p95 = scmp.eq.s32.totalorder %s19, 0
    %p96 = por %p94, %p95
    %p97 = scmp.ne.s32.totalorder %s85, %s86
    %p98 = scmp.eq.s32.totalorder %s20, 1
    %p99 = por %p97, %p98
    %p101 = scmp.ne.s32.totalorder %s86, %s100
    %p102 = scmp.eq.s32.totalorder %s20, 0
    %p103 = por %p101, %p102
    %s105 = sadd.s32 %s104, 1
    %p108 = scmp.eq.s32.totalorder %s14, 1
    %p109 = scmp.ne.s32.totalorder %s104, %s106
    %p110 = scmp.eq.s32.totalorder %s14, 0
    %p111 = por %p109, %p110
    %p112 = scmp.ne.s32.totalorder %s104, %s106
    %p113 = scmp.eq.s32.totalorder %s19, 1
    %p114 = por %p112, %p113
    %p115 = scmp.ne.s32.totalorder %s106, %s107
    %p116 = scmp.eq.s32.totalorder %s19, 0
    %p117 = por %p115, %p116
    %p118 = scmp.ne.s32.totalorder %s106, %s107
    %p119 = scmp.eq.s32.totalorder %s20, 1
    %p120 = por %p118, %p119
    %p122 = scmp.ne.s32.totalorder %s107, %s121
    %p123 = scmp.eq.s32.totalorder %s20, 0
    %p124 = por %p122, %p123
    %s126 = sadd.s32 %s125, 1
    %p129 = scmp.eq.s32.totalorder %s14, 1
    %p130 = scmp.ne.s32.totalorder %s125, %s127
    %p131 = scmp.eq.s32.totalorder %s14, 0
    %p132 = por %p130, %p131
    %p133 = scmp.ne.s32.totalorder %s125, %s127
    %p134 = scmp.eq.s32.totalorder %s19, 1
    %p135 = por %p133, %p134
    %p136 = scmp.ne.s32.totalorder %s127, %s128
    %p137 = scmp.eq.s32.totalorder %s19, 0
    %p138 = por %p136, %p137
    %p139 = scmp.ne.s32.totalorder %s127, %s128
    %p140 = scmp.eq.s32.totalorder %s20, 1
    %p141 = por %p139, %p140
    %p143 = scmp.ne.s32.totalorder %s128, %s142
    %p144 = scmp.eq.s32.totalorder %s20, 0
    %p145 = por %p143, %p144
    %s146 = ssub.s32 %s21, %s33
    %s147 = ssub.s32 %s22, %s29
    %s148 = sor.u32 %s146, %s147
    %p149 = scmp.eq.s32.totalorder %s148, 0
    %s151 = sadd.s32 %s150, 1
    %s152 = scalar_select %p149, %s150, %s151
    %p155 = pneg %p149
    %p156 = scmp.eq.s32.totalorder %s14, 1
    %p157 = por %p155, %p156
    %p158 = scmp.ne.s32.totalorder %s150, %s153
    %p159 = scmp.eq.s32.totalorder %s14, 0
    %p160 = por %p158, %p159
    %p161 = scmp.ne.s32.totalorder %s150, %s153
    %p162 = scmp.eq.s32.totalorder %s19, 1
    %p163 = por %p161, %p162
    %p164 = scmp.ne.s32.totalorder %s153, %s154
    %p165 = scmp.eq.s32.totalorder %s19, 0
    %p166 = por %p164, %p165
    %p167 = scmp.ne.s32.totalorder %s153, %s154
    %p168 = scmp.eq.s32.totalorder %s20, 1
    %p169 = por %p167, %p168
    %p171 = scmp.ne.s32.totalorder %s154, %s170
    %p172 = scmp.eq.s32.totalorder %s20, 0
    %p173 = por %p171, %p172
    %s174 = ssub.s32 %s21, %s33
    %s175 = ssub.s32 %s22, %s29
    %s176 = sor.u32 %s174, %s175
    %p177 = scmp.eq.s32.totalorder %s176, 0
    %s179 = sadd.s32 %s178, 1
    %s180 = scalar_select %p177, %s178, %s179
    %p183 = pneg %p177
    %p184 = scmp.eq.s32.totalorder %s14, 1
    %p185 = por %p183, %p184
    %p186 = scmp.ne.s32.totalorder %s178, %s181
    %p187 = scmp.eq.s32.totalorder %s14, 0
    %p188 = por %p186, %p187
    %p189 = scmp.ne.s32.totalorder %s178, %s181
    %p190 = scmp.eq.s32.totalorder %s19, 1
    %p191 = por %p189, %p190
    %p192 = scmp.ne.s32.totalorder %s181, %s182
    %p193 = scmp.eq.s32.totalorder %s19, 0
    %p194 = por %p192, %p193
    %p195 = scmp.ne.s32.totalorder %s181, %s182
    %p196 = scmp.eq.s32.totalorder %s20, 1
    %p197 = por %p195, %p196
    %p199 = scmp.ne.s32.totalorder %s182, %s198
    %p200 = scmp.eq.s32.totalorder %s20, 0
    %p201 = por %p199, %p200
    %s202 = ssub.s32 %s21, %s33
    %s203 = ssub.s32 %s22, %s29
    %s204 = sor.u32 %s202, %s203
    %p205 = scmp.eq.s32.totalorder %s204, 0
    %s207 = sadd.s32 %s206, 1
    %s208 = scalar_select %p205, %s206, %s207
    %p211 = pneg %p205
    %p212 = scmp.eq.s32.totalorder %s14, 1
    %p213 = por %p211, %p212
    %p214 = scmp.ne.s32.totalorder %s206, %s209
    %p215 = scmp.eq.s32.totalorder %s14, 0
    %p216 = por %p214, %p215
    %p217 = scmp.ne.s32.totalorder %s206, %s209
    %p218 = scmp.eq.s32.totalorder %s19, 1
    %p219 = por %p217, %p218
    %p220 = scmp.ne.s32.totalorder %s209, %s210
    %p221 = scmp.eq.s32.totalorder %s19, 0
    %p222 = por %p220, %p221
    %p223 = scmp.ne.s32.totalorder %s209, %s210
    %p224 = scmp.eq.s32.totalorder %s20, 1
    %p225 = por %p223, %p224
    %p227 = scmp.ne.s32.totalorder %s210, %s226
    %p228 = scmp.eq.s32.totalorder %s20, 0
    %p229 = por %p227, %p228
    %p230 = scmp.le.s32.totalorder 1, %s14
    %p231 = scmp.lt.s32.totalorder %s14, 3
    %p232 = pnand %p230, %p231
    %p233 = pneg %p232
    // Predicated region
    $region9: #{fourier_up_block_forward.4} parent=5 // pred_check
      _
    $region10: #{fourier_up_block_forward.4} parent=5 // pred_check_branch
      %235 = sbr.rel (%p232) target = $region12
    $region11: #{fourier_up_block_forward.4} parent=5 // pred_region
      %s236 = ssub.s32 %s14, 1
      // Predicated region
      $region13: #{fourier_up_block_forward.4} parent=11 // pred_check
        %p237 = pneg %p75
      $region14: #{fourier_up_block_forward.4} parent=11 // pred_check_branch
        %239 = sbr.rel (%p237) target = $region16
      $region15: #{fourier_up_block_forward.4} parent=11 // pred_region
        _
      $region16: #{fourier_up_block_forward.4} parent=11 // pred_fallthru
        _
      // Predicated region
      $region17: #{fourier_up_block_forward.4} parent=11 // pred_check
        %p240 = pneg %p96
      $region18: #{fourier_up_block_forward.4} parent=11 // pred_check_branch
        %242 = sbr.rel (%p240) target = $region20
      $region19: #{fourier_up_block_forward.4} parent=11 // pred_region
        _
      $region20: #{fourier_up_block_forward.4} parent=11 // pred_fallthru
        _
      // Predicated region
      $region21: #{fourier_up_block_forward.4} parent=11 // pred_check
        %p243 = pneg %p117
      $region22: #{fourier_up_block_forward.4} parent=11 // pred_check_branch
        %245 = sbr.rel (%p243) target = $region24
      $region23: #{fourier_up_block_forward.4} parent=11 // pred_region
        _
      $region24: #{fourier_up_block_forward.4} parent=11 // pred_fallthru
        _
      // Predicated region
      $region25: #{fourier_up_block_forward.4} parent=11 // pred_check
        %p246 = pneg %p138
      $region26: #{fourier_up_block_forward.4} parent=11 // pred_check_branch
        %248 = sbr.rel (%p246) target = $region28
      $region27: #{fourier_up_block_forward.4} parent=11 // pred_region
        _
      $region28: #{fourier_up_block_forward.4} parent=11 // pred_fallthru
        _
    $region12: #{fourier_up_block_forward.4} parent=5 // pred_fallthru
      _
    %p249 = scmp.lt.s32.totalorder %s14, 2
    // Predicated region
    $region29: #{fourier_up_block_forward.4} parent=5 // pred_check
      %p250 = pneg %p249
    $region30: #{fourier_up_block_forward.4} parent=5 // pred_check_branch
      %252 = sbr.rel (%p250) target = $region32
    $region31: #{fourier_up_block_forward.4} parent=5 // pred_region
      // Predicated region
      $region33: #{fourier_up_block_forward.4} parent=31 // pred_check
        %p253 = pneg %p48
      $region34: #{fourier_up_block_forward.4} parent=31 // pred_check_branch
        %255 = sbr.rel (%p253) target = $region36
      $region35: #{fourier_up_block_forward.4} parent=31 // pred_region
        %s256 = smul.u32 2, %s22
        %p257 = scmp.lt.s32.totalorder %s21, 1
        %s258 = scalar_select %p257, %s21, 1
        %p259 = scmp.lt.s32.totalorder %s256, 1
        %s260 = scalar_select %p259, %s256, 1
        %s261 = smul.addr %s258, 4
        %s262 = sadd.s32 %s260, %s261
        %s263 = smul.addr %s262, 8
        %s264 = scalar_lea.vmem %s0, %s263
        %s265 = smul.u32 2, %s22
      $region36: #{fourier_up_block_forward.4} parent=31 // pred_fallthru
        _
    $region32: #{fourier_up_block_forward.4} parent=5 // pred_fallthru
      _
    %p266 = scmp.le.s32.totalorder 1, %s14
    %p267 = scmp.lt.s32.totalorder %s14, 3
    %p268 = pnand %p266, %p267
    %p269 = pneg %p268
    // Predicated region
    $region37: #{fourier_up_block_forward.4} parent=5 // pred_check
      _
    $region38: #{fourier_up_block_forward.4} parent=5 // pred_check_branch
      %271 = sbr.rel (%p268) target = $region40
    $region39: #{fourier_up_block_forward.4} parent=5 // pred_region
      %s272 = ssub.s32 %s14, 1
      %s273 = smul.u32 2, %s24
      %p274 = scmp.lt.s32.totalorder %s23, 1
      %s275 = scalar_select %p274, %s23, 1
      %p276 = scmp.lt.s32.totalorder %s273, 1
      %s277 = scalar_select %p276, %s273, 1
      %s278 = smul.addr %s275, 4
      %s279 = sadd.s32 %s277, %s278
      %s280 = smul.addr %s279, 8
      %s281 = scalar_lea.vmem %s0, %s280
      %p282 = pneg %p54
      %p283 = pneg %p51
      %p284 = pneg %p75
      %p285 = pneg %p72
      %p286 = pneg %p96
      %p287 = pneg %p93
      %p288 = pneg %p117
      %p289 = pneg %p114
      %p290 = pneg %p138
      %p291 = pneg %p135
      %p292 = pneg %p166
      %p293 = pneg %p163
      %s294 = smul.u32 2, %s24
      %p295 = scmp.lt.s32.totalorder %s23, 1
      %s296 = scalar_select %p295, %s23, 1
      %p297 = scmp.lt.s32.totalorder %s294, 1
      %s298 = scalar_select %p297, %s294, 1
      %s299 = smul.addr %s296, 4
      %s300 = sadd.s32 %s298, %s299
      %s301 = smul.addr %s300, 8
      %s302 = scalar_lea.vmem %s5, %s301
      %p303 = pneg %p194
      %p304 = pneg %p191
      %s305 = smul.u32 2, %s24
      %p306 = scmp.lt.s32.totalorder %s23, 1
      %s307 = scalar_select %p306, %s23, 1
      %p308 = scmp.lt.s32.totalorder %s305, 1
      %s309 = scalar_select %p308, %s305, 1
      %s310 = smul.addr %s307, 2
      %s311 = sadd.s32 %s309, %s310
      %s312 = smul.addr %s311, 8
      %s313 = scalar_lea.vmem %s6, %s312
      %p314 = pneg %p222
      %p315 = pneg %p219
      %s316 = smul.u32 2, %s24
      %p317 = scmp.lt.s32.totalorder %s23, 1
      %s318 = scalar_select %p317, %s23, 1
      %p319 = scmp.lt.s32.totalorder %s316, 1
      %s320 = scalar_select %p319, %s316, 1
      %s321 = smul.addr %s318, 2
      %s322 = sadd.s32 %s320, %s321
      %s323 = smul.addr %s322, 8
      %s324 = scalar_lea.vmem %s7, %s323
      %s325 = smul.u32 2, %s24
      %p326 = scmp.lt.s32.totalorder %s23, 1
      %s327 = scalar_select %p326, %s23, 1
      %p328 = scmp.lt.s32.totalorder %s325, 1
      %s329 = scalar_select %p328, %s325, 1
      %s330 = smul.addr %s327, 4
      %s331 = sadd.s32 %s329, %s330
      %s332 = smul.addr %s331, 8
      %s333 = scalar_lea.vmem %s0, %s332
      %s334 = smul.u32 2, %s24
      %s335 = smul.u32 2, %s24
      %p336 = scmp.lt.s32.totalorder %s23, 1
      %s337 = scalar_select %p336, %s23, 1
      %p338 = scmp.lt.s32.totalorder %s335, 1
      %s339 = scalar_select %p338, %s335, 1
      %s340 = smul.addr %s337, 4
      %s341 = sadd.s32 %s339, %s340
      %s342 = smul.addr %s341, 8
      %s343 = scalar_lea.vmem %s5, %s342
      %s344 = smul.u32 2, %s24
      %s345 = smul.u32 2, %s24
      %p346 = scmp.lt.s32.totalorder %s23, 1
      %s347 = scalar_select %p346, %s23, 1
      %p348 = scmp.lt.s32.totalorder %s345, 1
      %s349 = scalar_select %p348, %s345, 1
      %s350 = smul.addr %s347, 2
      %s351 = sadd.s32 %s349, %s350
      %s352 = smul.addr %s351, 8
      %s353 = scalar_lea.vmem %s6, %s352
      %s354 = smul.u32 2, %s24
      %s355 = smul.u32 2, %s24
      %p356 = scmp.lt.s32.totalorder %s23, 1
      %s357 = scalar_select %p356, %s23, 1
      %p358 = scmp.lt.s32.totalorder %s355, 1
      %s359 = scalar_select %p358, %s355, 1
      %s360 = smul.addr %s357, 2
      %s361 = sadd.s32 %s359, %s360
      %s362 = smul.addr %s361, 8
      %s363 = scalar_lea.vmem %s7, %s362
      %s364 = smul.u32 2, %s24
      %v366 = vld [vmem:[%s333] sm:$0xff]
      %v367 = vld [vmem:[%s333 + $0x8] sm:$0xff]
      %v368 = vld [vmem:[%s333 + $0x10] sm:$0xf]
      %v369 = vld [vmem:[%s333 + $0x18] sm:$0xf]
      %v370 = vmul.f32 %v366, 0.5
      %v371 = vmul.f32 %v367, 0.5
      %v372 = vmul.f32 %v368, 0.5
      %v373 = vmul.f32 %v369, 0.5
      %v374 = vmul.f32 %v366, 0.044715
      %v375 = vmul.f32 %v367, 0.044715
      %v376 = vmul.f32 %v368, 0.044715
      %v377 = vmul.f32 %v369, 0.044715
      %v378 = vmul.f32 %v374, %v366
      %v379 = vmul.f32 %v375, %v367
      %v380 = vmul.f32 %v376, %v368
      %v381 = vmul.f32 %v377, %v369
      %v382 = vmul.f32 %v378, %v366
      %v383 = vmul.f32 %v379, %v367
      %v384 = vmul.f32 %v380, %v368
      %v385 = vmul.f32 %v381, %v369
      %v386 = vadd.f32 %v366, %v382
      %v387 = vadd.f32 %v367, %v383
      %v388 = vadd.f32 %v368, %v384
      %v389 = vadd.f32 %v369, %v385
      %v390 = vmul.f32 %v386, 0.7978846
      %v391 = vmul.f32 %v387, 0.7978846
      %v392 = vmul.f32 %v388, 0.7978846
      %v393 = vmul.f32 %v389, 0.7978846
      %v394 = vtanh.pop %v390
      %v395 = vtanh.pop %v391
      %v396 = vtanh.pop %v392
      %v397 = vtanh.pop %v393
      %v398 = vadd.f32 %v394, 1.0
      %v399 = vadd.f32 %v395, 1.0
      %v400 = vadd.f32 %v396, 1.0
      %v401 = vadd.f32 %v397, 1.0
      %v402 = vmul.f32 %v370, %v398
      %v403 = vmul.f32 %v371, %v399
      %v404 = vmul.f32 %v372, %v400
      %v405 = vmul.f32 %v373, %v401
      %406 = vst [vmem:[%s343] sm:$0xff] %v402
      %407 = vst [vmem:[%s343 + $0x8] sm:$0xff] %v403
      %408 = vst [vmem:[%s343 + $0x10] sm:$0xf] %v404
      %409 = vst [vmem:[%s343 + $0x18] sm:$0xf] %v405
      %v410 = vpack.c.bf16 %v404, %v402
      %v411 = vpack.c.bf16 %v405, %v403
      %v412 = vpack.c.bf16 %v368, %v366
      %v413 = vpack.c.bf16 %v369, %v367
      %v414 = vld [vmem:[%s1] sm:$0xf]
      %v415 = vld [vmem:[%s2] sm:$0xff]
      %417 = vset.pattern.permute.xlu0 0
      %418 = vperm.xlu0 %417, %v415
      %v419 = vpop.permute.xlu0 %418
      %vm421 = vcmask 97280
      %v423 = vsel %vm421, %v414, 0
      %vm425 = vcmask 1045504
      %v427 = vsel %vm425, %v410, 0
      %v430 = vsel %vm425, %v411, 0
      %432 = vmatpush.bf16.msra.mxu0 0
      %433 = vmatpush.bf16.msra.mxu0 0
      %434 = vmatpush.bf16.msra.mxu0 0
      %435 = vmatpush.bf16.msra.mxu0 0
      %436 = vmatpush.bf16.msra.mxu0 0
      %437 = vmatpush.bf16.msra.mxu0 0
      %438 = vmatpush.bf16.msra.mxu0 0
      %439 = vmatpush.bf16.msra.mxu0 %v427
      %440 = vmatmul.bf16.gmra.mxu0 %v423
      %v441 = vpop.f32.mrf.mxu0
      %v442 = vadd.f32 %v419, %v441
      %v443 = vpop.f32.mrf.mxu0
      %444 = vdwg.mxu0
      %445 = vmatpush.bf16.msra.mxu0 0
      %446 = vmatpush.bf16.msra.mxu0 0
      %447 = vmatpush.bf16.msra.mxu0 0
      %448 = vmatpush.bf16.msra.mxu0 0
      %449 = vmatpush.bf16.msra.mxu0 0
      %450 = vmatpush.bf16.msra.mxu0 0
      %451 = vmatpush.bf16.msra.mxu0 0
      %452 = vmatpush.bf16.msra.mxu0 %v430
      %453 = vmatmul.bf16.gmra.mxu0 %v423
      %v454 = vpop.f32.mrf.mxu0
      %v455 = vadd.f32 %v419, %v454
      %v456 = vpop.f32.mrf.mxu0
      %457 = vdwg.mxu0
      %458 = vst [vmem:[%s353] sm:$0xff] %v442
      %459 = vst [vmem:[%s353 + $0x8] sm:$0xff] %v455
      %v460 = vld [vmem:[%s3] sm:$0xf]
      %v461 = vld [vmem:[%s4] sm:$0xff]
      %463 = vset.pattern.permute.xlu0 0
      %464 = vperm.xlu0 %463, %v461
      %v465 = vpop.permute.xlu0 %464
      %v468 = vsel %vm421, %v460, 0
      %v471 = vsel %vm425, %v412, 0
      %v474 = vsel %vm425, %v413, 0
      %476 = vmatpush.bf16.msra.mxu0 0
      %477 = vmatpush.bf16.msra.mxu0 0
      %478 = vmatpush.bf16.msra.mxu0 0
      %479 = vmatpush.bf16.msra.mxu0 0
      %480 = vmatpush.bf16.msra.mxu0 0
      %481 = vmatpush.bf16.msra.mxu0 0
      %482 = vmatpush.bf16.msra.mxu0 0
      %483 = vmatpush.bf16.msra.mxu0 %v471
      %484 = vmatmul.bf16.gmra.mxu0 %v468
      %v485 = vpop.f32.mrf.mxu0
      %v486 = vadd.f32 %v465, %v485
      %v487 = vpop.f32.mrf.mxu0
      %488 = vdwg.mxu0
      %489 = vmatpush.bf16.msra.mxu0 0
      %490 = vmatpush.bf16.msra.mxu0 0
      %491 = vmatpush.bf16.msra.mxu0 0
      %492 = vmatpush.bf16.msra.mxu0 0
      %493 = vmatpush.bf16.msra.mxu0 0
      %494 = vmatpush.bf16.msra.mxu0 0
      %495 = vmatpush.bf16.msra.mxu0 0
      %496 = vmatpush.bf16.msra.mxu0 %v474
      %497 = vmatmul.bf16.gmra.mxu0 %v468
      %v498 = vpop.f32.mrf.mxu0
      %v499 = vadd.f32 %v465, %v498
      %v500 = vpop.f32.mrf.mxu0
      %501 = vdwg.mxu0
      %502 = vst [vmem:[%s363] sm:$0xff] %v486
      %503 = vst [vmem:[%s363 + $0x8] sm:$0xff] %v499
      %s504 = smul.u32 2, %s24
      %p505 = scmp.lt.s32.totalorder %s23, 1
      %s506 = scalar_select %p505, %s23, 1
      %p507 = scmp.lt.s32.totalorder %s504, 1
      %s508 = scalar_select %p507, %s504, 1
      %s509 = smul.addr %s506, 4
      %s510 = sadd.s32 %s508, %s509
      %s511 = smul.addr %s510, 8
      %s512 = scalar_lea.vmem %s5, %s511
      %s513 = smul.u32 2, %s24
      %p514 = scmp.lt.s32.totalorder %s23, 1
      %s515 = scalar_select %p514, %s23, 1
      %p516 = scmp.lt.s32.totalorder %s513, 1
      %s517 = scalar_select %p516, %s513, 1
      %s518 = smul.addr %s515, 2
      %s519 = sadd.s32 %s517, %s518
      %s520 = smul.addr %s519, 8
      %s521 = scalar_lea.vmem %s6, %s520
      %s522 = smul.u32 2, %s24
      %p523 = scmp.lt.s32.totalorder %s23, 1
      %s524 = scalar_select %p523, %s23, 1
      %p525 = scmp.lt.s32.totalorder %s522, 1
      %s526 = scalar_select %p525, %s522, 1
      %s527 = smul.addr %s524, 2
      %s528 = sadd.s32 %s526, %s527
      %s529 = smul.addr %s528, 8
      %s530 = scalar_lea.vmem %s7, %s529
      // Predicated region
      $region41: #{fourier_up_block_forward.4} parent=39 // pred_check
        %p531 = pneg %p163
      $region42: #{fourier_up_block_forward.4} parent=39 // pred_check_branch
        %533 = sbr.rel (%p531) target = $region44
      $region43: #{fourier_up_block_forward.4} parent=39 // pred_region
        %s534 = smul.u32 2, %s24
      $region44: #{fourier_up_block_forward.4} parent=39 // pred_fallthru
        _
      // Predicated region
      $region45: #{fourier_up_block_forward.4} parent=39 // pred_check
        %p535 = pneg %p191
      $region46: #{fourier_up_block_forward.4} parent=39 // pred_check_branch
        %537 = sbr.rel (%p535) target = $region48
      $region47: #{fourier_up_block_forward.4} parent=39 // pred_region
        %s538 = smul.u32 2, %s24
      $region48: #{fourier_up_block_forward.4} parent=39 // pred_fallthru
        _
      // Predicated region
      $region49: #{fourier_up_block_forward.4} parent=39 // pred_check
        %p539 = pneg %p219
      $region50: #{fourier_up_block_forward.4} parent=39 // pred_check_branch
        %541 = sbr.rel (%p539) target = $region52
      $region51: #{fourier_up_block_forward.4} parent=39 // pred_region
        %s542 = smul.u32 2, %s24
      $region52: #{fourier_up_block_forward.4} parent=39 // pred_fallthru
        _
    $region40: #{fourier_up_block_forward.4} parent=5 // pred_fallthru
      _
    %p543 = scmp.le.s32.totalorder 2, %s14
    // Predicated region
    $region53: #{fourier_up_block_forward.4} parent=5 // pred_check
      %p544 = pneg %p543
    $region54: #{fourier_up_block_forward.4} parent=5 // pred_check_branch
      %546 = sbr.rel (%p544) target = $region56
    $region55: #{fourier_up_block_forward.4} parent=5 // pred_region
      %s547 = ssub.s32 %s14, 2
      // Predicated region
      $region57: #{fourier_up_block_forward.4} parent=55 // pred_check
        %p548 = pneg %p169
      $region58: #{fourier_up_block_forward.4} parent=55 // pred_check_branch
        %550 = sbr.rel (%p548) target = $region60
      $region59: #{fourier_up_block_forward.4} parent=55 // pred_region
        %s551 = smul.u32 2, %s26
        %p552 = scmp.lt.s32.totalorder %s25, 1
        %s553 = scalar_select %p552, %s25, 1
        %p554 = scmp.lt.s32.totalorder %s551, 1
        %s555 = scalar_select %p554, %s551, 1
        %s556 = smul.addr %s553, 4
        %s557 = sadd.s32 %s555, %s556
        %s558 = smul.addr %s557, 8
        %s559 = scalar_lea.vmem %s5, %s558
      $region60: #{fourier_up_block_forward.4} parent=55 // pred_fallthru
        _
      // Predicated region
      $region61: #{fourier_up_block_forward.4} parent=55 // pred_check
        %p560 = pneg %p197
      $region62: #{fourier_up_block_forward.4} parent=55 // pred_check_branch
        %562 = sbr.rel (%p560) target = $region64
      $region63: #{fourier_up_block_forward.4} parent=55 // pred_region
        %s563 = smul.u32 2, %s26
        %p564 = scmp.lt.s32.totalorder %s25, 1
        %s565 = scalar_select %p564, %s25, 1
        %p566 = scmp.lt.s32.totalorder %s563, 1
        %s567 = scalar_select %p566, %s563, 1
        %s568 = smul.addr %s565, 2
        %s569 = sadd.s32 %s567, %s568
        %s570 = smul.addr %s569, 8
        %s571 = scalar_lea.vmem %s6, %s570
      $region64: #{fourier_up_block_forward.4} parent=55 // pred_fallthru
        _
      // Predicated region
      $region65: #{fourier_up_block_forward.4} parent=55 // pred_check
        %p572 = pneg %p225
      $region66: #{fourier_up_block_forward.4} parent=55 // pred_check_branch
        %574 = sbr.rel (%p572) target = $region68
      $region67: #{fourier_up_block_forward.4} parent=55 // pred_region
        %s575 = smul.u32 2, %s26
        %p576 = scmp.lt.s32.totalorder %s25, 1
        %s577 = scalar_select %p576, %s25, 1
        %p578 = scmp.lt.s32.totalorder %s575, 1
        %s579 = scalar_select %p578, %s575, 1
        %s580 = smul.addr %s577, 2
        %s581 = sadd.s32 %s579, %s580
        %s582 = smul.addr %s581, 8
        %s583 = scalar_lea.vmem %s7, %s582
      $region68: #{fourier_up_block_forward.4} parent=55 // pred_fallthru
        _
    $region56: #{fourier_up_block_forward.4} parent=5 // pred_fallthru
      _
  $region6: #{fourier_up_block_forward.4} parent=0 // loop_footer
    %s18 = sadd.s32 1, %s14
  $region7: #{fourier_up_block_forward.4} parent=0 // loop_footer_branch
    %13 = sbr.rel target = $region3
  $region8: #{fourier_up_block_forward.4} parent=0 // loop_exit
    _

// kernel: fourier_up_block_forward.5
$region0: #{fourier_up_block_forward.5}
  #allocation0 [shape = 'u32[]', space=smem, size = 0x4, offset = 0x4, fixed_abs, tag = 'smem constant byte address 0x4 - core index']
  #allocation1 [shape = 'u32[72,128]{1,0:T(1,128)}', space=vmem, size = 0x9000, scoped, tag = 'internal scratch']
  %s0 = inlined_call_operand.vmem [shape: f32[2,2,12,16], index: 0, kind: input, shape index: {}]
  %s1 = inlined_call_operand.vmem [shape: f32[2,2,12,16], index: 1, kind: input, shape index: {}]
  %s2 = inlined_call_operand.vmem [shape: f32[2,2,1,16], index: 2, kind: input, shape index: {}]
  %s3 = inlined_call_operand.vmem [shape: f32[2,2,1,16], index: 3, kind: input, shape index: {}]
  %s4 = inlined_call_operand.vmem [shape: bf16[2,12,8,16], index: 4, kind: input, shape index: {}]
  %s5 = inlined_call_operand.vmem [shape: bf16[2,12,8,16], index: 5, kind: input, shape index: {}]
  %s6 = inlined_call_operand.vmem [shape: f32[2,2,8,16], index: 6, kind: output, shape index: {0}]
  %s7 = inlined_call_operand.vmem [shape: f32[2,2,8,16], index: 7, kind: output, shape index: {1}]
  %8 = xla_tuple %s6, %s7
  %s9 = sld [smem:[#allocation0]]
  $region65: #{fourier_up_block_forward.5} parent=0
    _
  %s11 = ssub.s32 1, %s9
  %s12 = scalar_select 0, %s11, %s9
  loop: start=0, step=1, limit=4
  $region2: #{fourier_up_block_forward.5} parent=0 // loop_pre_header
    _
  $region3: #{fourier_up_block_forward.5} parent=0 // loop_header
    %s14 = sphi 0, %s18
    %p15 = scmp.ge.s32.totalorder %s14, 4
    %s21 = sphi 0, %s33
    %s22 = sphi 0, %s29
    %s23 = sphi 0, %s21
    %s24 = sphi 0, %s22
    %s25 = sphi 0, %s23
    %s26 = sphi 0, %s24
    %s38 = sphi 0, %s40
    %s41 = sphi 0, %s38
    %s42 = sphi 0, %s41
    %s58 = sphi 0, %s42
    %s66 = sphi 0, %s68
    %s69 = sphi 0, %s66
    %s70 = sphi 0, %s69
    %s86 = sphi 0, %s70
    %s94 = sphi 0, %s96
    %s97 = sphi 0, %s94
    %s98 = sphi 0, %s97
    %s114 = sphi 0, %s98
    %s122 = sphi 0, %s124
    %s125 = sphi 0, %s122
    %s126 = sphi 0, %s125
    %s142 = sphi 0, %s126
    %s150 = sphi 0, %s152
    %s153 = sphi 0, %s150
    %s154 = sphi 0, %s153
    %s170 = sphi 0, %s154
    %s178 = sphi 0, %s180
    %s181 = sphi 0, %s178
    %s182 = sphi 0, %s181
    %s198 = sphi 0, %s182
    %s206 = sphi 0, %s208
    %s209 = sphi 0, %s206
    %s210 = sphi 0, %s209
    %s226 = sphi 0, %s210
    %s234 = sphi 0, %s236
    %s237 = sphi 0, %s234
    %s238 = sphi 0, %s237
    %s254 = sphi 0, %s238
  $region4: #{fourier_up_block_forward.5} parent=0 // loop_header_branch
    %17 = sbr.rel (%p15) target = $region8
  $region5: #{fourier_up_block_forward.5} parent=0 // loop_body
    %s19 = ssub.s32 %s14, 1
    %s20 = ssub.s32 %s14, 2
    %s27 = sadd.s32 1, %s22
    %p28 = scmp.ge.s32.totalorder %s27, 1
    %s29 = scalar_select %p28, 0, %s27
    %s30 = sadd.s32 1, %s21
    %s31 = scalar_select %p28, %s30, %s21
    %p32 = scmp.ge.s32.totalorder %s31, 2
    %s33 = scalar_select %p32, 0, %s31
    %s34 = ssub.s32 %s21, %s33
    %s35 = ssub.s32 %s22, %s29
    %s36 = sor.u32 %s34, %s35
    %p37 = scmp.eq.s32.totalorder %s36, 0
    %s39 = sadd.s32 %s38, 1
    %s40 = scalar_select %p37, %s38, %s39
    %p43 = pneg %p37
    %p44 = scmp.eq.s32.totalorder %s14, 1
    %p45 = por %p43, %p44
    %p46 = scmp.ne.s32.totalorder %s38, %s41
    %p47 = scmp.eq.s32.totalorder %s14, 0
    %p48 = por %p46, %p47
    %p49 = scmp.ne.s32.totalorder %s38, %s41
    %p50 = scmp.eq.s32.totalorder %s19, 1
    %p51 = por %p49, %p50
    %p52 = scmp.ne.s32.totalorder %s41, %s42
    %p53 = scmp.eq.s32.totalorder %s19, 0
    %p54 = por %p52, %p53
    %p55 = scmp.ne.s32.totalorder %s41, %s42
    %p56 = scmp.eq.s32.totalorder %s20, 1
    %p57 = por %p55, %p56
    %p59 = scmp.ne.s32.totalorder %s42, %s58
    %p60 = scmp.eq.s32.totalorder %s20, 0
    %p61 = por %p59, %p60
    %s62 = ssub.s32 %s21, %s33
    %s63 = ssub.s32 %s22, %s29
    %s64 = sor.u32 %s62, %s63
    %p65 = scmp.eq.s32.totalorder %s64, 0
    %s67 = sadd.s32 %s66, 1
    %s68 = scalar_select %p65, %s66, %s67
    %p71 = pneg %p65
    %p72 = scmp.eq.s32.totalorder %s14, 1
    %p73 = por %p71, %p72
    %p74 = scmp.ne.s32.totalorder %s66, %s69
    %p75 = scmp.eq.s32.totalorder %s14, 0
    %p76 = por %p74, %p75
    %p77 = scmp.ne.s32.totalorder %s66, %s69
    %p78 = scmp.eq.s32.totalorder %s19, 1
    %p79 = por %p77, %p78
    %p80 = scmp.ne.s32.totalorder %s69, %s70
    %p81 = scmp.eq.s32.totalorder %s19, 0
    %p82 = por %p80, %p81
    %p83 = scmp.ne.s32.totalorder %s69, %s70
    %p84 = scmp.eq.s32.totalorder %s20, 1
    %p85 = por %p83, %p84
    %p87 = scmp.ne.s32.totalorder %s70, %s86
    %p88 = scmp.eq.s32.totalorder %s20, 0
    %p89 = por %p87, %p88
    %s90 = ssub.s32 %s21, %s33
    %s91 = ssub.s32 %s22, %s29
    %s92 = sor.u32 %s90, %s91
    %p93 = scmp.eq.s32.totalorder %s92, 0
    %s95 = sadd.s32 %s94, 1
    %s96 = scalar_select %p93, %s94, %s95
    %p99 = pneg %p93
    %p100 = scmp.eq.s32.totalorder %s14, 1
    %p101 = por %p99, %p100
    %p102 = scmp.ne.s32.totalorder %s94, %s97
    %p103 = scmp.eq.s32.totalorder %s14, 0
    %p104 = por %p102, %p103
    %p105 = scmp.ne.s32.totalorder %s94, %s97
    %p106 = scmp.eq.s32.totalorder %s19, 1
    %p107 = por %p105, %p106
    %p108 = scmp.ne.s32.totalorder %s97, %s98
    %p109 = scmp.eq.s32.totalorder %s19, 0
    %p110 = por %p108, %p109
    %p111 = scmp.ne.s32.totalorder %s97, %s98
    %p112 = scmp.eq.s32.totalorder %s20, 1
    %p113 = por %p111, %p112
    %p115 = scmp.ne.s32.totalorder %s98, %s114
    %p116 = scmp.eq.s32.totalorder %s20, 0
    %p117 = por %p115, %p116
    %s118 = ssub.s32 %s21, %s33
    %s119 = ssub.s32 %s22, %s29
    %s120 = sor.u32 %s118, %s119
    %p121 = scmp.eq.s32.totalorder %s120, 0
    %s123 = sadd.s32 %s122, 1
    %s124 = scalar_select %p121, %s122, %s123
    %p127 = pneg %p121
    %p128 = scmp.eq.s32.totalorder %s14, 1
    %p129 = por %p127, %p128
    %p130 = scmp.ne.s32.totalorder %s122, %s125
    %p131 = scmp.eq.s32.totalorder %s14, 0
    %p132 = por %p130, %p131
    %p133 = scmp.ne.s32.totalorder %s122, %s125
    %p134 = scmp.eq.s32.totalorder %s19, 1
    %p135 = por %p133, %p134
    %p136 = scmp.ne.s32.totalorder %s125, %s126
    %p137 = scmp.eq.s32.totalorder %s19, 0
    %p138 = por %p136, %p137
    %p139 = scmp.ne.s32.totalorder %s125, %s126
    %p140 = scmp.eq.s32.totalorder %s20, 1
    %p141 = por %p139, %p140
    %p143 = scmp.ne.s32.totalorder %s126, %s142
    %p144 = scmp.eq.s32.totalorder %s20, 0
    %p145 = por %p143, %p144
    %s146 = ssub.s32 %s21, %s33
    %s147 = ssub.s32 %s22, %s29
    %s148 = sor.u32 %s146, %s147
    %p149 = scmp.eq.s32.totalorder %s148, 0
    %s151 = sadd.s32 %s150, 1
    %s152 = scalar_select %p149, %s150, %s151
    %p155 = pneg %p149
    %p156 = scmp.eq.s32.totalorder %s14, 1
    %p157 = por %p155, %p156
    %p158 = scmp.ne.s32.totalorder %s150, %s153
    %p159 = scmp.eq.s32.totalorder %s14, 0
    %p160 = por %p158, %p159
    %p161 = scmp.ne.s32.totalorder %s150, %s153
    %p162 = scmp.eq.s32.totalorder %s19, 1
    %p163 = por %p161, %p162
    %p164 = scmp.ne.s32.totalorder %s153, %s154
    %p165 = scmp.eq.s32.totalorder %s19, 0
    %p166 = por %p164, %p165
    %p167 = scmp.ne.s32.totalorder %s153, %s154
    %p168 = scmp.eq.s32.totalorder %s20, 1
    %p169 = por %p167, %p168
    %p171 = scmp.ne.s32.totalorder %s154, %s170
    %p172 = scmp.eq.s32.totalorder %s20, 0
    %p173 = por %p171, %p172
    %s174 = ssub.s32 %s21, %s33
    %s175 = ssub.s32 %s22, %s29
    %s176 = sor.u32 %s174, %s175
    %p177 = scmp.eq.s32.totalorder %s176, 0
    %s179 = sadd.s32 %s178, 1
    %s180 = scalar_select %p177, %s178, %s179
    %p183 = pneg %p177
    %p184 = scmp.eq.s32.totalorder %s14, 1
    %p185 = por %p183, %p184
    %p186 = scmp.ne.s32.totalorder %s178, %s181
    %p187 = scmp.eq.s32.totalorder %s14, 0
    %p188 = por %p186, %p187
    %p189 = scmp.ne.s32.totalorder %s178, %s181
    %p190 = scmp.eq.s32.totalorder %s19, 1
    %p191 = por %p189, %p190
    %p192 = scmp.ne.s32.totalorder %s181, %s182
    %p193 = scmp.eq.s32.totalorder %s19, 0
    %p194 = por %p192, %p193
    %p195 = scmp.ne.s32.totalorder %s181, %s182
    %p196 = scmp.eq.s32.totalorder %s20, 1
    %p197 = por %p195, %p196
    %p199 = scmp.ne.s32.totalorder %s182, %s198
    %p200 = scmp.eq.s32.totalorder %s20, 0
    %p201 = por %p199, %p200
    %s202 = ssub.s32 %s21, %s33
    %s203 = ssub.s32 %s22, %s29
    %s204 = sor.u32 %s202, %s203
    %p205 = scmp.eq.s32.totalorder %s204, 0
    %s207 = sadd.s32 %s206, 1
    %s208 = scalar_select %p205, %s206, %s207
    %p211 = pneg %p205
    %p212 = scmp.eq.s32.totalorder %s14, 1
    %p213 = por %p211, %p212
    %p214 = scmp.ne.s32.totalorder %s206, %s209
    %p215 = scmp.eq.s32.totalorder %s14, 0
    %p216 = por %p214, %p215
    %p217 = scmp.ne.s32.totalorder %s206, %s209
    %p218 = scmp.eq.s32.totalorder %s19, 1
    %p219 = por %p217, %p218
    %p220 = scmp.ne.s32.totalorder %s209, %s210
    %p221 = scmp.eq.s32.totalorder %s19, 0
    %p222 = por %p220, %p221
    %p223 = scmp.ne.s32.totalorder %s209, %s210
    %p224 = scmp.eq.s32.totalorder %s20, 1
    %p225 = por %p223, %p224
    %p227 = scmp.ne.s32.totalorder %s210, %s226
    %p228 = scmp.eq.s32.totalorder %s20, 0
    %p229 = por %p227, %p228
    %s230 = ssub.s32 %s21, %s33
    %s231 = ssub.s32 %s22, %s29
    %s232 = sor.u32 %s230, %s231
    %p233 = scmp.eq.s32.totalorder %s232, 0
    %s235 = sadd.s32 %s234, 1
    %s236 = scalar_select %p233, %s234, %s235
    %p239 = pneg %p233
    %p240 = scmp.eq.s32.totalorder %s14, 1
    %p241 = por %p239, %p240
    %p242 = scmp.ne.s32.totalorder %s234, %s237
    %p243 = scmp.eq.s32.totalorder %s14, 0
    %p244 = por %p242, %p243
    %p245 = scmp.ne.s32.totalorder %s234, %s237
    %p246 = scmp.eq.s32.totalorder %s19, 1
    %p247 = por %p245, %p246
    %p248 = scmp.ne.s32.totalorder %s237, %s238
    %p249 = scmp.eq.s32.totalorder %s19, 0
    %p250 = por %p248, %p249
    %p251 = scmp.ne.s32.totalorder %s237, %s238
    %p252 = scmp.eq.s32.totalorder %s20, 1
    %p253 = por %p251, %p252
    %p255 = scmp.ne.s32.totalorder %s238, %s254
    %p256 = scmp.eq.s32.totalorder %s20, 0
    %p257 = por %p255, %p256
    %p258 = scmp.le.s32.totalorder 1, %s14
    %p259 = scmp.lt.s32.totalorder %s14, 3
    %p260 = pnand %p258, %p259
    %p261 = pneg %p260
    // Predicated region
    $region9: #{fourier_up_block_forward.5} parent=5 // pred_check
      _
    $region10: #{fourier_up_block_forward.5} parent=5 // pred_check_branch
      %263 = sbr.rel (%p260) target = $region12
    $region11: #{fourier_up_block_forward.5} parent=5 // pred_region
      %s264 = ssub.s32 %s14, 1
    $region12: #{fourier_up_block_forward.5} parent=5 // pred_fallthru
      _
    %p265 = scmp.lt.s32.totalorder %s14, 2
    // Predicated region
    $region13: #{fourier_up_block_forward.5} parent=5 // pred_check
      %p266 = pneg %p265
    $region14: #{fourier_up_block_forward.5} parent=5 // pred_check_branch
      %268 = sbr.rel (%p266) target = $region16
    $region15: #{fourier_up_block_forward.5} parent=5 // pred_region
      // Predicated region
      $region17: #{fourier_up_block_forward.5} parent=15 // pred_check
        %p269 = pneg %p48
      $region18: #{fourier_up_block_forward.5} parent=15 // pred_check_branch
        %271 = sbr.rel (%p269) target = $region20
      $region19: #{fourier_up_block_forward.5} parent=15 // pred_region
        %p272 = scmp.lt.s32.totalorder %s21, 1
        %s273 = scalar_select %p272, %s21, 1
        %p274 = scmp.lt.s32.totalorder %s22, 0
        %s275 = scalar_select %p274, %s22, 0
        %s276 = smul.addr %s273, 4
        %s277 = sadd.s32 %s275, %s276
        %s278 = smul.addr %s277, 8
        %s279 = scalar_lea.vmem %s0, %s278
      $region20: #{fourier_up_block_forward.5} parent=15 // pred_fallthru
        _
      // Predicated region
      $region21: #{fourier_up_block_forward.5} parent=15 // pred_check
        %p280 = pneg %p76
      $region22: #{fourier_up_block_forward.5} parent=15 // pred_check_branch
        %282 = sbr.rel (%p280) target = $region24
      $region23: #{fourier_up_block_forward.5} parent=15 // pred_region
        %p283 = scmp.lt.s32.totalorder %s21, 1
        %s284 = scalar_select %p283, %s21, 1
        %p285 = scmp.lt.s32.totalorder %s22, 0
        %s286 = scalar_select %p285, %s22, 0
        %s287 = smul.addr %s284, 4
        %s288 = sadd.s32 %s286, %s287
        %s289 = smul.addr %s288, 8
        %s290 = scalar_lea.vmem %s1, %s289
      $region24: #{fourier_up_block_forward.5} parent=15 // pred_fallthru
        _
      // Predicated region
      $region25: #{fourier_up_block_forward.5} parent=15 // pred_check
        %p291 = pneg %p104
      $region26: #{fourier_up_block_forward.5} parent=15 // pred_check_branch
        %293 = sbr.rel (%p291) target = $region28
      $region27: #{fourier_up_block_forward.5} parent=15 // pred_region
        %p294 = scmp.lt.s32.totalorder %s21, 1
        %s295 = scalar_select %p294, %s21, 1
        %p296 = scmp.lt.s32.totalorder %s22, 0
        %s297 = scalar_select %p296, %s22, 0
        %s298 = smul.addr %s295, 2
        %s299 = sadd.s32 %s297, %s298
        %s300 = scalar_lea.vmem %s2, %s299
      $region28: #{fourier_up_block_forward.5} parent=15 // pred_fallthru
        _
      // Predicated region
      $region29: #{fourier_up_block_forward.5} parent=15 // pred_check
        %p301 = pneg %p132
      $region30: #{fourier_up_block_forward.5} parent=15 // pred_check_branch
        %303 = sbr.rel (%p301) target = $region32
      $region31: #{fourier_up_block_forward.5} parent=15 // pred_region
        %p304 = scmp.lt.s32.totalorder %s21, 1
        %s305 = scalar_select %p304, %s21, 1
        %p306 = scmp.lt.s32.totalorder %s22, 0
        %s307 = scalar_select %p306, %s22, 0
        %s308 = smul.addr %s305, 2
        %s309 = sadd.s32 %s307, %s308
        %s310 = scalar_lea.vmem %s3, %s309
      $region32: #{fourier_up_block_forward.5} parent=15 // pred_fallthru
        _
      // Predicated region
      $region33: #{fourier_up_block_forward.5} parent=15 // pred_check
        %p311 = pneg %p160
      $region34: #{fourier_up_block_forward.5} parent=15 // pred_check_branch
        %313 = sbr.rel (%p311) target = $region36
      $region35: #{fourier_up_block_forward.5} parent=15 // pred_region
        %p314 = scmp.lt.s32.totalorder %s21, 1
        %s315 = scalar_select %p314, %s21, 1
        %p316 = scmp.lt.s32.totalorder %s22, 0
        %s317 = scalar_select %p316, %s22, 0
        %s318 = smul.addr %s315, 12
        %s319 = sadd.s32 %s317, %s318
        %s320 = smul.addr %s319, 4
        %s321 = scalar_lea.vmem %s4, %s320
      $region36: #{fourier_up_block_forward.5} parent=15 // pred_fallthru
        _
      // Predicated region
      $region37: #{fourier_up_block_forward.5} parent=15 // pred_check
        %p322 = pneg %p188
      $region38: #{fourier_up_block_forward.5} parent=15 // pred_check_branch
        %324 = sbr.rel (%p322) target = $region40
      $region39: #{fourier_up_block_forward.5} parent=15 // pred_region
        %p325 = scmp.lt.s32.totalorder %s21, 1
        %s326 = scalar_select %p325, %s21, 1
        %p327 = scmp.lt.s32.totalorder %s22, 0
        %s328 = scalar_select %p327, %s22, 0
        %s329 = smul.addr %s326, 12
        %s330 = sadd.s32 %s328, %s329
        %s331 = smul.addr %s330, 4
        %s332 = scalar_lea.vmem %s5, %s331
      $region40: #{fourier_up_block_forward.5} parent=15 // pred_fallthru
        _
    $region16: #{fourier_up_block_forward.5} parent=5 // pred_fallthru
      _
    %p333 = scmp.le.s32.totalorder 1, %s14
    %p334 = scmp.lt.s32.totalorder %s14, 3
    %p335 = pnand %p333, %p334
    %p336 = pneg %p335
    // Predicated region
    $region41: #{fourier_up_block_forward.5} parent=5 // pred_check
      _
    $region42: #{fourier_up_block_forward.5} parent=5 // pred_check_branch
      %338 = sbr.rel (%p335) target = $region44
    $region43: #{fourier_up_block_forward.5} parent=5 // pred_region
      %s339 = ssub.s32 %s14, 1
      %p340 = scmp.lt.s32.totalorder %s23, 1
      %s341 = scalar_select %p340, %s23, 1
      %p342 = scmp.lt.s32.totalorder %s24, 0
      %s343 = scalar_select %p342, %s24, 0
      %s344 = smul.addr %s341, 4
      %s345 = sadd.s32 %s343, %s344
      %s346 = smul.addr %s345, 8
      %s347 = scalar_lea.vmem %s0, %s346
      %p348 = pneg %p54
      %p349 = pneg %p51
      %p350 = scmp.lt.s32.totalorder %s23, 1
      %s351 = scalar_select %p350, %s23, 1
      %p352 = scmp.lt.s32.totalorder %s24, 0
      %s353 = scalar_select %p352, %s24, 0
      %s354 = smul.addr %s351, 4
      %s355 = sadd.s32 %s353, %s354
      %s356 = smul.addr %s355, 8
      %s357 = scalar_lea.vmem %s1, %s356
      %p358 = pneg %p82
      %p359 = pneg %p79
      %p360 = scmp.lt.s32.totalorder %s23, 1
      %s361 = scalar_select %p360, %s23, 1
      %p362 = scmp.lt.s32.totalorder %s24, 0
      %s363 = scalar_select %p362, %s24, 0
      %s364 = smul.addr %s361, 2
      %s365 = sadd.s32 %s363, %s364
      %s366 = scalar_lea.vmem %s2, %s365
      %p367 = pneg %p110
      %p368 = pneg %p107
      %p369 = scmp.lt.s32.totalorder %s23, 1
      %s370 = scalar_select %p369, %s23, 1
      %p371 = scmp.lt.s32.totalorder %s24, 0
      %s372 = scalar_select %p371, %s24, 0
      %s373 = smul.addr %s370, 2
      %s374 = sadd.s32 %s372, %s373
      %s375 = scalar_lea.vmem %s3, %s374
      %p376 = pneg %p138
      %p377 = pneg %p135
      %p378 = scmp.lt.s32.totalorder %s23, 1
      %s379 = scalar_select %p378, %s23, 1
      %p380 = scmp.lt.s32.totalorder %s24, 0
      %s381 = scalar_select %p380, %s24, 0
      %s382 = smul.addr %s379, 12
      %s383 = sadd.s32 %s381, %s382
      %s384 = smul.addr %s383, 4
      %s385 = scalar_lea.vmem %s4, %s384
      %p386 = pneg %p166
      %p387 = pneg %p163
      %p388 = scmp.lt.s32.totalorder %s23, 1
      %s389 = scalar_select %p388, %s23, 1
      %p390 = scmp.lt.s32.totalorder %s24, 0
      %s391 = scalar_select %p390, %s24, 0
      %s392 = smul.addr %s389, 12
      %s393 = sadd.s32 %s391, %s392
      %s394 = smul.addr %s393, 4
      %s395 = scalar_lea.vmem %s5, %s394
      %p396 = pneg %p194
      %p397 = pneg %p191
      %p398 = pneg %p222
      %p399 = pneg %p219
      %p400 = scmp.lt.s32.totalorder %s23, 1
      %s401 = scalar_select %p400, %s23, 1
      %p402 = scmp.lt.s32.totalorder %s24, 0
      %s403 = scalar_select %p402, %s24, 0
      %s404 = smul.addr %s401, 2
      %s405 = sadd.s32 %s403, %s404
      %s406 = smul.addr %s405, 8
      %s407 = scalar_lea.vmem %s6, %s406
      %p408 = pneg %p250
      %p409 = pneg %p247
      %p410 = scmp.lt.s32.totalorder %s23, 1
      %s411 = scalar_select %p410, %s23, 1
      %p412 = scmp.lt.s32.totalorder %s24, 0
      %s413 = scalar_select %p412, %s24, 0
      %s414 = smul.addr %s411, 2
      %s415 = sadd.s32 %s413, %s414
      %s416 = smul.addr %s415, 8
      %s417 = scalar_lea.vmem %s7, %s416
      %p418 = scmp.lt.s32.totalorder %s23, 1
      %s419 = scalar_select %p418, %s23, 1
      %p420 = scmp.lt.s32.totalorder %s24, 0
      %s421 = scalar_select %p420, %s24, 0
      %s422 = smul.addr %s419, 4
      %s423 = sadd.s32 %s421, %s422
      %s424 = smul.addr %s423, 8
      %s425 = scalar_lea.vmem %s0, %s424
      %p426 = scmp.lt.s32.totalorder %s23, 1
      %s427 = scalar_select %p426, %s23, 1
      %p428 = scmp.lt.s32.totalorder %s24, 0
      %s429 = scalar_select %p428, %s24, 0
      %s430 = smul.addr %s427, 4
      %s431 = sadd.s32 %s429, %s430
      %s432 = smul.addr %s431, 8
      %s433 = scalar_lea.vmem %s1, %s432
      %p434 = scmp.lt.s32.totalorder %s23, 1
      %s435 = scalar_select %p434, %s23, 1
      %p436 = scmp.lt.s32.totalorder %s24, 0
      %s437 = scalar_select %p436, %s24, 0
      %s438 = smul.addr %s435, 2
      %s439 = sadd.s32 %s437, %s438
      %s440 = scalar_lea.vmem %s2, %s439
      %p441 = scmp.lt.s32.totalorder %s23, 1
      %s442 = scalar_select %p441, %s23, 1
      %p443 = scmp.lt.s32.totalorder %s24, 0
      %s444 = scalar_select %p443, %s24, 0
      %s445 = smul.addr %s442, 2
      %s446 = sadd.s32 %s444, %s445
      %s447 = scalar_lea.vmem %s3, %s446
      %p448 = scmp.lt.s32.totalorder %s23, 1
      %s449 = scalar_select %p448, %s23, 1
      %p450 = scmp.lt.s32.totalorder %s24, 0
      %s451 = scalar_select %p450, %s24, 0
      %s452 = smul.addr %s449, 12
      %s453 = sadd.s32 %s451, %s452
      %s454 = smul.addr %s453, 4
      %s455 = scalar_lea.vmem %s4, %s454
      %p456 = scmp.lt.s32.totalorder %s23, 1
      %s457 = scalar_select %p456, %s23, 1
      %p458 = scmp.lt.s32.totalorder %s24, 0
      %s459 = scalar_select %p458, %s24, 0
      %s460 = smul.addr %s457, 12
      %s461 = sadd.s32 %s459, %s460
      %s462 = smul.addr %s461, 4
      %s463 = scalar_lea.vmem %s5, %s462
      %p464 = scmp.lt.s32.totalorder %s23, 1
      %s465 = scalar_select %p464, %s23, 1
      %p466 = scmp.lt.s32.totalorder %s24, 0
      %s467 = scalar_select %p466, %s24, 0
      %s468 = smul.addr %s465, 2
      %s469 = sadd.s32 %s467, %s468
      %s470 = smul.addr %s469, 8
      %s471 = scalar_lea.vmem %s6, %s470
      %p472 = scmp.lt.s32.totalorder %s23, 1
      %s473 = scalar_select %p472, %s23, 1
      %p474 = scmp.lt.s32.totalorder %s24, 0
      %s475 = scalar_select %p474, %s24, 0
      %s476 = smul.addr %s473, 2
      %s477 = sadd.s32 %s475, %s476
      %s478 = smul.addr %s477, 8
      %s479 = scalar_lea.vmem %s7, %s478
      %v480 = vld [vmem:[%s425] sm:$0xff]
      %v481 = vld [vmem:[%s425 + $0x8] sm:$0xf]
      %v482 = vld [vmem:[%s425 + $0x10] sm:$0xff]
      %v483 = vld [vmem:[%s425 + $0x18] sm:$0xf]
      %v484 = vld [vmem:[%s433] sm:$0xff]
      %v485 = vld [vmem:[%s433 + $0x8] sm:$0xf]
      %v486 = vld [vmem:[%s433 + $0x10] sm:$0xff]
      %v487 = vld [vmem:[%s433 + $0x18] sm:$0xf]
      %v488 = vld [vmem:[%s440] sm:$0x1]
      %v489 = vld [vmem:[%s440 + $0x1] sm:$0x1]
      %v490 = vld [vmem:[%s447] sm:$0x1]
      %v491 = vld [vmem:[%s447 + $0x1] sm:$0x1]
      %v494 = vperm.slane %v488, 0
      %v495 = vperm.slane %v489, 0
      %v498 = vmul.f32 %v480, %v494
      %v499 = vmul.f32 %v481, %v494
      %v500 = vmul.f32 %v482, %v495
      %v501 = vmul.f32 %v483, %v495
      %v504 = vperm.slane %v490, 0
      %v505 = vperm.slane %v491, 0
      %v508 = vmul.f32 %v484, %v504
      %v509 = vmul.f32 %v485, %v504
      %v510 = vmul.f32 %v486, %v505
      %v511 = vmul.f32 %v487, %v505
      %v512 = vsub.f32 %v498, %v508
      %v513 = vsub.f32 %v499, %v509
      %v514 = vsub.f32 %v500, %v510
      %v515 = vsub.f32 %v501, %v511
      %v516 = vmul.f32 %v480, %v504
      %v517 = vmul.f32 %v481, %v504
      %v518 = vmul.f32 %v482, %v505
      %v519 = vmul.f32 %v483, %v505
      %v520 = vmul.f32 %v484, %v494
      %v521 = vmul.f32 %v485, %v494
      %v522 = vmul.f32 %v486, %v495
      %v523 = vmul.f32 %v487, %v495
      %v524 = vadd.f32 %v516, %v520
      %v525 = vadd.f32 %v517, %v521
      %v526 = vadd.f32 %v518, %v522
      %v527 = vadd.f32 %v519, %v523
      %v528 = vld [vmem:[%s455] sm:$0xf]
      %v529 = vld [vmem:[%s455 + $0x4] sm:$0xf]
      %v530 = vld [vmem:[%s455 + $0x8] sm:$0xf]
      %v531 = vld [vmem:[%s455 + $0xc] sm:$0xf]
      %v532 = vld [vmem:[%s455 + $0x10] sm:$0xf]
      %v533 = vld [vmem:[%s455 + $0x14] sm:$0xf]
      %v534 = vld [vmem:[%s455 + $0x18] sm:$0xf]
      %v535 = vld [vmem:[%s455 + $0x1c] sm:$0xf]
      %v536 = vld [vmem:[%s455 + $0x20] sm:$0xf]
      %v537 = vld [vmem:[%s455 + $0x24] sm:$0xf]
      %v538 = vld [vmem:[%s455 + $0x28] sm:$0xf]
      %v539 = vld [vmem:[%s455 + $0x2c] sm:$0xf]
      %v540 = vunpack.c.l.bf16 %v528
      %v541 = vunpack.c.l.bf16 %v529
      %v542 = vunpack.c.l.bf16 %v530
      %v543 = vunpack.c.l.bf16 %v531
      %v544 = vunpack.c.l.bf16 %v532
      %v545 = vunpack.c.l.bf16 %v533
      %v546 = vunpack.c.l.bf16 %v534
      %v547 = vunpack.c.l.bf16 %v535
      %v548 = vunpack.c.l.bf16 %v536
      %v549 = vunpack.c.l.bf16 %v537
      %v550 = vunpack.c.l.bf16 %v538
      %v551 = vunpack.c.l.bf16 %v539
      %v552 = vld [vmem:[%s463] sm:$0xf]
      %v553 = vld [vmem:[%s463 + $0x4] sm:$0xf]
      %v554 = vld [vmem:[%s463 + $0x8] sm:$0xf]
      %v555 = vld [vmem:[%s463 + $0xc] sm:$0xf]
      %v556 = vld [vmem:[%s463 + $0x10] sm:$0xf]
      %v557 = vld [vmem:[%s463 + $0x14] sm:$0xf]
      %v558 = vld [vmem:[%s463 + $0x18] sm:$0xf]
      %v559 = vld [vmem:[%s463 + $0x1c] sm:$0xf]
      %v560 = vld [vmem:[%s463 + $0x20] sm:$0xf]
      %v561 = vld [vmem:[%s463 + $0x24] sm:$0xf]
      %v562 = vld [vmem:[%s463 + $0x28] sm:$0xf]
      %v563 = vld [vmem:[%s463 + $0x2c] sm:$0xf]
      %v564 = vunpack.c.l.bf16 %v552
      %v565 = vunpack.c.l.bf16 %v553
      %v566 = vunpack.c.l.bf16 %v554
      %v567 = vunpack.c.l.bf16 %v555
      %v568 = vunpack.c.l.bf16 %v556
      %v569 = vunpack.c.l.bf16 %v557
      %v570 = vunpack.c.l.bf16 %v558
      %v571 = vunpack.c.l.bf16 %v559
      %v572 = vunpack.c.l.bf16 %v560
      %v573 = vunpack.c.l.bf16 %v561
      %v574 = vunpack.c.l.bf16 %v562
      %v575 = vunpack.c.l.bf16 %v563
      %v576 = vperm.slane %v512, 0
      %v577 = vperm.slane %v514, 0
      %v578 = vmul.f32 %v576, %v540
      %v579 = vmul.f32 %v577, %v540
      %v580 = vadd.f32 %v578, 0.0
      %v581 = vadd.f32 %v579, 0.0
      %v582 = vperm.slane %v524, 0
      %v583 = vperm.slane %v526, 0
      %v584 = vmul.f32 %v582, %v564
      %v585 = vmul.f32 %v583, %v564
      %v586 = vsub.f32 %v580, %v584
      %v587 = vsub.f32 %v581, %v585
      %v588 = vmul.f32 %v576, %v564
      %v589 = vmul.f32 %v577, %v564
      %v590 = vadd.f32 %v588, 0.0
      %v591 = vadd.f32 %v589, 0.0
      %v592 = vmul.f32 %v582, %v540
      %v593 = vmul.f32 %v583, %v540
      %v594 = vadd.f32 %v590, %v592
      %v595 = vadd.f32 %v591, %v593
      %v596 = vperm.slane %v512, 1
      %v597 = vperm.slane %v514, 1
      %v598 = vmul.f32 %v596, %v541
      %v599 = vmul.f32 %v597, %v541
      %v600 = vadd.f32 %v586, %v598
      %v601 = vadd.f32 %v587, %v599
      %v602 = vperm.slane %v524, 1
      %v603 = vperm.slane %v526, 1
      %v604 = vmul.f32 %v602, %v565
      %v605 = vmul.f32 %v603, %v565
      %v606 = vsub.f32 %v600, %v604
      %v607 = vsub.f32 %v601, %v605
      %v608 = vmul.f32 %v596, %v565
      %v609 = vmul.f32 %v597, %v565
      %v610 = vadd.f32 %v594, %v608
      %v611 = vadd.f32 %v595, %v609
      %v612 = vmul.f32 %v602, %v541
      %v613 = vmul.f32 %v603, %v541
      %v614 = vadd.f32 %v610, %v612
      %v615 = vadd.f32 %v611, %v613
      %v616 = vperm.slane %v512, 2
      %v617 = vperm.slane %v514, 2
      %v618 = vmul.f32 %v616, %v542
      %v619 = vmul.f32 %v617, %v542
      %v620 = vadd.f32 %v606, %v618
      %v621 = vadd.f32 %v607, %v619
      %v622 = vperm.slane %v524, 2
      %v623 = vperm.slane %v526, 2
      %v624 = vmul.f32 %v622, %v566
      %v625 = vmul.f32 %v623, %v566
      %v626 = vsub.f32 %v620, %v624
      %v627 = vsub.f32 %v621, %v625
      %v628 = vmul.f32 %v616, %v566
      %v629 = vmul.f32 %v617, %v566
      %v630 = vadd.f32 %v614, %v628
      %v631 = vadd.f32 %v615, %v629
      %v632 = vmul.f32 %v622, %v542
      %v633 = vmul.f32 %v623, %v542
      %v634 = vadd.f32 %v630, %v632
      %v635 = vadd.f32 %v631, %v633
      %v636 = vperm.slane %v512, 3
      %v637 = vperm.slane %v514, 3
      %v638 = vmul.f32 %v636, %v543
      %v639 = vmul.f32 %v637, %v543
      %v640 = vadd.f32 %v626, %v638
      %v641 = vadd.f32 %v627, %v639
      %v642 = vperm.slane %v524, 3
      %v643 = vperm.slane %v526, 3
      %v644 = vmul.f32 %v642, %v567
      %v645 = vmul.f32 %v643, %v567
      %v646 = vsub.f32 %v640, %v644
      %v647 = vsub.f32 %v641, %v645
      %v648 = vmul.f32 %v636, %v567
      %v649 = vmul.f32 %v637, %v567
      %v650 = vadd.f32 %v634, %v648
      %v651 = vadd.f32 %v635, %v649
      %v652 = vmul.f32 %v642, %v543
      %v653 = vmul.f32 %v643, %v543
      %v654 = vadd.f32 %v650, %v652
      %v655 = vadd.f32 %v651, %v653
      %v656 = vperm.slane %v512, 4
      %v657 = vperm.slane %v514, 4
      %v658 = vmul.f32 %v656, %v544
      %v659 = vmul.f32 %v657, %v544
      %v660 = vadd.f32 %v646, %v658
      %v661 = vadd.f32 %v647, %v659
      %v662 = vperm.slane %v524, 4
      %v663 = vperm.slane %v526, 4
      %v664 = vmul.f32 %v662, %v568
      %v665 = vmul.f32 %v663, %v568
      %v666 = vsub.f32 %v660, %v664
      %v667 = vsub.f32 %v661, %v665
      %v668 = vmul.f32 %v656, %v568
      %v669 = vmul.f32 %v657, %v568
      %v670 = vadd.f32 %v654, %v668
      %v671 = vadd.f32 %v655, %v669
      %v672 = vmul.f32 %v662, %v544
      %v673 = vmul.f32 %v663, %v544
      %v674 = vadd.f32 %v670, %v672
      %v675 = vadd.f32 %v671, %v673
      %v676 = vperm.slane %v512, 5
      %v677 = vperm.slane %v514, 5
      %v678 = vmul.f32 %v676, %v545
      %v679 = vmul.f32 %v677, %v545
      %v680 = vadd.f32 %v666, %v678
      %v681 = vadd.f32 %v667, %v679
      %v682 = vperm.slane %v524, 5
      %v683 = vperm.slane %v526, 5
      %v684 = vmul.f32 %v682, %v569
      %v685 = vmul.f32 %v683, %v569
      %v686 = vsub.f32 %v680, %v684
      %v687 = vsub.f32 %v681, %v685
      %v688 = vmul.f32 %v676, %v569
      %v689 = vmul.f32 %v677, %v569
      %v690 = vadd.f32 %v674, %v688
      %v691 = vadd.f32 %v675, %v689
      %v692 = vmul.f32 %v682, %v545
      %v693 = vmul.f32 %v683, %v545
      %v694 = vadd.f32 %v690, %v692
      %v695 = vadd.f32 %v691, %v693
      %v696 = vperm.slane %v512, 6
      %v697 = vperm.slane %v514, 6
      %v698 = vmul.f32 %v696, %v546
      %v699 = vmul.f32 %v697, %v546
      %v700 = vadd.f32 %v686, %v698
      %v701 = vadd.f32 %v687, %v699
      %v702 = vperm.slane %v524, 6
      %v703 = vperm.slane %v526, 6
      %v704 = vmul.f32 %v702, %v570
      %v705 = vmul.f32 %v703, %v570
      %v706 = vsub.f32 %v700, %v704
      %v707 = vsub.f32 %v701, %v705
      %v708 = vmul.f32 %v696, %v570
      %v709 = vmul.f32 %v697, %v570
      %v710 = vadd.f32 %v694, %v708
      %v711 = vadd.f32 %v695, %v709
      %v712 = vmul.f32 %v702, %v546
      %v713 = vmul.f32 %v703, %v546
      %v714 = vadd.f32 %v710, %v712
      %v715 = vadd.f32 %v711, %v713
      %v716 = vperm.slane %v512, 7
      %v717 = vperm.slane %v514, 7
      %v718 = vmul.f32 %v716, %v547
      %v719 = vmul.f32 %v717, %v547
      %v720 = vadd.f32 %v706, %v718
      %v721 = vadd.f32 %v707, %v719
      %v722 = vperm.slane %v524, 7
      %v723 = vperm.slane %v526, 7
      %v724 = vmul.f32 %v722, %v571
      %v725 = vmul.f32 %v723, %v571
      %v726 = vsub.f32 %v720, %v724
      %v727 = vsub.f32 %v721, %v725
      %v728 = vmul.f32 %v716, %v571
      %v729 = vmul.f32 %v717, %v571
      %v730 = vadd.f32 %v714, %v728
      %v731 = vadd.f32 %v715, %v729
      %v732 = vmul.f32 %v722, %v547
      %v733 = vmul.f32 %v723, %v547
      %v734 = vadd.f32 %v730, %v732
      %v735 = vadd.f32 %v731, %v733
      %v736 = vperm.slane %v513, 0
      %v737 = vperm.slane %v515, 0
      %v738 = vmul.f32 %v736, %v548
      %v739 = vmul.f32 %v737, %v548
      %v740 = vadd.f32 %v726, %v738
      %v741 = vadd.f32 %v727, %v739
      %v742 = vperm.slane %v525, 0
      %v743 = vperm.slane %v527, 0
      %v744 = vmul.f32 %v742, %v572
      %v745 = vmul.f32 %v743, %v572
      %v746 = vsub.f32 %v740, %v744
      %v747 = vsub.f32 %v741, %v745
      %v748 = vmul.f32 %v736, %v572
      %v749 = vmul.f32 %v737, %v572
      %v750 = vadd.f32 %v734, %v748
      %v751 = vadd.f32 %v735, %v749
      %v752 = vmul.f32 %v742, %v548
      %v753 = vmul.f32 %v743, %v548
      %v754 = vadd.f32 %v750, %v752
      %v755 = vadd.f32 %v751, %v753
      %v756 = vperm.slane %v513, 1
      %v757 = vperm.slane %v515, 1
      %v758 = vmul.f32 %v756, %v549
      %v759 = vmul.f32 %v757, %v549
      %v760 = vadd.f32 %v746, %v758
      %v761 = vadd.f32 %v747, %v759
      %v762 = vperm.slane %v525, 1
      %v763 = vperm.slane %v527, 1
      %v764 = vmul.f32 %v762, %v573
      %v765 = vmul.f32 %v763, %v573
      %v766 = vsub.f32 %v760, %v764
      %v767 = vsub.f32 %v761, %v765
      %v768 = vmul.f32 %v756, %v573
      %v769 = vmul.f32 %v757, %v573
      %v770 = vadd.f32 %v754, %v768
      %v771 = vadd.f32 %v755, %v769
      %v772 = vmul.f32 %v762, %v549
      %v773 = vmul.f32 %v763, %v549
      %v774 = vadd.f32 %v770, %v772
      %v775 = vadd.f32 %v771, %v773
      %v776 = vperm.slane %v513, 2
      %v777 = vperm.slane %v515, 2
      %v778 = vmul.f32 %v776, %v550
      %v779 = vmul.f32 %v777, %v550
      %v780 = vadd.f32 %v766, %v778
      %v781 = vadd.f32 %v767, %v779
      %v782 = vperm.slane %v525, 2
      %v783 = vperm.slane %v527, 2
      %v784 = vmul.f32 %v782, %v574
      %v785 = vmul.f32 %v783, %v574
      %v786 = vsub.f32 %v780, %v784
      %v787 = vsub.f32 %v781, %v785
      %v788 = vmul.f32 %v776, %v574
      %v789 = vmul.f32 %v777, %v574
      %v790 = vadd.f32 %v774, %v788
      %v791 = vadd.f32 %v775, %v789
      %v792 = vmul.f32 %v782, %v550
      %v793 = vmul.f32 %v783, %v550
      %v794 = vadd.f32 %v790, %v792
      %v795 = vadd.f32 %v791, %v793
      %v796 = vperm.slane %v513, 3
      %v797 = vperm.slane %v515, 3
      %v798 = vmul.f32 %v796, %v551
      %v799 = vmul.f32 %v797, %v551
      %v800 = vadd.f32 %v786, %v798
      %v801 = vadd.f32 %v787, %v799
      %v802 = vperm.slane %v525, 3
      %v803 = vperm.slane %v527, 3
      %v804 = vmul.f32 %v802, %v575
      %v805 = vmul.f32 %v803, %v575
      %v806 = vsub.f32 %v800, %v804
      %v807 = vsub.f32 %v801, %v805
      %v808 = vmul.f32 %v796, %v575
      %v809 = vmul.f32 %v797, %v575
      %v810 = vadd.f32 %v794, %v808
      %v811 = vadd.f32 %v795, %v809
      %v812 = vmul.f32 %v802, %v551
      %v813 = vmul.f32 %v803, %v551
      %v814 = vadd.f32 %v810, %v812
      %v815 = vadd.f32 %v811, %v813
      %vm816 = vcmask 130048
      %817 = vst.msk [vmem:[%s471] sm:$0xff] %vm816, %v806
      %818 = vst.msk [vmem:[%s471 + $0x8] sm:$0xff] %vm816, %v807
      %819 = vst.msk [vmem:[%s479] sm:$0xff] %vm816, %v814
      %820 = vst.msk [vmem:[%s479 + $0x8] sm:$0xff] %vm816, %v815
      %p821 = scmp.lt.s32.totalorder %s23, 1
      %s822 = scalar_select %p821, %s23, 1
      %p823 = scmp.lt.s32.totalorder %s24, 0
      %s824 = scalar_select %p823, %s24, 0
      %s825 = smul.addr %s822, 2
      %s826 = sadd.s32 %s824, %s825
      %s827 = smul.addr %s826, 8
      %s828 = scalar_lea.vmem %s6, %s827
      %p829 = scmp.lt.s32.totalorder %s23, 1
      %s830 = scalar_select %p829, %s23, 1
      %p831 = scmp.lt.s32.totalorder %s24, 0
      %s832 = scalar_select %p831, %s24, 0
      %s833 = smul.addr %s830, 2
      %s834 = sadd.s32 %s832, %s833
      %s835 = smul.addr %s834, 8
      %s836 = scalar_lea.vmem %s7, %s835
      // Predicated region
      $region45: #{fourier_up_block_forward.5} parent=43 // pred_check
        %p837 = pneg %p219
      $region46: #{fourier_up_block_forward.5} parent=43 // pred_check_branch
        %839 = sbr.rel (%p837) target = $region48
      $region47: #{fourier_up_block_forward.5} parent=43 // pred_region
        _
      $region48: #{fourier_up_block_forward.5} parent=43 // pred_fallthru
        _
      // Predicated region
      $region49: #{fourier_up_block_forward.5} parent=43 // pred_check
        %p840 = pneg %p247
      $region50: #{fourier_up_block_forward.5} parent=43 // pred_check_branch
        %842 = sbr.rel (%p840) target = $region52
      $region51: #{fourier_up_block_forward.5} parent=43 // pred_region
        _
      $region52: #{fourier_up_block_forward.5} parent=43 // pred_fallthru
        _
    $region44: #{fourier_up_block_forward.5} parent=5 // pred_fallthru
      _
    %p843 = scmp.le.s32.totalorder 2, %s14
    // Predicated region
    $region53: #{fourier_up_block_forward.5} parent=5 // pred_check
      %p844 = pneg %p843
    $region54: #{fourier_up_block_forward.5} parent=5 // pred_check_branch
      %846 = sbr.rel (%p844) target = $region56
    $region55: #{fourier_up_block_forward.5} parent=5 // pred_region
      %s847 = ssub.s32 %s14, 2
      // Predicated region
      $region57: #{fourier_up_block_forward.5} parent=55 // pred_check
        %p848 = pneg %p225
      $region58: #{fourier_up_block_forward.5} parent=55 // pred_check_branch
        %850 = sbr.rel (%p848) target = $region60
      $region59: #{fourier_up_block_forward.5} parent=55 // pred_region
        %p851 = scmp.lt.s32.totalorder %s25, 1
        %s852 = scalar_select %p851, %s25, 1
        %p853 = scmp.lt.s32.totalorder %s26, 0
        %s854 = scalar_select %p853, %s26, 0
        %s855 = smul.addr %s852, 2
        %s856 = sadd.s32 %s854, %s855
        %s857 = smul.addr %s856, 8
        %s858 = scalar_lea.vmem %s6, %s857
      $region60: #{fourier_up_block_forward.5} parent=55 // pred_fallthru
        _
      // Predicated region
      $region61: #{fourier_up_block_forward.5} parent=55 // pred_check
        %p859 = pneg %p253
      $region62: #{fourier_up_block_forward.5} parent=55 // pred_check_branch
        %861 = sbr.rel (%p859) target = $region64
      $region63: #{fourier_up_block_forward.5} parent=55 // pred_region
        %p862 = scmp.lt.s32.totalorder %s25, 1
        %s863 = scalar_select %p862, %s25, 1
        %p864 = scmp.lt.s32.totalorder %s26, 0
        %s865 = scalar_select %p864, %s26, 0
        %s866 = smul.addr %s863, 2
        %s867 = sadd.s32 %s865, %s866
        %s868 = smul.addr %s867, 8
        %s869 = scalar_lea.vmem %s7, %s868
      $region64: #{fourier_up_block_forward.5} parent=55 // pred_fallthru
        _
    $region56: #{fourier_up_block_forward.5} parent=5 // pred_fallthru
      _
  $region6: #{fourier_up_block_forward.5} parent=0 // loop_footer
    %s18 = sadd.s32 1, %s14
  $region7: #{fourier_up_block_forward.5} parent=0 // loop_footer_branch
    %13 = sbr.rel target = $region3
  $region8: #{fourier_up_block_forward.5} parent=0 // loop_exit
    _

// kernel: reverse.5
$region0: #{reverse.5}
  %s0 = inlined_call_operand.vmem [shape: f32[2,8,16,7], index: 0, kind: input, shape index: {}]
  %s1 = inlined_call_operand.vmem [shape: f32[2,8,16,7], index: 1, kind: output, shape index: {}]
  $region1: #{reverse.5} parent=0
    #allocation0 [shape = 'u8[131072]{0}', space=vmem, size = 0x20000, scoped, tag = 'operand span for operand 0']
    #allocation1 [shape = 'u8[65536]{0}', space=vmem, size = 0x10000, scoped, tag = 'operand span for operand 1']
    %s2 = scalar_lea.vmem [#allocation0], 8
    // Predicated region
    $region2: #{reverse.5} parent=1 // pred_check
      _
    $region3: #{reverse.5} parent=1 // pred_check_branch
      %4 = sbr.rel (0) target = $region5
    $region4: #{reverse.5} parent=1 // pred_region
      // Predicated region
      $region6: #{reverse.5} parent=4 // pred_check
        _
      $region7: #{reverse.5} parent=4 // pred_check_branch
        %6 = sbr.rel (0) target = $region9
      $region8: #{reverse.5} parent=4 // pred_region
        // Predicated region
        $region21: #{reverse.5} parent=8 // pred_check
          _
        $region22: #{reverse.5} parent=8 // pred_check_branch
          %52 = sbr.rel (0) target = $region24
        $region23: #{reverse.5} parent=8 // pred_region
          loop: start=0, step=1, limit=1
          $region25: #{reverse.5} parent=23 // loop_pre_header
            _
          $region26: #{reverse.5} parent=23 // loop_header
            %s54 = sphi 0, %s58
            %p55 = scmp.ge.s32.totalorder %s54, 1
            %s59 = sphi %s0, %s0
            %s60 = sphi %s2, %s2
          $region27: #{reverse.5} parent=23 // loop_header_branch
            %57 = sbr.rel (%p55) target = $region31
          $region28: #{reverse.5} parent=23 // loop_body
            %v61 = vld [vmem:[%s59] sm:$0xff]
            %62 = vst [vmem:[%s60] sm:$0xff] %v61
            %v63 = vld [vmem:[%s59 + $0x8] sm:$0xff]
            %64 = vst [vmem:[%s60 + $0x10] sm:$0xff] %v63
            %v65 = vld [vmem:[%s59 + $0x10] sm:$0xff]
            %66 = vst [vmem:[%s60 + $0x20] sm:$0xff] %v65
            %v67 = vld [vmem:[%s59 + $0x18] sm:$0xff]
            %68 = vst [vmem:[%s60 + $0x30] sm:$0xff] %v67
            %v69 = vld [vmem:[%s59 + $0x20] sm:$0xff]
            %70 = vst [vmem:[%s60 + $0x40] sm:$0xff] %v69
            %v71 = vld [vmem:[%s59 + $0x28] sm:$0xff]
            %72 = vst [vmem:[%s60 + $0x50] sm:$0xff] %v71
            %v73 = vld [vmem:[%s59 + $0x30] sm:$0xff]
            %74 = vst [vmem:[%s60 + $0x60] sm:$0xff] %v73
            %v75 = vld [vmem:[%s59 + $0x38] sm:$0xff]
            %76 = vst [vmem:[%s60 + $0x70] sm:$0xff] %v75
            %v77 = vld [vmem:[%s59 + $0x40] sm:$0xff]
            %78 = vst [vmem:[%s60 + $0x80] sm:$0xff] %v77
            %v79 = vld [vmem:[%s59 + $0x48] sm:$0xff]
            %80 = vst [vmem:[%s60 + $0x90] sm:$0xff] %v79
            %v81 = vld [vmem:[%s59 + $0x50] sm:$0xff]
            %82 = vst [vmem:[%s60 + $0xa0] sm:$0xff] %v81
            %v83 = vld [vmem:[%s59 + $0x58] sm:$0xff]
            %84 = vst [vmem:[%s60 + $0xb0] sm:$0xff] %v83
            %v85 = vld [vmem:[%s59 + $0x60] sm:$0xff]
            %86 = vst [vmem:[%s60 + $0xc0] sm:$0xff] %v85
            %v87 = vld [vmem:[%s59 + $0x68] sm:$0xff]
            %88 = vst [vmem:[%s60 + $0xd0] sm:$0xff] %v87
            %v89 = vld [vmem:[%s59 + $0x70] sm:$0xff]
            %90 = vst [vmem:[%s60 + $0xe0] sm:$0xff] %v89
            %v91 = vld [vmem:[%s59 + $0x78] sm:$0xff]
            %92 = vst [vmem:[%s60 + $0xf0] sm:$0xff] %v91
          $region29: #{reverse.5} parent=23 // loop_footer
            %s58 = sadd.s32 1, %s54
          $region30: #{reverse.5} parent=23 // loop_footer_branch
            %53 = sbr.rel target = $region26
          $region31: #{reverse.5} parent=23 // loop_exit
            _
        $region24: #{reverse.5} parent=8 // pred_fallthru
          _
        // Predicated region
        $region32: #{reverse.5} parent=8 // pred_check
          _
        $region33: #{reverse.5} parent=8 // pred_check_branch
          %94 = sbr.rel target = $region35
        $region34: #{reverse.5} parent=8 // pred_region
          _
        $region35: #{reverse.5} parent=8 // pred_fallthru
          _
      $region9: #{reverse.5} parent=4 // pred_fallthru
        _
      // Predicated region
      $region10: #{reverse.5} parent=4 // pred_check
        _
      $region11: #{reverse.5} parent=4 // pred_check_branch
        %8 = sbr.rel target = $region13
      $region12: #{reverse.5} parent=4 // pred_region
        %s10 = ssub.s32 256, 1
        loop: start=0, step=1, limit=1
        $region14: #{reverse.5} parent=12 // loop_pre_header
          _
        $region15: #{reverse.5} parent=12 // loop_header
          %s12 = sphi 0, %s16
          %p13 = scmp.ge.s32.totalorder %s12, 1
          %s17 = sphi %s0, %s0
          %s18 = sphi %s2, %s2
        $region16: #{reverse.5} parent=12 // loop_header_branch
          %15 = sbr.rel (%p13) target = $region20
        $region17: #{reverse.5} parent=12 // loop_body
          %v19 = vld [vmem:[%s17] sm:%s10]
          %20 = vst [vmem:[%s18] sm:%s10] %v19
          %v21 = vld [vmem:[%s17 + $0x8] sm:%s10]
          %22 = vst [vmem:[%s18 + $0x10] sm:%s10] %v21
          %v23 = vld [vmem:[%s17 + $0x10] sm:%s10]
          %24 = vst [vmem:[%s18 + $0x20] sm:%s10] %v23
          %v25 = vld [vmem:[%s17 + $0x18] sm:%s10]
          %26 = vst [vmem:[%s18 + $0x30] sm:%s10] %v25
          %v27 = vld [vmem:[%s17 + $0x20] sm:%s10]
          %28 = vst [vmem:[%s18 + $0x40] sm:%s10] %v27
          %v29 = vld [vmem:[%s17 + $0x28] sm:%s10]
          %30 = vst [vmem:[%s18 + $0x50] sm:%s10] %v29
          %v31 = vld [vmem:[%s17 + $0x30] sm:%s10]
          %32 = vst [vmem:[%s18 + $0x60] sm:%s10] %v31
          %v33 = vld [vmem:[%s17 + $0x38] sm:%s10]
          %34 = vst [vmem:[%s18 + $0x70] sm:%s10] %v33
          %v35 = vld [vmem:[%s17 + $0x40] sm:%s10]
          %36 = vst [vmem:[%s18 + $0x80] sm:%s10] %v35
          %v37 = vld [vmem:[%s17 + $0x48] sm:%s10]
          %38 = vst [vmem:[%s18 + $0x90] sm:%s10] %v37
          %v39 = vld [vmem:[%s17 + $0x50] sm:%s10]
          %40 = vst [vmem:[%s18 + $0xa0] sm:%s10] %v39
          %v41 = vld [vmem:[%s17 + $0x58] sm:%s10]
          %42 = vst [vmem:[%s18 + $0xb0] sm:%s10] %v41
          %v43 = vld [vmem:[%s17 + $0x60] sm:%s10]
          %44 = vst [vmem:[%s18 + $0xc0] sm:%s10] %v43
          %v45 = vld [vmem:[%s17 + $0x68] sm:%s10]
          %46 = vst [vmem:[%s18 + $0xd0] sm:%s10] %v45
          %v47 = vld [vmem:[%s17 + $0x70] sm:%s10]
          %48 = vst [vmem:[%s18 + $0xe0] sm:%s10] %v47
          %v49 = vld [vmem:[%s17 + $0x78] sm:%s10]
          %50 = vst [vmem:[%s18 + $0xf0] sm:%s10] %v49
        $region18: #{reverse.5} parent=12 // loop_footer
          %s16 = sadd.s32 1, %s12
        $region19: #{reverse.5} parent=12 // loop_footer_branch
          %11 = sbr.rel target = $region15
        $region20: #{reverse.5} parent=12 // loop_exit
          _
      $region13: #{reverse.5} parent=4 // pred_fallthru
        _
    $region5: #{reverse.5} parent=1 // pred_fallthru
      _
    %95 = vnop
    %s96 = scalar_lea.vmem [#allocation0], 7
    %v97 = vld [vmem:[%s96] ss:$-1 sm:$0xff]
    %v98 = vrot.slane %v97, 1
    %99 = vst [vmem:[#allocation1] sm:$0xff] %v98
    %s100 = scalar_lea.vmem [#allocation0], 8
    %s101 = scalar_lea.vmem %s100, 7 [#allocation0]
    %v102 = vld [vmem:[%s101] ss:$-1 sm:$0xff]
    %v103 = vrot.slane %v102, 1
    %v104 = vlaneseq
    %v105 = vshrl.u32 %v104, 7
    %vm106 = vcmp.lt.s32.totalorder %v105, 7
    %107 = vst.msk [vmem:[#allocation1] sm:$0xff] %vm106, %v103
    %s108 = scalar_lea.vmem [#allocation1], 8
    %s109 = scalar_lea.vmem [#allocation0], 16
    %s110 = scalar_lea.vmem %s109, 7 [#allocation0]
    %v111 = vld [vmem:[%s110] ss:$-1 sm:$0xff]
    %v112 = vrot.slane %v111, 1
    %113 = vst [vmem:[%s108] sm:$0xff] %v112
    %s114 = scalar_lea.vmem %s109, 8 [#allocation0]
    %s115 = scalar_lea.vmem %s114, 7 [#allocation0]
    %v116 = vld [vmem:[%s115] ss:$-1 sm:$0xff]
    %v117 = vrot.slane %v116, 1
    %v118 = vlaneseq
    %v119 = vshrl.u32 %v118, 7
    %vm120 = vcmp.lt.s32.totalorder %v119, 7
    %121 = vst.msk [vmem:[%s108] sm:$0xff] %vm120, %v117
    %s122 = scalar_lea.vmem [#allocation1], 16
    %s123 = scalar_lea.vmem [#allocation0], 32
    %s124 = scalar_lea.vmem %s123, 7 [#allocation0]
    %v125 = vld [vmem:[%s124] ss:$-1 sm:$0xff]
    %v126 = vrot.slane %v125, 1
    %127 = vst [vmem:[%s122] sm:$0xff] %v126
    %s128 = scalar_lea.vmem %s123, 8 [#allocation0]
    %s129 = scalar_lea.vmem %s128, 7 [#allocation0]
    %v130 = vld [vmem:[%s129] ss:$-1 sm:$0xff]
    %v131 = vrot.slane %v130, 1
    %v132 = vlaneseq
    %v133 = vshrl.u32 %v132, 7
    %vm134 = vcmp.lt.s32.totalorder %v133, 7
    %135 = vst.msk [vmem:[%s122] sm:$0xff] %vm134, %v131
    %s136 = scalar_lea.vmem [#allocation1], 24
    %s137 = scalar_lea.vmem [#allocation0], 48
    %s138 = scalar_lea.vmem %s137, 7 [#allocation0]
    %v139 = vld [vmem:[%s138] ss:$-1 sm:$0xff]
    %v140 = vrot.slane %v139, 1
    %141 = vst [vmem:[%s136] sm:$0xff] %v140
    %s142 = scalar_lea.vmem %s137, 8 [#allocation0]
    %s143 = scalar_lea.vmem %s142, 7 [#allocation0]
    %v144 = vld [vmem:[%s143] ss:$-1 sm:$0xff]
    %v145 = vrot.slane %v144, 1
    %v146 = vlaneseq
    %v147 = vshrl.u32 %v146, 7
    %vm148 = vcmp.lt.s32.totalorder %v147, 7
    %149 = vst.msk [vmem:[%s136] sm:$0xff] %vm148, %v145
    %s150 = scalar_lea.vmem [#allocation1], 32
    %s151 = scalar_lea.vmem [#allocation0], 64
    %s152 = scalar_lea.vmem %s151, 7 [#allocation0]
    %v153 = vld [vmem:[%s152] ss:$-1 sm:$0xff]
    %v154 = vrot.slane %v153, 1
    %155 = vst [vmem:[%s150] sm:$0xff] %v154
    %s156 = scalar_lea.vmem %s151, 8 [#allocation0]
    %s157 = scalar_lea.vmem %s156, 7 [#allocation0]
    %v158 = vld [vmem:[%s157] ss:$-1 sm:$0xff]
    %v159 = vrot.slane %v158, 1
    %v160 = vlaneseq
    %v161 = vshrl.u32 %v160, 7
    %vm162 = vcmp.lt.s32.totalorder %v161, 7
    %163 = vst.msk [vmem:[%s150] sm:$0xff] %vm162, %v159
    %s164 = scalar_lea.vmem [#allocation1], 40
    %s165 = scalar_lea.vmem [#allocation0], 80
    %s166 = scalar_lea.vmem %s165, 7 [#allocation0]
    %v167 = vld [vmem:[%s166] ss:$-1 sm:$0xff]
    %v168 = vrot.slane %v167, 1
    %169 = vst [vmem:[%s164] sm:$0xff] %v168
    %s170 = scalar_lea.vmem %s165, 8 [#allocation0]
    %s171 = scalar_lea.vmem %s170, 7 [#allocation0]
    %v172 = vld [vmem:[%s171] ss:$-1 sm:$0xff]
    %v173 = vrot.slane %v172, 1
    %v174 = vlaneseq
    %v175 = vshrl.u32 %v174, 7
    %vm176 = vcmp.lt.s32.totalorder %v175, 7
    %177 = vst.msk [vmem:[%s164] sm:$0xff] %vm176, %v173
    %s178 = scalar_lea.vmem [#allocation1], 48
    %s179 = scalar_lea.vmem [#allocation0], 96
    %s180 = scalar_lea.vmem %s179, 7 [#allocation0]
    %v181 = vld [vmem:[%s180] ss:$-1 sm:$0xff]
    %v182 = vrot.slane %v181, 1
    %183 = vst [vmem:[%s178] sm:$0xff] %v182
    %s184 = scalar_lea.vmem %s179, 8 [#allocation0]
    %s185 = scalar_lea.vmem %s184, 7 [#allocation0]
    %v186 = vld [vmem:[%s185] ss:$-1 sm:$0xff]
    %v187 = vrot.slane %v186, 1
    %v188 = vlaneseq
    %v189 = vshrl.u32 %v188, 7
    %vm190 = vcmp.lt.s32.totalorder %v189, 7
    %191 = vst.msk [vmem:[%s178] sm:$0xff] %vm190, %v187
    %s192 = scalar_lea.vmem [#allocation1], 56
    %s193 = scalar_lea.vmem [#allocation0], 112
    %s194 = scalar_lea.vmem %s193, 7 [#allocation0]
    %v195 = vld [vmem:[%s194] ss:$-1 sm:$0xff]
    %v196 = vrot.slane %v195, 1
    %197 = vst [vmem:[%s192] sm:$0xff] %v196
    %s198 = scalar_lea.vmem %s193, 8 [#allocation0]
    %s199 = scalar_lea.vmem %s198, 7 [#allocation0]
    %v200 = vld [vmem:[%s199] ss:$-1 sm:$0xff]
    %v201 = vrot.slane %v200, 1
    %v202 = vlaneseq
    %v203 = vshrl.u32 %v202, 7
    %vm204 = vcmp.lt.s32.totalorder %v203, 7
    %205 = vst.msk [vmem:[%s192] sm:$0xff] %vm204, %v201
    %s206 = scalar_lea.vmem [#allocation1], 64
    %s207 = scalar_lea.vmem [#allocation0], 128
    %s208 = scalar_lea.vmem %s207, 7 [#allocation0]
    %v209 = vld [vmem:[%s208] ss:$-1 sm:$0xff]
    %v210 = vrot.slane %v209, 1
    %211 = vst [vmem:[%s206] sm:$0xff] %v210
    %s212 = scalar_lea.vmem %s207, 8 [#allocation0]
    %s213 = scalar_lea.vmem %s212, 7 [#allocation0]
    %v214 = vld [vmem:[%s213] ss:$-1 sm:$0xff]
    %v215 = vrot.slane %v214, 1
    %v216 = vlaneseq
    %v217 = vshrl.u32 %v216, 7
    %vm218 = vcmp.lt.s32.totalorder %v217, 7
    %219 = vst.msk [vmem:[%s206] sm:$0xff] %vm218, %v215
    %s220 = scalar_lea.vmem [#allocation1], 72
    %s221 = scalar_lea.vmem [#allocation0], 144
    %s222 = scalar_lea.vmem %s221, 7 [#allocation0]
    %v223 = vld [vmem:[%s222] ss:$-1 sm:$0xff]
    %v224 = vrot.slane %v223, 1
    %225 = vst [vmem:[%s220] sm:$0xff] %v224
    %s226 = scalar_lea.vmem %s221, 8 [#allocation0]
    %s227 = scalar_lea.vmem %s226, 7 [#allocation0]
    %v228 = vld [vmem:[%s227] ss:$-1 sm:$0xff]
    %v229 = vrot.slane %v228, 1
    %v230 = vlaneseq
    %v231 = vshrl.u32 %v230, 7
    %vm232 = vcmp.lt.s32.totalorder %v231, 7
    %233 = vst.msk [vmem:[%s220] sm:$0xff] %vm232, %v229
    %s234 = scalar_lea.vmem [#allocation1], 80
    %s235 = scalar_lea.vmem [#allocation0], 160
    %s236 = scalar_lea.vmem %s235, 7 [#allocation0]
    %v237 = vld [vmem:[%s236] ss:$-1 sm:$0xff]
    %v238 = vrot.slane %v237, 1
    %239 = vst [vmem:[%s234] sm:$0xff] %v238
    %s240 = scalar_lea.vmem %s235, 8 [#allocation0]
    %s241 = scalar_lea.vmem %s240, 7 [#allocation0]
    %v242 = vld [vmem:[%s241] ss:$-1 sm:$0xff]
    %v243 = vrot.slane %v242, 1
    %v244 = vlaneseq
    %v245 = vshrl.u32 %v244, 7
    %vm246 = vcmp.lt.s32.totalorder %v245, 7
    %247 = vst.msk [vmem:[%s234] sm:$0xff] %vm246, %v243
    %s248 = scalar_lea.vmem [#allocation1], 88
    %s249 = scalar_lea.vmem [#allocation0], 176
    %s250 = scalar_lea.vmem %s249, 7 [#allocation0]
    %v251 = vld [vmem:[%s250] ss:$-1 sm:$0xff]
    %v252 = vrot.slane %v251, 1
    %253 = vst [vmem:[%s248] sm:$0xff] %v252
    %s254 = scalar_lea.vmem %s249, 8 [#allocation0]
    %s255 = scalar_lea.vmem %s254, 7 [#allocation0]
    %v256 = vld [vmem:[%s255] ss:$-1 sm:$0xff]
    %v257 = vrot.slane %v256, 1
    %v258 = vlaneseq
    %v259 = vshrl.u32 %v258, 7
    %vm260 = vcmp.lt.s32.totalorder %v259, 7
    %261 = vst.msk [vmem:[%s248] sm:$0xff] %vm260, %v257
    %s262 = scalar_lea.vmem [#allocation1], 96
    %s263 = scalar_lea.vmem [#allocation0], 192
    %s264 = scalar_lea.vmem %s263, 7 [#allocation0]
    %v265 = vld [vmem:[%s264] ss:$-1 sm:$0xff]
    %v266 = vrot.slane %v265, 1
    %267 = vst [vmem:[%s262] sm:$0xff] %v266
    %s268 = scalar_lea.vmem %s263, 8 [#allocation0]
    %s269 = scalar_lea.vmem %s268, 7 [#allocation0]
    %v270 = vld [vmem:[%s269] ss:$-1 sm:$0xff]
    %v271 = vrot.slane %v270, 1
    %v272 = vlaneseq
    %v273 = vshrl.u32 %v272, 7
    %vm274 = vcmp.lt.s32.totalorder %v273, 7
    %275 = vst.msk [vmem:[%s262] sm:$0xff] %vm274, %v271
    %s276 = scalar_lea.vmem [#allocation1], 104
    %s277 = scalar_lea.vmem [#allocation0], 208
    %s278 = scalar_lea.vmem %s277, 7 [#allocation0]
    %v279 = vld [vmem:[%s278] ss:$-1 sm:$0xff]
    %v280 = vrot.slane %v279, 1
    %281 = vst [vmem:[%s276] sm:$0xff] %v280
    %s282 = scalar_lea.vmem %s277, 8 [#allocation0]
    %s283 = scalar_lea.vmem %s282, 7 [#allocation0]
    %v284 = vld [vmem:[%s283] ss:$-1 sm:$0xff]
    %v285 = vrot.slane %v284, 1
    %v286 = vlaneseq
    %v287 = vshrl.u32 %v286, 7
    %vm288 = vcmp.lt.s32.totalorder %v287, 7
    %289 = vst.msk [vmem:[%s276] sm:$0xff] %vm288, %v285
    %s290 = scalar_lea.vmem [#allocation1], 112
    %s291 = scalar_lea.vmem [#allocation0], 224
    %s292 = scalar_lea.vmem %s291, 7 [#allocation0]
    %v293 = vld [vmem:[%s292] ss:$-1 sm:$0xff]
    %v294 = vrot.slane %v293, 1
    %295 = vst [vmem:[%s290] sm:$0xff] %v294
    %s296 = scalar_lea.vmem %s291, 8 [#allocation0]
    %s297 = scalar_lea.vmem %s296, 7 [#allocation0]
    %v298 = vld [vmem:[%s297] ss:$-1 sm:$0xff]
    %v299 = vrot.slane %v298, 1
    %v300 = vlaneseq
    %v301 = vshrl.u32 %v300, 7
    %vm302 = vcmp.lt.s32.totalorder %v301, 7
    %303 = vst.msk [vmem:[%s290] sm:$0xff] %vm302, %v299
    %s304 = scalar_lea.vmem [#allocation1], 120
    %s305 = scalar_lea.vmem [#allocation0], 240
    %s306 = scalar_lea.vmem %s305, 7 [#allocation0]
    %v307 = vld [vmem:[%s306] ss:$-1 sm:$0xff]
    %v308 = vrot.slane %v307, 1
    %309 = vst [vmem:[%s304] sm:$0xff] %v308
    %s310 = scalar_lea.vmem %s305, 8 [#allocation0]
    %s311 = scalar_lea.vmem %s310, 7 [#allocation0]
    %v312 = vld [vmem:[%s311] ss:$-1 sm:$0xff]
    %v313 = vrot.slane %v312, 1
    %v314 = vlaneseq
    %v315 = vshrl.u32 %v314, 7
    %vm316 = vcmp.lt.s32.totalorder %v315, 7
    %317 = vst.msk [vmem:[%s304] sm:$0xff] %vm316, %v313
    // Predicated region
    $region36: #{reverse.5} parent=1 // pred_check
      _
    $region37: #{reverse.5} parent=1 // pred_check_branch
      %319 = sbr.rel (0) target = $region39
    $region38: #{reverse.5} parent=1 // pred_region
      // Predicated region
      $region40: #{reverse.5} parent=38 // pred_check
        _
      $region41: #{reverse.5} parent=38 // pred_check_branch
        %321 = sbr.rel (0) target = $region43
      $region42: #{reverse.5} parent=38 // pred_region
        // Predicated region
        $region55: #{reverse.5} parent=42 // pred_check
          _
        $region56: #{reverse.5} parent=42 // pred_check_branch
          %367 = sbr.rel (0) target = $region58
        $region57: #{reverse.5} parent=42 // pred_region
          loop: start=0, step=1, limit=1
          $region59: #{reverse.5} parent=57 // loop_pre_header
            _
          $region60: #{reverse.5} parent=57 // loop_header
            %s369 = sphi 0, %s373
            %p370 = scmp.ge.s32.totalorder %s369, 1
            %s374 = sphi [#allocation1], [#allocation1]
            %s375 = sphi %s1, %s1
          $region61: #{reverse.5} parent=57 // loop_header_branch
            %372 = sbr.rel (%p370) target = $region65
          $region62: #{reverse.5} parent=57 // loop_body
            %v376 = vld [vmem:[%s374] sm:$0xff]
            %377 = vst [vmem:[%s375] sm:$0xff] %v376
            %v378 = vld [vmem:[%s374 + $0x8] sm:$0xff]
            %379 = vst [vmem:[%s375 + $0x8] sm:$0xff] %v378
            %v380 = vld [vmem:[%s374 + $0x10] sm:$0xff]
            %381 = vst [vmem:[%s375 + $0x10] sm:$0xff] %v380
            %v382 = vld [vmem:[%s374 + $0x18] sm:$0xff]
            %383 = vst [vmem:[%s375 + $0x18] sm:$0xff] %v382
            %v384 = vld [vmem:[%s374 + $0x20] sm:$0xff]
            %385 = vst [vmem:[%s375 + $0x20] sm:$0xff] %v384
            %v386 = vld [vmem:[%s374 + $0x28] sm:$0xff]
            %387 = vst [vmem:[%s375 + $0x28] sm:$0xff] %v386
            %v388 = vld [vmem:[%s374 + $0x30] sm:$0xff]
            %389 = vst [vmem:[%s375 + $0x30] sm:$0xff] %v388
            %v390 = vld [vmem:[%s374 + $0x38] sm:$0xff]
            %391 = vst [vmem:[%s375 + $0x38] sm:$0xff] %v390
            %v392 = vld [vmem:[%s374 + $0x40] sm:$0xff]
            %393 = vst [vmem:[%s375 + $0x40] sm:$0xff] %v392
            %v394 = vld [vmem:[%s374 + $0x48] sm:$0xff]
            %395 = vst [vmem:[%s375 + $0x48] sm:$0xff] %v394
            %v396 = vld [vmem:[%s374 + $0x50] sm:$0xff]
            %397 = vst [vmem:[%s375 + $0x50] sm:$0xff] %v396
            %v398 = vld [vmem:[%s374 + $0x58] sm:$0xff]
            %399 = vst [vmem:[%s375 + $0x58] sm:$0xff] %v398
            %v400 = vld [vmem:[%s374 + $0x60] sm:$0xff]
            %401 = vst [vmem:[%s375 + $0x60] sm:$0xff] %v400
            %v402 = vld [vmem:[%s374 + $0x68] sm:$0xff]
            %403 = vst [vmem:[%s375 + $0x68] sm:$0xff] %v402
            %v404 = vld [vmem:[%s374 + $0x70] sm:$0xff]
            %405 = vst [vmem:[%s375 + $0x70] sm:$0xff] %v404
            %v406 = vld [vmem:[%s374 + $0x78] sm:$0xff]
            %407 = vst [vmem:[%s375 + $0x78] sm:$0xff] %v406
          $region63: #{reverse.5} parent=57 // loop_footer
            %s373 = sadd.s32 1, %s369
          $region64: #{reverse.5} parent=57 // loop_footer_branch
            %368 = sbr.rel target = $region60
          $region65: #{reverse.5} parent=57 // loop_exit
            _
        $region58: #{reverse.5} parent=42 // pred_fallthru
          _
        // Predicated region
        $region66: #{reverse.5} parent=42 // pred_check
          _
        $region67: #{reverse.5} parent=42 // pred_check_branch
          %409 = sbr.rel target = $region69
        $region68: #{reverse.5} parent=42 // pred_region
          _
        $region69: #{reverse.5} parent=42 // pred_fallthru
          _
      $region43: #{reverse.5} parent=38 // pred_fallthru
        _
      // Predicated region
      $region44: #{reverse.5} parent=38 // pred_check
        _
      $region45: #{reverse.5} parent=38 // pred_check_branch
        %323 = sbr.rel target = $region47
      $region46: #{reverse.5} parent=38 // pred_region
        %s325 = ssub.s32 256, 1
        loop: start=0, step=1, limit=1
        $region48: #{reverse.5} parent=46 // loop_pre_header
          _
        $region49: #{reverse.5} parent=46 // loop_header
          %s327 = sphi 0, %s331
          %p328 = scmp.ge.s32.totalorder %s327, 1
          %s332 = sphi [#allocation1], [#allocation1]
          %s333 = sphi %s1, %s1
        $region50: #{reverse.5} parent=46 // loop_header_branch
          %330 = sbr.rel (%p328) target = $region54
        $region51: #{reverse.5} parent=46 // loop_body
          %v334 = vld [vmem:[%s332] sm:%s325]
          %335 = vst [vmem:[%s333] sm:%s325] %v334
          %v336 = vld [vmem:[%s332 + $0x8] sm:%s325]
          %337 = vst [vmem:[%s333 + $0x8] sm:%s325] %v336
          %v338 = vld [vmem:[%s332 + $0x10] sm:%s325]
          %339 = vst [vmem:[%s333 + $0x10] sm:%s325] %v338
          %v340 = vld [vmem:[%s332 + $0x18] sm:%s325]
          %341 = vst [vmem:[%s333 + $0x18] sm:%s325] %v340
          %v342 = vld [vmem:[%s332 + $0x20] sm:%s325]
          %343 = vst [vmem:[%s333 + $0x20] sm:%s325] %v342
          %v344 = vld [vmem:[%s332 + $0x28] sm:%s325]
          %345 = vst [vmem:[%s333 + $0x28] sm:%s325] %v344
          %v346 = vld [vmem:[%s332 + $0x30] sm:%s325]
          %347 = vst [vmem:[%s333 + $0x30] sm:%s325] %v346
          %v348 = vld [vmem:[%s332 + $0x38] sm:%s325]
          %349 = vst [vmem:[%s333 + $0x38] sm:%s325] %v348
          %v350 = vld [vmem:[%s332 + $0x40] sm:%s325]
          %351 = vst [vmem:[%s333 + $0x40] sm:%s325] %v350
          %v352 = vld [vmem:[%s332 + $0x48] sm:%s325]
          %353 = vst [vmem:[%s333 + $0x48] sm:%s325] %v352
          %v354 = vld [vmem:[%s332 + $0x50] sm:%s325]
          %355 = vst [vmem:[%s333 + $0x50] sm:%s325] %v354
          %v356 = vld [vmem:[%s332 + $0x58] sm:%s325]
          %357 = vst [vmem:[%s333 + $0x58] sm:%s325] %v356
          %v358 = vld [vmem:[%s332 + $0x60] sm:%s325]
          %359 = vst [vmem:[%s333 + $0x60] sm:%s325] %v358
          %v360 = vld [vmem:[%s332 + $0x68] sm:%s325]
          %361 = vst [vmem:[%s333 + $0x68] sm:%s325] %v360
          %v362 = vld [vmem:[%s332 + $0x70] sm:%s325]
          %363 = vst [vmem:[%s333 + $0x70] sm:%s325] %v362
          %v364 = vld [vmem:[%s332 + $0x78] sm:%s325]
          %365 = vst [vmem:[%s333 + $0x78] sm:%s325] %v364
        $region52: #{reverse.5} parent=46 // loop_footer
          %s331 = sadd.s32 1, %s327
        $region53: #{reverse.5} parent=46 // loop_footer_branch
          %326 = sbr.rel target = $region49
        $region54: #{reverse.5} parent=46 // loop_exit
          _
      $region47: #{reverse.5} parent=38 // pred_fallthru
        _
    $region39: #{reverse.5} parent=1 // pred_fallthru
      _
    %410 = vnop

// kernel: fourier_up_block_forward.6
$region0: #{fourier_up_block_forward.6}
  #allocation0 [shape = 'u32[]', space=smem, size = 0x4, offset = 0x4, fixed_abs, tag = 'smem constant byte address 0x4 - core index']
  #allocation1 [shape = 'u32[72,128]{1,0:T(1,128)}', space=vmem, size = 0x9000, scoped, tag = 'internal scratch']
  %s0 = inlined_call_operand.vmem [shape: f32[2,8,256], index: 0, kind: input, shape index: {}]
  %s1 = inlined_call_operand.vmem [shape: f32[2,8,256], index: 1, kind: input, shape index: {}]
  %s2 = inlined_call_operand.vmem [shape: f32[2,8,256], index: 2, kind: input, shape index: {}]
  %s3 = inlined_call_operand.vmem [shape: f32[2,8,1], index: 3, kind: input, shape index: {}]
  %s4 = inlined_call_operand.vmem [shape: f32[2,8,1], index: 4, kind: input, shape index: {}]
  %s5 = inlined_call_operand.vmem [shape: bf16[8,8], index: 5, kind: input, shape index: {}]
  %s6 = inlined_call_operand.vmem [shape: f32[8,1], index: 6, kind: input, shape index: {}]
  %s7 = inlined_call_operand.vmem [shape: f32[2,8,256], index: 7, kind: output, shape index: {0}]
  %s8 = inlined_call_operand.vmem [shape: f32[2,8,256], index: 8, kind: output, shape index: {1}]
  %9 = xla_tuple %s7, %s8
  %s10 = sld [smem:[#allocation0]]
  $region69: #{fourier_up_block_forward.6} parent=0
    _
  %s12 = ssub.s32 1, %s10
  %s13 = scalar_select 0, %s12, %s10
  loop: start=0, step=1, limit=4
  $region2: #{fourier_up_block_forward.6} parent=0 // loop_pre_header
    _
  $region3: #{fourier_up_block_forward.6} parent=0 // loop_header
    %s15 = sphi 0, %s19
    %p16 = scmp.ge.s32.totalorder %s15, 4
    %s22 = sphi 0, %s34
    %s23 = sphi 0, %s30
    %s24 = sphi 0, %s22
    %s25 = sphi 0, %s23
    %s26 = sphi 0, %s24
    %s27 = sphi 0, %s25
    %s39 = sphi 0, %s41
    %s42 = sphi 0, %s39
    %s43 = sphi 0, %s42
    %s59 = sphi 0, %s43
    %s67 = sphi 0, %s69
    %s70 = sphi 0, %s67
    %s71 = sphi 0, %s70
    %s87 = sphi 0, %s71
    %s95 = sphi 0, %s97
    %s98 = sphi 0, %s95
    %s99 = sphi 0, %s98
    %s115 = sphi 0, %s99
    %s121 = sphi 0, %s123
    %s124 = sphi 0, %s121
    %s125 = sphi 0, %s124
    %s141 = sphi 0, %s125
    %s147 = sphi 0, %s149
    %s150 = sphi 0, %s147
    %s151 = sphi 0, %s150
    %s167 = sphi 0, %s151
    %s171 = sphi 0, %s171
    %s173 = sphi 0, %s171
    %s174 = sphi 0, %s173
    %s188 = sphi 0, %s174
    %s192 = sphi 0, %s192
    %s194 = sphi 0, %s192
    %s195 = sphi 0, %s194
    %s209 = sphi 0, %s195
    %s217 = sphi 0, %s219
    %s220 = sphi 0, %s217
    %s221 = sphi 0, %s220
    %s237 = sphi 0, %s221
    %s245 = sphi 0, %s247
    %s248 = sphi 0, %s245
    %s249 = sphi 0, %s248
    %s265 = sphi 0, %s249
  $region4: #{fourier_up_block_forward.6} parent=0 // loop_header_branch
    %18 = sbr.rel (%p16) target = $region8
  $region5: #{fourier_up_block_forward.6} parent=0 // loop_body
    %s20 = ssub.s32 %s15, 1
    %s21 = ssub.s32 %s15, 2
    %s28 = sadd.s32 1, %s23
    %p29 = scmp.ge.s32.totalorder %s28, 1
    %s30 = scalar_select %p29, 0, %s28
    %s31 = sadd.s32 1, %s22
    %s32 = scalar_select %p29, %s31, %s22
    %p33 = scmp.ge.s32.totalorder %s32, 2
    %s34 = scalar_select %p33, 0, %s32
    %s35 = ssub.s32 %s22, %s34
    %s36 = ssub.s32 %s23, %s30
    %s37 = sor.u32 %s35, %s36
    %p38 = scmp.eq.s32.totalorder %s37, 0
    %s40 = sadd.s32 %s39, 1
    %s41 = scalar_select %p38, %s39, %s40
    %p44 = pneg %p38
    %p45 = scmp.eq.s32.totalorder %s15, 1
    %p46 = por %p44, %p45
    %p47 = scmp.ne.s32.totalorder %s39, %s42
    %p48 = scmp.eq.s32.totalorder %s15, 0
    %p49 = por %p47, %p48
    %p50 = scmp.ne.s32.totalorder %s39, %s42
    %p51 = scmp.eq.s32.totalorder %s20, 1
    %p52 = por %p50, %p51
    %p53 = scmp.ne.s32.totalorder %s42, %s43
    %p54 = scmp.eq.s32.totalorder %s20, 0
    %p55 = por %p53, %p54
    %p56 = scmp.ne.s32.totalorder %s42, %s43
    %p57 = scmp.eq.s32.totalorder %s21, 1
    %p58 = por %p56, %p57
    %p60 = scmp.ne.s32.totalorder %s43, %s59
    %p61 = scmp.eq.s32.totalorder %s21, 0
    %p62 = por %p60, %p61
    %s63 = ssub.s32 %s22, %s34
    %s64 = ssub.s32 %s23, %s30
    %s65 = sor.u32 %s63, %s64
    %p66 = scmp.eq.s32.totalorder %s65, 0
    %s68 = sadd.s32 %s67, 1
    %s69 = scalar_select %p66, %s67, %s68
    %p72 = pneg %p66
    %p73 = scmp.eq.s32.totalorder %s15, 1
    %p74 = por %p72, %p73
    %p75 = scmp.ne.s32.totalorder %s67, %s70
    %p76 = scmp.eq.s32.totalorder %s15, 0
    %p77 = por %p75, %p76
    %p78 = scmp.ne.s32.totalorder %s67, %s70
    %p79 = scmp.eq.s32.totalorder %s20, 1
    %p80 = por %p78, %p79
    %p81 = scmp.ne.s32.totalorder %s70, %s71
    %p82 = scmp.eq.s32.totalorder %s20, 0
    %p83 = por %p81, %p82
    %p84 = scmp.ne.s32.totalorder %s70, %s71
    %p85 = scmp.eq.s32.totalorder %s21, 1
    %p86 = por %p84, %p85
    %p88 = scmp.ne.s32.totalorder %s71, %s87
    %p89 = scmp.eq.s32.totalorder %s21, 0
    %p90 = por %p88, %p89
    %s91 = ssub.s32 %s22, %s34
    %s92 = ssub.s32 %s23, %s30
    %s93 = sor.u32 %s91, %s92
    %p94 = scmp.eq.s32.totalorder %s93, 0
    %s96 = sadd.s32 %s95, 1
    %s97 = scalar_select %p94, %s95, %s96
    %p100 = pneg %p94
    %p101 = scmp.eq.s32.totalorder %s15, 1
    %p102 = por %p100, %p101
    %p103 = scmp.ne.s32.totalorder %s95, %s98
    %p104 = scmp.eq.s32.totalorder %s15, 0
    %p105 = por %p103, %p104
    %p106 = scmp.ne.s32.totalorder %s95, %s98
    %p107 = scmp.eq.s32.totalorder %s20, 1
    %p108 = por %p106, %p107
    %p109 = scmp.ne.s32.totalorder %s98, %s99
    %p110 = scmp.eq.s32.totalorder %s20, 0
    %p111 = por %p109, %p110
    %p112 = scmp.ne.s32.totalorder %s98, %s99
    %p113 = scmp.eq.s32.totalorder %s21, 1
    %p114 = por %p112, %p113
    %p116 = scmp.ne.s32.totalorder %s99, %s115
    %p117 = scmp.eq.s32.totalorder %s21, 0
    %p118 = por %p116, %p117
    %s119 = ssub.s32 %s22, %s34
    %p120 = scmp.eq.s32.totalorder %s119, 0
    %s122 = sadd.s32 %s121, 1
    %s123 = scalar_select %p120, %s121, %s122
    %p126 = pneg %p120
    %p127 = scmp.eq.s32.totalorder %s15, 1
    %p128 = por %p126, %p127
    %p129 = scmp.ne.s32.totalorder %s121, %s124
    %p130 = scmp.eq.s32.totalorder %s15, 0
    %p131 = por %p129, %p130
    %p132 = scmp.ne.s32.totalorder %s121, %s124
    %p133 = scmp.eq.s32.totalorder %s20, 1
    %p134 = por %p132, %p133
    %p135 = scmp.ne.s32.totalorder %s124, %s125
    %p136 = scmp.eq.s32.totalorder %s20, 0
    %p137 = por %p135, %p136
    %p138 = scmp.ne.s32.totalorder %s124, %s125
    %p139 = scmp.eq.s32.totalorder %s21, 1
    %p140 = por %p138, %p139
    %p142 = scmp.ne.s32.totalorder %s125, %s141
    %p143 = scmp.eq.s32.totalorder %s21, 0
    %p144 = por %p142, %p143
    %s145 = ssub.s32 %s22, %s34
    %p146 = scmp.eq.s32.totalorder %s145, 0
    %s148 = sadd.s32 %s147, 1
    %s149 = scalar_select %p146, %s147, %s148
    %p152 = pneg %p146
    %p153 = scmp.eq.s32.totalorder %s15, 1
    %p154 = por %p152, %p153
    %p155 = scmp.ne.s32.totalorder %s147, %s150
    %p156 = scmp.eq.s32.totalorder %s15, 0
    %p157 = por %p155, %p156
    %p158 = scmp.ne.s32.totalorder %s147, %s150
    %p159 = scmp.eq.s32.totalorder %s20, 1
    %p160 = por %p158, %p159
    %p161 = scmp.ne.s32.totalorder %s150, %s151
    %p162 = scmp.eq.s32.totalorder %s20, 0
    %p163 = por %p161, %p162
    %p164 = scmp.ne.s32.totalorder %s150, %s151
    %p165 = scmp.eq.s32.totalorder %s21, 1
    %p166 = por %p164, %p165
    %p168 = scmp.ne.s32.totalorder %s151, %s167
    %p169 = scmp.eq.s32.totalorder %s21, 0
    %p170 = por %p168, %p169
    %s172 = sadd.s32 %s171, 1
    %p175 = scmp.eq.s32.totalorder %s15, 1
    %p176 = scmp.ne.s32.totalorder %s171, %s173
    %p177 = scmp.eq.s32.totalorder %s15, 0
    %p178 = por %p176, %p177
    %p179 = scmp.ne.s32.totalorder %s171, %s173
    %p180 = scmp.eq.s32.totalorder %s20, 1
    %p181 = por %p179, %p180
    %p182 = scmp.ne.s32.totalorder %s173, %s174
    %p183 = scmp.eq.s32.totalorder %s20, 0
    %p184 = por %p182, %p183
    %p185 = scmp.ne.s32.totalorder %s173, %s174
    %p186 = scmp.eq.s32.totalorder %s21, 1
    %p187 = por %p185, %p186
    %p189 = scmp.ne.s32.totalorder %s174, %s188
    %p190 = scmp.eq.s32.totalorder %s21, 0
    %p191 = por %p189, %p190
    %s193 = sadd.s32 %s192, 1
    %p196 = scmp.eq.s32.totalorder %s15, 1
    %p197 = scmp.ne.s32.totalorder %s192, %s194
    %p198 = scmp.eq.s32.totalorder %s15, 0
    %p199 = por %p197, %p198
    %p200 = scmp.ne.s32.totalorder %s192, %s194
    %p201 = scmp.eq.s32.totalorder %s20, 1
    %p202 = por %p200, %p201
    %p203 = scmp.ne.s32.totalorder %s194, %s195
    %p204 = scmp.eq.s32.totalorder %s20, 0
    %p205 = por %p203, %p204
    %p206 = scmp.ne.s32.totalorder %s194, %s195
    %p207 = scmp.eq.s32.totalorder %s21, 1
    %p208 = por %p206, %p207
    %p210 = scmp.ne.s32.totalorder %s195, %s209
    %p211 = scmp.eq.s32.totalorder %s21, 0
    %p212 = por %p210, %p211
    %s213 = ssub.s32 %s22, %s34
    %s214 = ssub.s32 %s23, %s30
    %s215 = sor.u32 %s213, %s214
    %p216 = scmp.eq.s32.totalorder %s215, 0
    %s218 = sadd.s32 %s217, 1
    %s219 = scalar_select %p216, %s217, %s218
    %p222 = pneg %p216
    %p223 = scmp.eq.s32.totalorder %s15, 1
    %p224 = por %p222, %p223
    %p225 = scmp.ne.s32.totalorder %s217, %s220
    %p226 = scmp.eq.s32.totalorder %s15, 0
    %p227 = por %p225, %p226
    %p228 = scmp.ne.s32.totalorder %s217, %s220
    %p229 = scmp.eq.s32.totalorder %s20, 1
    %p230 = por %p228, %p229
    %p231 = scmp.ne.s32.totalorder %s220, %s221
    %p232 = scmp.eq.s32.totalorder %s20, 0
    %p233 = por %p231, %p232
    %p234 = scmp.ne.s32.totalorder %s220, %s221
    %p235 = scmp.eq.s32.totalorder %s21, 1
    %p236 = por %p234, %p235
    %p238 = scmp.ne.s32.totalorder %s221, %s237
    %p239 = scmp.eq.s32.totalorder %s21, 0
    %p240 = por %p238, %p239
    %s241 = ssub.s32 %s22, %s34
    %s242 = ssub.s32 %s23, %s30
    %s243 = sor.u32 %s241, %s242
    %p244 = scmp.eq.s32.totalorder %s243, 0
    %s246 = sadd.s32 %s245, 1
    %s247 = scalar_select %p244, %s245, %s246
    %p250 = pneg %p244
    %p251 = scmp.eq.s32.totalorder %s15, 1
    %p252 = por %p250, %p251
    %p253 = scmp.ne.s32.totalorder %s245, %s248
    %p254 = scmp.eq.s32.totalorder %s15, 0
    %p255 = por %p253, %p254
    %p256 = scmp.ne.s32.totalorder %s245, %s248
    %p257 = scmp.eq.s32.totalorder %s20, 1
    %p258 = por %p256, %p257
    %p259 = scmp.ne.s32.totalorder %s248, %s249
    %p260 = scmp.eq.s32.totalorder %s20, 0
    %p261 = por %p259, %p260
    %p262 = scmp.ne.s32.totalorder %s248, %s249
    %p263 = scmp.eq.s32.totalorder %s21, 1
    %p264 = por %p262, %p263
    %p266 = scmp.ne.s32.totalorder %s249, %s265
    %p267 = scmp.eq.s32.totalorder %s21, 0
    %p268 = por %p266, %p267
    %p269 = scmp.le.s32.totalorder 1, %s15
    %p270 = scmp.lt.s32.totalorder %s15, 3
    %p271 = pnand %p269, %p270
    %p272 = pneg %p271
    // Predicated region
    $region9: #{fourier_up_block_forward.6} parent=5 // pred_check
      _
    $region10: #{fourier_up_block_forward.6} parent=5 // pred_check_branch
      %274 = sbr.rel (%p271) target = $region12
    $region11: #{fourier_up_block_forward.6} parent=5 // pred_region
      %s275 = ssub.s32 %s15, 1
      // Predicated region
      $region13: #{fourier_up_block_forward.6} parent=11 // pred_check
        %p276 = pneg %p184
      $region14: #{fourier_up_block_forward.6} parent=11 // pred_check_branch
        %278 = sbr.rel (%p276) target = $region16
      $region15: #{fourier_up_block_forward.6} parent=11 // pred_region
        _
      $region16: #{fourier_up_block_forward.6} parent=11 // pred_fallthru
        _
      // Predicated region
      $region17: #{fourier_up_block_forward.6} parent=11 // pred_check
        %p279 = pneg %p205
      $region18: #{fourier_up_block_forward.6} parent=11 // pred_check_branch
        %281 = sbr.rel (%p279) target = $region20
      $region19: #{fourier_up_block_forward.6} parent=11 // pred_region
        _
      $region20: #{fourier_up_block_forward.6} parent=11 // pred_fallthru
        _
    $region12: #{fourier_up_block_forward.6} parent=5 // pred_fallthru
      _
    %p282 = scmp.lt.s32.totalorder %s15, 2
    // Predicated region
    $region21: #{fourier_up_block_forward.6} parent=5 // pred_check
      %p283 = pneg %p282
    $region22: #{fourier_up_block_forward.6} parent=5 // pred_check_branch
      %285 = sbr.rel (%p283) target = $region24
    $region23: #{fourier_up_block_forward.6} parent=5 // pred_region
      // Predicated region
      $region25: #{fourier_up_block_forward.6} parent=23 // pred_check
        %p286 = pneg %p49
      $region26: #{fourier_up_block_forward.6} parent=23 // pred_check_branch
        %288 = sbr.rel (%p286) target = $region28
      $region27: #{fourier_up_block_forward.6} parent=23 // pred_region
        %s289 = smul.u32 2, %s23
        %p290 = scmp.lt.s32.totalorder %s22, 1
        %s291 = scalar_select %p290, %s22, 1
        %p292 = scmp.lt.s32.totalorder %s289, 1
        %s293 = scalar_select %p292, %s289, 1
        %s294 = smul.addr %s291, 2
        %s295 = sadd.s32 %s293, %s294
        %s296 = smul.addr %s295, 8
        %s297 = scalar_lea.vmem %s0, %s296
        %s298 = smul.u32 2, %s23
      $region28: #{fourier_up_block_forward.6} parent=23 // pred_fallthru
        _
      // Predicated region
      $region29: #{fourier_up_block_forward.6} parent=23 // pred_check
        %p299 = pneg %p77
      $region30: #{fourier_up_block_forward.6} parent=23 // pred_check_branch
        %301 = sbr.rel (%p299) target = $region32
      $region31: #{fourier_up_block_forward.6} parent=23 // pred_region
        %s302 = smul.u32 2, %s23
        %p303 = scmp.lt.s32.totalorder %s22, 1
        %s304 = scalar_select %p303, %s22, 1
        %p305 = scmp.lt.s32.totalorder %s302, 1
        %s306 = scalar_select %p305, %s302, 1
        %s307 = smul.addr %s304, 2
        %s308 = sadd.s32 %s306, %s307
        %s309 = smul.addr %s308, 8
        %s310 = scalar_lea.vmem %s1, %s309
        %s311 = smul.u32 2, %s23
      $region32: #{fourier_up_block_forward.6} parent=23 // pred_fallthru
        _
      // Predicated region
      $region33: #{fourier_up_block_forward.6} parent=23 // pred_check
        %p312 = pneg %p105
      $region34: #{fourier_up_block_forward.6} parent=23 // pred_check_branch
        %314 = sbr.rel (%p312) target = $region36
      $region35: #{fourier_up_block_forward.6} parent=23 // pred_region
        %s315 = smul.u32 2, %s23
        %p316 = scmp.lt.s32.totalorder %s22, 1
        %s317 = scalar_select %p316, %s22, 1
        %p318 = scmp.lt.s32.totalorder %s315, 1
        %s319 = scalar_select %p318, %s315, 1
        %s320 = smul.addr %s317, 2
        %s321 = sadd.s32 %s319, %s320
        %s322 = smul.addr %s321, 8
        %s323 = scalar_lea.vmem %s2, %s322
        %s324 = smul.u32 2, %s23
      $region36: #{fourier_up_block_forward.6} parent=23 // pred_fallthru
        _
      // Predicated region
      $region37: #{fourier_up_block_forward.6} parent=23 // pred_check
        %p325 = pneg %p131
      $region38: #{fourier_up_block_forward.6} parent=23 // pred_check_branch
        %327 = sbr.rel (%p325) target = $region40
      $region39: #{fourier_up_block_forward.6} parent=23 // pred_region
        %p328 = scmp.lt.s32.totalorder %s22, 1
        %s329 = scalar_select %p328, %s22, 1
        %s330 = smul.addr %s329, 8
        %s331 = scalar_lea.vmem %s3, %s330
      $region40: #{fourier_up_block_forward.6} parent=23 // pred_fallthru
        _
      // Predicated region
      $region41: #{fourier_up_block_forward.6} parent=23 // pred_check
        %p332 = pneg %p157
      $region42: #{fourier_up_block_forward.6} parent=23 // pred_check_branch
        %334 = sbr.rel (%p332) target = $region44
      $region43: #{fourier_up_block_forward.6} parent=23 // pred_region
        %p335 = scmp.lt.s32.totalorder %s22, 1
        %s336 = scalar_select %p335, %s22, 1
        %s337 = smul.addr %s336, 8
        %s338 = scalar_lea.vmem %s4, %s337
      $region44: #{fourier_up_block_forward.6} parent=23 // pred_fallthru
        _
    $region24: #{fourier_up_block_forward.6} parent=5 // pred_fallthru
      _
    %p339 = scmp.le.s32.totalorder 1, %s15
    %p340 = scmp.lt.s32.totalorder %s15, 3
    %p341 = pnand %p339, %p340
    %p342 = pneg %p341
    // Predicated region
    $region45: #{fourier_up_block_forward.6} parent=5 // pred_check
      _
    $region46: #{fourier_up_block_forward.6} parent=5 // pred_check_branch
      %344 = sbr.rel (%p341) target = $region48
    $region47: #{fourier_up_block_forward.6} parent=5 // pred_region
      %s345 = ssub.s32 %s15, 1
      %s346 = smul.u32 2, %s25
      %p347 = scmp.lt.s32.totalorder %s24, 1
      %s348 = scalar_select %p347, %s24, 1
      %p349 = scmp.lt.s32.totalorder %s346, 1
      %s350 = scalar_select %p349, %s346, 1
      %s351 = smul.addr %s348, 2
      %s352 = sadd.s32 %s350, %s351
      %s353 = smul.addr %s352, 8
      %s354 = scalar_lea.vmem %s0, %s353
      %p355 = pneg %p55
      %p356 = pneg %p52
      %s357 = smul.u32 2, %s25
      %p358 = scmp.lt.s32.totalorder %s24, 1
      %s359 = scalar_select %p358, %s24, 1
      %p360 = scmp.lt.s32.totalorder %s357, 1
      %s361 = scalar_select %p360, %s357, 1
      %s362 = smul.addr %s359, 2
      %s363 = sadd.s32 %s361, %s362
      %s364 = smul.addr %s363, 8
      %s365 = scalar_lea.vmem %s1, %s364
      %p366 = pneg %p83
      %p367 = pneg %p80
      %s368 = smul.u32 2, %s25
      %p369 = scmp.lt.s32.totalorder %s24, 1
      %s370 = scalar_select %p369, %s24, 1
      %p371 = scmp.lt.s32.totalorder %s368, 1
      %s372 = scalar_select %p371, %s368, 1
      %s373 = smul.addr %s370, 2
      %s374 = sadd.s32 %s372, %s373
      %s375 = smul.addr %s374, 8
      %s376 = scalar_lea.vmem %s2, %s375
      %p377 = pneg %p111
      %p378 = pneg %p108
      %p379 = scmp.lt.s32.totalorder %s24, 1
      %s380 = scalar_select %p379, %s24, 1
      %s381 = smul.addr %s380, 8
      %s382 = scalar_lea.vmem %s3, %s381
      %p383 = pneg %p137
      %p384 = pneg %p134
      %p385 = scmp.lt.s32.totalorder %s24, 1
      %s386 = scalar_select %p385, %s24, 1
      %s387 = smul.addr %s386, 8
      %s388 = scalar_lea.vmem %s4, %s387
      %p389 = pneg %p163
      %p390 = pneg %p160
      %p391 = pneg %p184
      %p392 = pneg %p181
      %p393 = pneg %p205
      %p394 = pneg %p202
      %p395 = pneg %p233
      %p396 = pneg %p230
      %s397 = smul.u32 2, %s25
      %p398 = scmp.lt.s32.totalorder %s24, 1
      %s399 = scalar_select %p398, %s24, 1
      %p400 = scmp.lt.s32.totalorder %s397, 1
      %s401 = scalar_select %p400, %s397, 1
      %s402 = smul.addr %s399, 2
      %s403 = sadd.s32 %s401, %s402
      %s404 = smul.addr %s403, 8
      %s405 = scalar_lea.vmem %s7, %s404
      %p406 = pneg %p261
      %p407 = pneg %p258
      %s408 = smul.u32 2, %s25
      %p409 = scmp.lt.s32.totalorder %s24, 1
      %s410 = scalar_select %p409, %s24, 1
      %p411 = scmp.lt.s32.totalorder %s408, 1
      %s412 = scalar_select %p411, %s408, 1
      %s413 = smul.addr %s410, 2
      %s414 = sadd.s32 %s412, %s413
      %s415 = smul.addr %s414, 8
      %s416 = scalar_lea.vmem %s8, %s415
      %s417 = smul.u32 2, %s25
      %p418 = scmp.lt.s32.totalorder %s24, 1
      %s419 = scalar_select %p418, %s24, 1
      %p420 = scmp.lt.s32.totalorder %s417, 1
      %s421 = scalar_select %p420, %s417, 1
      %s422 = smul.addr %s419, 2
      %s423 = sadd.s32 %s421, %s422
      %s424 = smul.addr %s423, 8
      %s425 = scalar_lea.vmem %s0, %s424
      %s426 = smul.u32 2, %s25
      %s427 = smul.u32 2, %s25
      %p428 = scmp.lt.s32.totalorder %s24, 1
      %s429 = scalar_select %p428, %s24, 1
      %p430 = scmp.lt.s32.totalorder %s427, 1
      %s431 = scalar_select %p430, %s427, 1
      %s432 = smul.addr %s429, 2
      %s433 = sadd.s32 %s431, %s432
      %s434 = smul.addr %s433, 8
      %s435 = scalar_lea.vmem %s1, %s434
      %s436 = smul.u32 2, %s25
      %s437 = smul.u32 2, %s25
      %p438 = scmp.lt.s32.totalorder %s24, 1
      %s439 = scalar_select %p438, %s24, 1
      %p440 = scmp.lt.s32.totalorder %s437, 1
      %s441 = scalar_select %p440, %s437, 1
      %s442 = smul.addr %s439, 2
      %s443 = sadd.s32 %s441, %s442
      %s444 = smul.addr %s443, 8
      %s445 = scalar_lea.vmem %s2, %s444
      %s446 = smul.u32 2, %s25
      %p447 = scmp.lt.s32.totalorder %s24, 1
      %s448 = scalar_select %p447, %s24, 1
      %s449 = smul.addr %s448, 8
      %s450 = scalar_lea.vmem %s3, %s449
      %p451 = scmp.lt.s32.totalorder %s24, 1
      %s452 = scalar_select %p451, %s24, 1
      %s453 = smul.addr %s452, 8
      %s454 = scalar_lea.vmem %s4, %s453
      %s455 = smul.u32 2, %s25
      %p456 = scmp.lt.s32.totalorder %s24, 1
      %s457 = scalar_select %p456, %s24, 1
      %p458 = scmp.lt.s32.totalorder %s455, 1
      %s459 = scalar_select %p458, %s455, 1
      %s460 = smul.addr %s457, 2
      %s461 = sadd.s32 %s459, %s460
      %s462 = smul.addr %s461, 8
      %s463 = scalar_lea.vmem %s7, %s462
      %s464 = smul.u32 2, %s25
      %s465 = smul.u32 2, %s25
      %p466 = scmp.lt.s32.totalorder %s24, 1
      %s467 = scalar_select %p466, %s24, 1
      %p468 = scmp.lt.s32.totalorder %s465, 1
      %s469 = scalar_select %p468, %s465, 1
      %s470 = smul.addr %s467, 2
      %s471 = sadd.s32 %s469, %s470
      %s472 = smul.addr %s471, 8
      %s473 = scalar_lea.vmem %s8, %s472
      %s474 = smul.u32 2, %s25
      %v476 = vld [vmem:[%s425] sm:$0xff]
      %v477 = vld [vmem:[%s425 + $0x8] sm:$0xff]
      %v478 = vld [vmem:[%s435] sm:$0xff]
      %v479 = vld [vmem:[%s435 + $0x8] sm:$0xff]
      %v480 = vadd.f32 %v476, %v478
      %v481 = vadd.f32 %v477, %v479
      %v482 = vld [vmem:[%s450] sm:$0xff]
      %v483 = vadd.f32 %v482, 1.0
      %485 = vset.pattern.permute.xlu0 0
      %486 = vperm.xlu0 %485, %v483
      %v487 = vpop.permute.xlu0 %486
      %v489 = vmul.f32 %v480, %v487
      %v490 = vmul.f32 %v481, %v487
      %v491 = vld [vmem:[%s454] sm:$0xff]
      %493 = vset.pattern.permute.xlu0 0
      %494 = vperm.xlu0 %493, %v491
      %v495 = vpop.permute.xlu0 %494
      %v497 = vadd.f32 %v489, %v495
      %v498 = vadd.f32 %v490, %v495
      %v499 = vmul.f32 %v497, 0.5
      %v500 = vmul.f32 %v498, 0.5
      %v501 = vmul.f32 %v497, 0.044715
      %v502 = vmul.f32 %v498, 0.044715
      %v503 = vmul.f32 %v501, %v497
      %v504 = vmul.f32 %v502, %v498
      %v505 = vmul.f32 %v503, %v497
      %v506 = vmul.f32 %v504, %v498
      %v507 = vadd.f32 %v497, %v505
      %v508 = vadd.f32 %v498, %v506
      %v509 = vmul.f32 %v507, 0.7978846
      %v510 = vmul.f32 %v508, 0.7978846
      %v511 = vtanh.pop %v509
      %v512 = vtanh.pop %v510
      %v513 = vadd.f32 %v511, 1.0
      %v514 = vadd.f32 %v512, 1.0
      %v515 = vmul.f32 %v499, %v513
      %v516 = vmul.f32 %v500, %v514
      %517 = vst [vmem:[%s463] sm:$0xff] %v515
      %518 = vst [vmem:[%s463 + $0x8] sm:$0xff] %v516
      %v519 = vld [vmem:[%s5] sm:$0xf]
      %v520 = vpack.c.bf16 %v515, %v515
      %v521 = vpack.c.bf16 %v516, %v516
      %v522 = vld [vmem:[%s6] sm:$0xff]
      %524 = vset.pattern.permute.xlu0 0
      %525 = vperm.xlu0 %524, %v522
      %v526 = vpop.permute.xlu0 %525
      %vm528 = vcmask 64512
      %v530 = vsel %vm528, %v519, 0
      %vm532 = vcmask 1043456
      %v534 = vsel %vm532, %v520, 0
      %v537 = vsel %vm532, %v521, 0
      %539 = vmatpush.bf16.msra.mxu0 0
      %540 = vmatpush.bf16.msra.mxu0 0
      %541 = vmatpush.bf16.msra.mxu0 0
      %542 = vmatpush.bf16.msra.mxu0 0
      %543 = vmatpush.bf16.msra.mxu0 0
      %544 = vmatpush.bf16.msra.mxu0 0
      %545 = vmatpush.bf16.msra.mxu0 0
      %546 = vmatpush.bf16.msra.mxu0 %v534
      %547 = vmatmul.bf16.gmra.mxu0 %v530
      %v548 = vpop.f32.mrf.mxu0
      %v549 = vadd.f32 %v526, %v548
      %v550 = vpop.f32.mrf.mxu0
      %551 = vdwg.mxu0
      %552 = vmatpush.bf16.msra.mxu0 0
      %553 = vmatpush.bf16.msra.mxu0 0
      %554 = vmatpush.bf16.msra.mxu0 0
      %555 = vmatpush.bf16.msra.mxu0 0
      %556 = vmatpush.bf16.msra.mxu0 0
      %557 = vmatpush.bf16.msra.mxu0 0
      %558 = vmatpush.bf16.msra.mxu0 0
      %559 = vmatpush.bf16.msra.mxu0 %v537
      %560 = vmatmul.bf16.gmra.mxu0 %v530
      %v561 = vpop.f32.mrf.mxu0
      %v562 = vadd.f32 %v526, %v561
      %v563 = vpop.f32.mrf.mxu0
      %564 = vdwg.mxu0
      %v565 = vld [vmem:[%s445] sm:$0xff]
      %v566 = vld [vmem:[%s445 + $0x8] sm:$0xff]
      %v567 = vadd.f32 %v549, %v565
      %v568 = vadd.f32 %v562, %v566
      %569 = vst [vmem:[%s473] sm:$0xff] %v567
      %570 = vst [vmem:[%s473 + $0x8] sm:$0xff] %v568
      %s571 = smul.u32 2, %s25
      %p572 = scmp.lt.s32.totalorder %s24, 1
      %s573 = scalar_select %p572, %s24, 1
      %p574 = scmp.lt.s32.totalorder %s571, 1
      %s575 = scalar_select %p574, %s571, 1
      %s576 = smul.addr %s573, 2
      %s577 = sadd.s32 %s575, %s576
      %s578 = smul.addr %s577, 8
      %s579 = scalar_lea.vmem %s7, %s578
      %s580 = smul.u32 2, %s25
      %p581 = scmp.lt.s32.totalorder %s24, 1
      %s582 = scalar_select %p581, %s24, 1
      %p583 = scmp.lt.s32.totalorder %s580, 1
      %s584 = scalar_select %p583, %s580, 1
      %s585 = smul.addr %s582, 2
      %s586 = sadd.s32 %s584, %s585
      %s587 = smul.addr %s586, 8
      %s588 = scalar_lea.vmem %s8, %s587
      // Predicated region
      $region49: #{fourier_up_block_forward.6} parent=47 // pred_check
        %p589 = pneg %p230
      $region50: #{fourier_up_block_forward.6} parent=47 // pred_check_branch
        %591 = sbr.rel (%p589) target = $region52
      $region51: #{fourier_up_block_forward.6} parent=47 // pred_region
        %s592 = smul.u32 2, %s25
      $region52: #{fourier_up_block_forward.6} parent=47 // pred_fallthru
        _
      // Predicated region
      $region53: #{fourier_up_block_forward.6} parent=47 // pred_check
        %p593 = pneg %p258
      $region54: #{fourier_up_block_forward.6} parent=47 // pred_check_branch
        %595 = sbr.rel (%p593) target = $region56
      $region55: #{fourier_up_block_forward.6} parent=47 // pred_region
        %s596 = smul.u32 2, %s25
      $region56: #{fourier_up_block_forward.6} parent=47 // pred_fallthru
        _
    $region48: #{fourier_up_block_forward.6} parent=5 // pred_fallthru
      _
    %p597 = scmp.le.s32.totalorder 2, %s15
    // Predicated region
    $region57: #{fourier_up_block_forward.6} parent=5 // pred_check
      %p598 = pneg %p597
    $region58: #{fourier_up_block_forward.6} parent=5 // pred_check_branch
      %600 = sbr.rel (%p598) target = $region60
    $region59: #{fourier_up_block_forward.6} parent=5 // pred_region
      %s601 = ssub.s32 %s15, 2
      // Predicated region
      $region61: #{fourier_up_block_forward.6} parent=59 // pred_check
        %p602 = pneg %p236
      $region62: #{fourier_up_block_forward.6} parent=59 // pred_check_branch
        %604 = sbr.rel (%p602) target = $region64
      $region63: #{fourier_up_block_forward.6} parent=59 // pred_region
        %s605 = smul.u32 2, %s27
        %p606 = scmp.lt.s32.totalorder %s26, 1
        %s607 = scalar_select %p606, %s26, 1
        %p608 = scmp.lt.s32.totalorder %s605, 1
        %s609 = scalar_select %p608, %s605, 1
        %s610 = smul.addr %s607, 2
        %s611 = sadd.s32 %s609, %s610
        %s612 = smul.addr %s611, 8
        %s613 = scalar_lea.vmem %s7, %s612
      $region64: #{fourier_up_block_forward.6} parent=59 // pred_fallthru
        _
      // Predicated region
      $region65: #{fourier_up_block_forward.6} parent=59 // pred_check
        %p614 = pneg %p264
      $region66: #{fourier_up_block_forward.6} parent=59 // pred_check_branch
        %616 = sbr.rel (%p614) target = $region68
      $region67: #{fourier_up_block_forward.6} parent=59 // pred_region
        %s617 = smul.u32 2, %s27
        %p618 = scmp.lt.s32.totalorder %s26, 1
        %s619 = scalar_select %p618, %s26, 1
        %p620 = scmp.lt.s32.totalorder %s617, 1
        %s621 = scalar_select %p620, %s617, 1
        %s622 = smul.addr %s619, 2
        %s623 = sadd.s32 %s621, %s622
        %s624 = smul.addr %s623, 8
        %s625 = scalar_lea.vmem %s8, %s624
      $region68: #{fourier_up_block_forward.6} parent=59 // pred_fallthru
        _
    $region60: #{fourier_up_block_forward.6} parent=5 // pred_fallthru
      _
  $region6: #{fourier_up_block_forward.6} parent=0 // loop_footer
    %s19 = sadd.s32 1, %s15
  $region7: #{fourier_up_block_forward.6} parent=0 // loop_footer_branch
    %14 = sbr.rel target = $region3
  $region8: #{fourier_up_block_forward.6} parent=0 // loop_exit
    _

// kernel: fourier_up_block_forward.7
$region0: #{fourier_up_block_forward.7}
  #allocation0 [shape = 'u32[]', space=smem, size = 0x4, offset = 0x4, fixed_abs, tag = 'smem constant byte address 0x4 - core index']
  #allocation1 [shape = 'u32[72,128]{1,0:T(1,128)}', space=vmem, size = 0x9000, scoped, tag = 'internal scratch']
  %s0 = inlined_call_operand.vmem [shape: f32[2,2,8,16], index: 0, kind: input, shape index: {}]
  %s1 = inlined_call_operand.vmem [shape: f32[2,2,8,16], index: 1, kind: input, shape index: {}]
  %s2 = inlined_call_operand.vmem [shape: f32[2,2,1,16], index: 2, kind: input, shape index: {}]
  %s3 = inlined_call_operand.vmem [shape: f32[2,2,1,16], index: 3, kind: input, shape index: {}]
  %s4 = inlined_call_operand.vmem [shape: bf16[2,8,8,16], index: 4, kind: input, shape index: {}]
  %s5 = inlined_call_operand.vmem [shape: bf16[2,8,8,16], index: 5, kind: input, shape index: {}]
  %s6 = inlined_call_operand.vmem [shape: f32[2,2,8,16], index: 6, kind: output, shape index: {0}]
  %s7 = inlined_call_operand.vmem [shape: f32[2,2,8,16], index: 7, kind: output, shape index: {1}]
  %8 = xla_tuple %s6, %s7
  %s9 = sld [smem:[#allocation0]]
  $region65: #{fourier_up_block_forward.7} parent=0
    _
  %s11 = ssub.s32 1, %s9
  %s12 = scalar_select 0, %s11, %s9
  loop: start=0, step=1, limit=4
  $region2: #{fourier_up_block_forward.7} parent=0 // loop_pre_header
    _
  $region3: #{fourier_up_block_forward.7} parent=0 // loop_header
    %s14 = sphi 0, %s18
    %p15 = scmp.ge.s32.totalorder %s14, 4
    %s21 = sphi 0, %s33
    %s22 = sphi 0, %s29
    %s23 = sphi 0, %s21
    %s24 = sphi 0, %s22
    %s25 = sphi 0, %s23
    %s26 = sphi 0, %s24
    %s38 = sphi 0, %s40
    %s41 = sphi 0, %s38
    %s42 = sphi 0, %s41
    %s58 = sphi 0, %s42
    %s66 = sphi 0, %s68
    %s69 = sphi 0, %s66
    %s70 = sphi 0, %s69
    %s86 = sphi 0, %s70
    %s94 = sphi 0, %s96
    %s97 = sphi 0, %s94
    %s98 = sphi 0, %s97
    %s114 = sphi 0, %s98
    %s122 = sphi 0, %s124
    %s125 = sphi 0, %s122
    %s126 = sphi 0, %s125
    %s142 = sphi 0, %s126
    %s150 = sphi 0, %s152
    %s153 = sphi 0, %s150
    %s154 = sphi 0, %s153
    %s170 = sphi 0, %s154
    %s178 = sphi 0, %s180
    %s181 = sphi 0, %s178
    %s182 = sphi 0, %s181
    %s198 = sphi 0, %s182
    %s206 = sphi 0, %s208
    %s209 = sphi 0, %s206
    %s210 = sphi 0, %s209
    %s226 = sphi 0, %s210
    %s234 = sphi 0, %s236
    %s237 = sphi 0, %s234
    %s238 = sphi 0, %s237
    %s254 = sphi 0, %s238
  $region4: #{fourier_up_block_forward.7} parent=0 // loop_header_branch
    %17 = sbr.rel (%p15) target = $region8
  $region5: #{fourier_up_block_forward.7} parent=0 // loop_body
    %s19 = ssub.s32 %s14, 1
    %s20 = ssub.s32 %s14, 2
    %s27 = sadd.s32 1, %s22
    %p28 = scmp.ge.s32.totalorder %s27, 1
    %s29 = scalar_select %p28, 0, %s27
    %s30 = sadd.s32 1, %s21
    %s31 = scalar_select %p28, %s30, %s21
    %p32 = scmp.ge.s32.totalorder %s31, 2
    %s33 = scalar_select %p32, 0, %s31
    %s34 = ssub.s32 %s21, %s33
    %s35 = ssub.s32 %s22, %s29
    %s36 = sor.u32 %s34, %s35
    %p37 = scmp.eq.s32.totalorder %s36, 0
    %s39 = sadd.s32 %s38, 1
    %s40 = scalar_select %p37, %s38, %s39
    %p43 = pneg %p37
    %p44 = scmp.eq.s32.totalorder %s14, 1
    %p45 = por %p43, %p44
    %p46 = scmp.ne.s32.totalorder %s38, %s41
    %p47 = scmp.eq.s32.totalorder %s14, 0
    %p48 = por %p46, %p47
    %p49 = scmp.ne.s32.totalorder %s38, %s41
    %p50 = scmp.eq.s32.totalorder %s19, 1
    %p51 = por %p49, %p50
    %p52 = scmp.ne.s32.totalorder %s41, %s42
    %p53 = scmp.eq.s32.totalorder %s19, 0
    %p54 = por %p52, %p53
    %p55 = scmp.ne.s32.totalorder %s41, %s42
    %p56 = scmp.eq.s32.totalorder %s20, 1
    %p57 = por %p55, %p56
    %p59 = scmp.ne.s32.totalorder %s42, %s58
    %p60 = scmp.eq.s32.totalorder %s20, 0
    %p61 = por %p59, %p60
    %s62 = ssub.s32 %s21, %s33
    %s63 = ssub.s32 %s22, %s29
    %s64 = sor.u32 %s62, %s63
    %p65 = scmp.eq.s32.totalorder %s64, 0
    %s67 = sadd.s32 %s66, 1
    %s68 = scalar_select %p65, %s66, %s67
    %p71 = pneg %p65
    %p72 = scmp.eq.s32.totalorder %s14, 1
    %p73 = por %p71, %p72
    %p74 = scmp.ne.s32.totalorder %s66, %s69
    %p75 = scmp.eq.s32.totalorder %s14, 0
    %p76 = por %p74, %p75
    %p77 = scmp.ne.s32.totalorder %s66, %s69
    %p78 = scmp.eq.s32.totalorder %s19, 1
    %p79 = por %p77, %p78
    %p80 = scmp.ne.s32.totalorder %s69, %s70
    %p81 = scmp.eq.s32.totalorder %s19, 0
    %p82 = por %p80, %p81
    %p83 = scmp.ne.s32.totalorder %s69, %s70
    %p84 = scmp.eq.s32.totalorder %s20, 1
    %p85 = por %p83, %p84
    %p87 = scmp.ne.s32.totalorder %s70, %s86
    %p88 = scmp.eq.s32.totalorder %s20, 0
    %p89 = por %p87, %p88
    %s90 = ssub.s32 %s21, %s33
    %s91 = ssub.s32 %s22, %s29
    %s92 = sor.u32 %s90, %s91
    %p93 = scmp.eq.s32.totalorder %s92, 0
    %s95 = sadd.s32 %s94, 1
    %s96 = scalar_select %p93, %s94, %s95
    %p99 = pneg %p93
    %p100 = scmp.eq.s32.totalorder %s14, 1
    %p101 = por %p99, %p100
    %p102 = scmp.ne.s32.totalorder %s94, %s97
    %p103 = scmp.eq.s32.totalorder %s14, 0
    %p104 = por %p102, %p103
    %p105 = scmp.ne.s32.totalorder %s94, %s97
    %p106 = scmp.eq.s32.totalorder %s19, 1
    %p107 = por %p105, %p106
    %p108 = scmp.ne.s32.totalorder %s97, %s98
    %p109 = scmp.eq.s32.totalorder %s19, 0
    %p110 = por %p108, %p109
    %p111 = scmp.ne.s32.totalorder %s97, %s98
    %p112 = scmp.eq.s32.totalorder %s20, 1
    %p113 = por %p111, %p112
    %p115 = scmp.ne.s32.totalorder %s98, %s114
    %p116 = scmp.eq.s32.totalorder %s20, 0
    %p117 = por %p115, %p116
    %s118 = ssub.s32 %s21, %s33
    %s119 = ssub.s32 %s22, %s29
    %s120 = sor.u32 %s118, %s119
    %p121 = scmp.eq.s32.totalorder %s120, 0
    %s123 = sadd.s32 %s122, 1
    %s124 = scalar_select %p121, %s122, %s123
    %p127 = pneg %p121
    %p128 = scmp.eq.s32.totalorder %s14, 1
    %p129 = por %p127, %p128
    %p130 = scmp.ne.s32.totalorder %s122, %s125
    %p131 = scmp.eq.s32.totalorder %s14, 0
    %p132 = por %p130, %p131
    %p133 = scmp.ne.s32.totalorder %s122, %s125
    %p134 = scmp.eq.s32.totalorder %s19, 1
    %p135 = por %p133, %p134
    %p136 = scmp.ne.s32.totalorder %s125, %s126
    %p137 = scmp.eq.s32.totalorder %s19, 0
    %p138 = por %p136, %p137
    %p139 = scmp.ne.s32.totalorder %s125, %s126
    %p140 = scmp.eq.s32.totalorder %s20, 1
    %p141 = por %p139, %p140
    %p143 = scmp.ne.s32.totalorder %s126, %s142
    %p144 = scmp.eq.s32.totalorder %s20, 0
    %p145 = por %p143, %p144
    %s146 = ssub.s32 %s21, %s33
    %s147 = ssub.s32 %s22, %s29
    %s148 = sor.u32 %s146, %s147
    %p149 = scmp.eq.s32.totalorder %s148, 0
    %s151 = sadd.s32 %s150, 1
    %s152 = scalar_select %p149, %s150, %s151
    %p155 = pneg %p149
    %p156 = scmp.eq.s32.totalorder %s14, 1
    %p157 = por %p155, %p156
    %p158 = scmp.ne.s32.totalorder %s150, %s153
    %p159 = scmp.eq.s32.totalorder %s14, 0
    %p160 = por %p158, %p159
    %p161 = scmp.ne.s32.totalorder %s150, %s153
    %p162 = scmp.eq.s32.totalorder %s19, 1
    %p163 = por %p161, %p162
    %p164 = scmp.ne.s32.totalorder %s153, %s154
    %p165 = scmp.eq.s32.totalorder %s19, 0
    %p166 = por %p164, %p165
    %p167 = scmp.ne.s32.totalorder %s153, %s154
    %p168 = scmp.eq.s32.totalorder %s20, 1
    %p169 = por %p167, %p168
    %p171 = scmp.ne.s32.totalorder %s154, %s170
    %p172 = scmp.eq.s32.totalorder %s20, 0
    %p173 = por %p171, %p172
    %s174 = ssub.s32 %s21, %s33
    %s175 = ssub.s32 %s22, %s29
    %s176 = sor.u32 %s174, %s175
    %p177 = scmp.eq.s32.totalorder %s176, 0
    %s179 = sadd.s32 %s178, 1
    %s180 = scalar_select %p177, %s178, %s179
    %p183 = pneg %p177
    %p184 = scmp.eq.s32.totalorder %s14, 1
    %p185 = por %p183, %p184
    %p186 = scmp.ne.s32.totalorder %s178, %s181
    %p187 = scmp.eq.s32.totalorder %s14, 0
    %p188 = por %p186, %p187
    %p189 = scmp.ne.s32.totalorder %s178, %s181
    %p190 = scmp.eq.s32.totalorder %s19, 1
    %p191 = por %p189, %p190
    %p192 = scmp.ne.s32.totalorder %s181, %s182
    %p193 = scmp.eq.s32.totalorder %s19, 0
    %p194 = por %p192, %p193
    %p195 = scmp.ne.s32.totalorder %s181, %s182
    %p196 = scmp.eq.s32.totalorder %s20, 1
    %p197 = por %p195, %p196
    %p199 = scmp.ne.s32.totalorder %s182, %s198
    %p200 = scmp.eq.s32.totalorder %s20, 0
    %p201 = por %p199, %p200
    %s202 = ssub.s32 %s21, %s33
    %s203 = ssub.s32 %s22, %s29
    %s204 = sor.u32 %s202, %s203
    %p205 = scmp.eq.s32.totalorder %s204, 0
    %s207 = sadd.s32 %s206, 1
    %s208 = scalar_select %p205, %s206, %s207
    %p211 = pneg %p205
    %p212 = scmp.eq.s32.totalorder %s14, 1
    %p213 = por %p211, %p212
    %p214 = scmp.ne.s32.totalorder %s206, %s209
    %p215 = scmp.eq.s32.totalorder %s14, 0
    %p216 = por %p214, %p215
    %p217 = scmp.ne.s32.totalorder %s206, %s209
    %p218 = scmp.eq.s32.totalorder %s19, 1
    %p219 = por %p217, %p218
    %p220 = scmp.ne.s32.totalorder %s209, %s210
    %p221 = scmp.eq.s32.totalorder %s19, 0
    %p222 = por %p220, %p221
    %p223 = scmp.ne.s32.totalorder %s209, %s210
    %p224 = scmp.eq.s32.totalorder %s20, 1
    %p225 = por %p223, %p224
    %p227 = scmp.ne.s32.totalorder %s210, %s226
    %p228 = scmp.eq.s32.totalorder %s20, 0
    %p229 = por %p227, %p228
    %s230 = ssub.s32 %s21, %s33
    %s231 = ssub.s32 %s22, %s29
    %s232 = sor.u32 %s230, %s231
    %p233 = scmp.eq.s32.totalorder %s232, 0
    %s235 = sadd.s32 %s234, 1
    %s236 = scalar_select %p233, %s234, %s235
    %p239 = pneg %p233
    %p240 = scmp.eq.s32.totalorder %s14, 1
    %p241 = por %p239, %p240
    %p242 = scmp.ne.s32.totalorder %s234, %s237
    %p243 = scmp.eq.s32.totalorder %s14, 0
    %p244 = por %p242, %p243
    %p245 = scmp.ne.s32.totalorder %s234, %s237
    %p246 = scmp.eq.s32.totalorder %s19, 1
    %p247 = por %p245, %p246
    %p248 = scmp.ne.s32.totalorder %s237, %s238
    %p249 = scmp.eq.s32.totalorder %s19, 0
    %p250 = por %p248, %p249
    %p251 = scmp.ne.s32.totalorder %s237, %s238
    %p252 = scmp.eq.s32.totalorder %s20, 1
    %p253 = por %p251, %p252
    %p255 = scmp.ne.s32.totalorder %s238, %s254
    %p256 = scmp.eq.s32.totalorder %s20, 0
    %p257 = por %p255, %p256
    %p258 = scmp.le.s32.totalorder 1, %s14
    %p259 = scmp.lt.s32.totalorder %s14, 3
    %p260 = pnand %p258, %p259
    %p261 = pneg %p260
    // Predicated region
    $region9: #{fourier_up_block_forward.7} parent=5 // pred_check
      _
    $region10: #{fourier_up_block_forward.7} parent=5 // pred_check_branch
      %263 = sbr.rel (%p260) target = $region12
    $region11: #{fourier_up_block_forward.7} parent=5 // pred_region
      %s264 = ssub.s32 %s14, 1
    $region12: #{fourier_up_block_forward.7} parent=5 // pred_fallthru
      _
    %p265 = scmp.lt.s32.totalorder %s14, 2
    // Predicated region
    $region13: #{fourier_up_block_forward.7} parent=5 // pred_check
      %p266 = pneg %p265
    $region14: #{fourier_up_block_forward.7} parent=5 // pred_check_branch
      %268 = sbr.rel (%p266) target = $region16
    $region15: #{fourier_up_block_forward.7} parent=5 // pred_region
      // Predicated region
      $region17: #{fourier_up_block_forward.7} parent=15 // pred_check
        %p269 = pneg %p48
      $region18: #{fourier_up_block_forward.7} parent=15 // pred_check_branch
        %271 = sbr.rel (%p269) target = $region20
      $region19: #{fourier_up_block_forward.7} parent=15 // pred_region
        %p272 = scmp.lt.s32.totalorder %s21, 1
        %s273 = scalar_select %p272, %s21, 1
        %p274 = scmp.lt.s32.totalorder %s22, 0
        %s275 = scalar_select %p274, %s22, 0
        %s276 = smul.addr %s273, 2
        %s277 = sadd.s32 %s275, %s276
        %s278 = smul.addr %s277, 8
        %s279 = scalar_lea.vmem %s0, %s278
      $region20: #{fourier_up_block_forward.7} parent=15 // pred_fallthru
        _
      // Predicated region
      $region21: #{fourier_up_block_forward.7} parent=15 // pred_check
        %p280 = pneg %p76
      $region22: #{fourier_up_block_forward.7} parent=15 // pred_check_branch
        %282 = sbr.rel (%p280) target = $region24
      $region23: #{fourier_up_block_forward.7} parent=15 // pred_region
        %p283 = scmp.lt.s32.totalorder %s21, 1
        %s284 = scalar_select %p283, %s21, 1
        %p285 = scmp.lt.s32.totalorder %s22, 0
        %s286 = scalar_select %p285, %s22, 0
        %s287 = smul.addr %s284, 2
        %s288 = sadd.s32 %s286, %s287
        %s289 = smul.addr %s288, 8
        %s290 = scalar_lea.vmem %s1, %s289
      $region24: #{fourier_up_block_forward.7} parent=15 // pred_fallthru
        _
      // Predicated region
      $region25: #{fourier_up_block_forward.7} parent=15 // pred_check
        %p291 = pneg %p104
      $region26: #{fourier_up_block_forward.7} parent=15 // pred_check_branch
        %293 = sbr.rel (%p291) target = $region28
      $region27: #{fourier_up_block_forward.7} parent=15 // pred_region
        %p294 = scmp.lt.s32.totalorder %s21, 1
        %s295 = scalar_select %p294, %s21, 1
        %p296 = scmp.lt.s32.totalorder %s22, 0
        %s297 = scalar_select %p296, %s22, 0
        %s298 = smul.addr %s295, 2
        %s299 = sadd.s32 %s297, %s298
        %s300 = scalar_lea.vmem %s2, %s299
      $region28: #{fourier_up_block_forward.7} parent=15 // pred_fallthru
        _
      // Predicated region
      $region29: #{fourier_up_block_forward.7} parent=15 // pred_check
        %p301 = pneg %p132
      $region30: #{fourier_up_block_forward.7} parent=15 // pred_check_branch
        %303 = sbr.rel (%p301) target = $region32
      $region31: #{fourier_up_block_forward.7} parent=15 // pred_region
        %p304 = scmp.lt.s32.totalorder %s21, 1
        %s305 = scalar_select %p304, %s21, 1
        %p306 = scmp.lt.s32.totalorder %s22, 0
        %s307 = scalar_select %p306, %s22, 0
        %s308 = smul.addr %s305, 2
        %s309 = sadd.s32 %s307, %s308
        %s310 = scalar_lea.vmem %s3, %s309
      $region32: #{fourier_up_block_forward.7} parent=15 // pred_fallthru
        _
      // Predicated region
      $region33: #{fourier_up_block_forward.7} parent=15 // pred_check
        %p311 = pneg %p160
      $region34: #{fourier_up_block_forward.7} parent=15 // pred_check_branch
        %313 = sbr.rel (%p311) target = $region36
      $region35: #{fourier_up_block_forward.7} parent=15 // pred_region
        %p314 = scmp.lt.s32.totalorder %s21, 1
        %s315 = scalar_select %p314, %s21, 1
        %p316 = scmp.lt.s32.totalorder %s22, 0
        %s317 = scalar_select %p316, %s22, 0
        %s318 = smul.addr %s315, 8
        %s319 = sadd.s32 %s317, %s318
        %s320 = smul.addr %s319, 4
        %s321 = scalar_lea.vmem %s4, %s320
      $region36: #{fourier_up_block_forward.7} parent=15 // pred_fallthru
        _
      // Predicated region
      $region37: #{fourier_up_block_forward.7} parent=15 // pred_check
        %p322 = pneg %p188
      $region38: #{fourier_up_block_forward.7} parent=15 // pred_check_branch
        %324 = sbr.rel (%p322) target = $region40
      $region39: #{fourier_up_block_forward.7} parent=15 // pred_region
        %p325 = scmp.lt.s32.totalorder %s21, 1
        %s326 = scalar_select %p325, %s21, 1
        %p327 = scmp.lt.s32.totalorder %s22, 0
        %s328 = scalar_select %p327, %s22, 0
        %s329 = smul.addr %s326, 8
        %s330 = sadd.s32 %s328, %s329
        %s331 = smul.addr %s330, 4
        %s332 = scalar_lea.vmem %s5, %s331
      $region40: #{fourier_up_block_forward.7} parent=15 // pred_fallthru
        _
    $region16: #{fourier_up_block_forward.7} parent=5 // pred_fallthru
      _
    %p333 = scmp.le.s32.totalorder 1, %s14
    %p334 = scmp.lt.s32.totalorder %s14, 3
    %p335 = pnand %p333, %p334
    %p336 = pneg %p335
    // Predicated region
    $region41: #{fourier_up_block_forward.7} parent=5 // pred_check
      _
    $region42: #{fourier_up_block_forward.7} parent=5 // pred_check_branch
      %338 = sbr.rel (%p335) target = $region44
    $region43: #{fourier_up_block_forward.7} parent=5 // pred_region
      %s339 = ssub.s32 %s14, 1
      %p340 = scmp.lt.s32.totalorder %s23, 1
      %s341 = scalar_select %p340, %s23, 1
      %p342 = scmp.lt.s32.totalorder %s24, 0
      %s343 = scalar_select %p342, %s24, 0
      %s344 = smul.addr %s341, 2
      %s345 = sadd.s32 %s343, %s344
      %s346 = smul.addr %s345, 8
      %s347 = scalar_lea.vmem %s0, %s346
      %p348 = pneg %p54
      %p349 = pneg %p51
      %p350 = scmp.lt.s32.totalorder %s23, 1
      %s351 = scalar_select %p350, %s23, 1
      %p352 = scmp.lt.s32.totalorder %s24, 0
      %s353 = scalar_select %p352, %s24, 0
      %s354 = smul.addr %s351, 2
      %s355 = sadd.s32 %s353, %s354
      %s356 = smul.addr %s355, 8
      %s357 = scalar_lea.vmem %s1, %s356
      %p358 = pneg %p82
      %p359 = pneg %p79
      %p360 = scmp.lt.s32.totalorder %s23, 1
      %s361 = scalar_select %p360, %s23, 1
      %p362 = scmp.lt.s32.totalorder %s24, 0
      %s363 = scalar_select %p362, %s24, 0
      %s364 = smul.addr %s361, 2
      %s365 = sadd.s32 %s363, %s364
      %s366 = scalar_lea.vmem %s2, %s365
      %p367 = pneg %p110
      %p368 = pneg %p107
      %p369 = scmp.lt.s32.totalorder %s23, 1
      %s370 = scalar_select %p369, %s23, 1
      %p371 = scmp.lt.s32.totalorder %s24, 0
      %s372 = scalar_select %p371, %s24, 0
      %s373 = smul.addr %s370, 2
      %s374 = sadd.s32 %s372, %s373
      %s375 = scalar_lea.vmem %s3, %s374
      %p376 = pneg %p138
      %p377 = pneg %p135
      %p378 = scmp.lt.s32.totalorder %s23, 1
      %s379 = scalar_select %p378, %s23, 1
      %p380 = scmp.lt.s32.totalorder %s24, 0
      %s381 = scalar_select %p380, %s24, 0
      %s382 = smul.addr %s379, 8
      %s383 = sadd.s32 %s381, %s382
      %s384 = smul.addr %s383, 4
      %s385 = scalar_lea.vmem %s4, %s384
      %p386 = pneg %p166
      %p387 = pneg %p163
      %p388 = scmp.lt.s32.totalorder %s23, 1
      %s389 = scalar_select %p388, %s23, 1
      %p390 = scmp.lt.s32.totalorder %s24, 0
      %s391 = scalar_select %p390, %s24, 0
      %s392 = smul.addr %s389, 8
      %s393 = sadd.s32 %s391, %s392
      %s394 = smul.addr %s393, 4
      %s395 = scalar_lea.vmem %s5, %s394
      %p396 = pneg %p194
      %p397 = pneg %p191
      %p398 = pneg %p222
      %p399 = pneg %p219
      %p400 = scmp.lt.s32.totalorder %s23, 1
      %s401 = scalar_select %p400, %s23, 1
      %p402 = scmp.lt.s32.totalorder %s24, 0
      %s403 = scalar_select %p402, %s24, 0
      %s404 = smul.addr %s401, 2
      %s405 = sadd.s32 %s403, %s404
      %s406 = smul.addr %s405, 8
      %s407 = scalar_lea.vmem %s6, %s406
      %p408 = pneg %p250
      %p409 = pneg %p247
      %p410 = scmp.lt.s32.totalorder %s23, 1
      %s411 = scalar_select %p410, %s23, 1
      %p412 = scmp.lt.s32.totalorder %s24, 0
      %s413 = scalar_select %p412, %s24, 0
      %s414 = smul.addr %s411, 2
      %s415 = sadd.s32 %s413, %s414
      %s416 = smul.addr %s415, 8
      %s417 = scalar_lea.vmem %s7, %s416
      %p418 = scmp.lt.s32.totalorder %s23, 1
      %s419 = scalar_select %p418, %s23, 1
      %p420 = scmp.lt.s32.totalorder %s24, 0
      %s421 = scalar_select %p420, %s24, 0
      %s422 = smul.addr %s419, 2
      %s423 = sadd.s32 %s421, %s422
      %s424 = smul.addr %s423, 8
      %s425 = scalar_lea.vmem %s0, %s424
      %p426 = scmp.lt.s32.totalorder %s23, 1
      %s427 = scalar_select %p426, %s23, 1
      %p428 = scmp.lt.s32.totalorder %s24, 0
      %s429 = scalar_select %p428, %s24, 0
      %s430 = smul.addr %s427, 2
      %s431 = sadd.s32 %s429, %s430
      %s432 = smul.addr %s431, 8
      %s433 = scalar_lea.vmem %s1, %s432
      %p434 = scmp.lt.s32.totalorder %s23, 1
      %s435 = scalar_select %p434, %s23, 1
      %p436 = scmp.lt.s32.totalorder %s24, 0
      %s437 = scalar_select %p436, %s24, 0
      %s438 = smul.addr %s435, 2
      %s439 = sadd.s32 %s437, %s438
      %s440 = scalar_lea.vmem %s2, %s439
      %p441 = scmp.lt.s32.totalorder %s23, 1
      %s442 = scalar_select %p441, %s23, 1
      %p443 = scmp.lt.s32.totalorder %s24, 0
      %s444 = scalar_select %p443, %s24, 0
      %s445 = smul.addr %s442, 2
      %s446 = sadd.s32 %s444, %s445
      %s447 = scalar_lea.vmem %s3, %s446
      %p448 = scmp.lt.s32.totalorder %s23, 1
      %s449 = scalar_select %p448, %s23, 1
      %p450 = scmp.lt.s32.totalorder %s24, 0
      %s451 = scalar_select %p450, %s24, 0
      %s452 = smul.addr %s449, 8
      %s453 = sadd.s32 %s451, %s452
      %s454 = smul.addr %s453, 4
      %s455 = scalar_lea.vmem %s4, %s454
      %p456 = scmp.lt.s32.totalorder %s23, 1
      %s457 = scalar_select %p456, %s23, 1
      %p458 = scmp.lt.s32.totalorder %s24, 0
      %s459 = scalar_select %p458, %s24, 0
      %s460 = smul.addr %s457, 8
      %s461 = sadd.s32 %s459, %s460
      %s462 = smul.addr %s461, 4
      %s463 = scalar_lea.vmem %s5, %s462
      %p464 = scmp.lt.s32.totalorder %s23, 1
      %s465 = scalar_select %p464, %s23, 1
      %p466 = scmp.lt.s32.totalorder %s24, 0
      %s467 = scalar_select %p466, %s24, 0
      %s468 = smul.addr %s465, 2
      %s469 = sadd.s32 %s467, %s468
      %s470 = smul.addr %s469, 8
      %s471 = scalar_lea.vmem %s6, %s470
      %p472 = scmp.lt.s32.totalorder %s23, 1
      %s473 = scalar_select %p472, %s23, 1
      %p474 = scmp.lt.s32.totalorder %s24, 0
      %s475 = scalar_select %p474, %s24, 0
      %s476 = smul.addr %s473, 2
      %s477 = sadd.s32 %s475, %s476
      %s478 = smul.addr %s477, 8
      %s479 = scalar_lea.vmem %s7, %s478
      %v480 = vld [vmem:[%s425] sm:$0xff]
      %v481 = vld [vmem:[%s425 + $0x8] sm:$0xff]
      %v482 = vld [vmem:[%s433] sm:$0xff]
      %v483 = vld [vmem:[%s433 + $0x8] sm:$0xff]
      %v484 = vld [vmem:[%s440] sm:$0x1]
      %v485 = vld [vmem:[%s440 + $0x1] sm:$0x1]
      %v486 = vld [vmem:[%s447] sm:$0x1]
      %v487 = vld [vmem:[%s447 + $0x1] sm:$0x1]
      %v490 = vperm.slane %v484, 0
      %v491 = vperm.slane %v485, 0
      %v494 = vmul.f32 %v480, %v490
      %v495 = vmul.f32 %v481, %v491
      %v498 = vperm.slane %v486, 0
      %v499 = vperm.slane %v487, 0
      %v502 = vmul.f32 %v482, %v498
      %v503 = vmul.f32 %v483, %v499
      %v504 = vsub.f32 %v494, %v502
      %v505 = vsub.f32 %v495, %v503
      %v506 = vmul.f32 %v480, %v498
      %v507 = vmul.f32 %v481, %v499
      %v508 = vmul.f32 %v482, %v490
      %v509 = vmul.f32 %v483, %v491
      %v510 = vadd.f32 %v506, %v508
      %v511 = vadd.f32 %v507, %v509
      %v512 = vld [vmem:[%s455] sm:$0xf]
      %v513 = vld [vmem:[%s455 + $0x4] sm:$0xf]
      %v514 = vld [vmem:[%s455 + $0x8] sm:$0xf]
      %v515 = vld [vmem:[%s455 + $0xc] sm:$0xf]
      %v516 = vld [vmem:[%s455 + $0x10] sm:$0xf]
      %v517 = vld [vmem:[%s455 + $0x14] sm:$0xf]
      %v518 = vld [vmem:[%s455 + $0x18] sm:$0xf]
      %v519 = vld [vmem:[%s455 + $0x1c] sm:$0xf]
      %v520 = vunpack.c.l.bf16 %v512
      %v521 = vunpack.c.l.bf16 %v513
      %v522 = vunpack.c.l.bf16 %v514
      %v523 = vunpack.c.l.bf16 %v515
      %v524 = vunpack.c.l.bf16 %v516
      %v525 = vunpack.c.l.bf16 %v517
      %v526 = vunpack.c.l.bf16 %v518
      %v527 = vunpack.c.l.bf16 %v519
      %v528 = vld [vmem:[%s463] sm:$0xf]
      %v529 = vld [vmem:[%s463 + $0x4] sm:$0xf]
      %v530 = vld [vmem:[%s463 + $0x8] sm:$0xf]
      %v531 = vld [vmem:[%s463 + $0xc] sm:$0xf]
      %v532 = vld [vmem:[%s463 + $0x10] sm:$0xf]
      %v533 = vld [vmem:[%s463 + $0x14] sm:$0xf]
      %v534 = vld [vmem:[%s463 + $0x18] sm:$0xf]
      %v535 = vld [vmem:[%s463 + $0x1c] sm:$0xf]
      %v536 = vunpack.c.l.bf16 %v528
      %v537 = vunpack.c.l.bf16 %v529
      %v538 = vunpack.c.l.bf16 %v530
      %v539 = vunpack.c.l.bf16 %v531
      %v540 = vunpack.c.l.bf16 %v532
      %v541 = vunpack.c.l.bf16 %v533
      %v542 = vunpack.c.l.bf16 %v534
      %v543 = vunpack.c.l.bf16 %v535
      %v544 = vperm.slane %v504, 0
      %v545 = vperm.slane %v505, 0
      %v546 = vmul.f32 %v544, %v520
      %v547 = vmul.f32 %v545, %v520
      %v548 = vadd.f32 %v546, 0.0
      %v549 = vadd.f32 %v547, 0.0
      %v550 = vperm.slane %v510, 0
      %v551 = vperm.slane %v511, 0
      %v552 = vmul.f32 %v550, %v536
      %v553 = vmul.f32 %v551, %v536
      %v554 = vsub.f32 %v548, %v552
      %v555 = vsub.f32 %v549, %v553
      %v556 = vmul.f32 %v544, %v536
      %v557 = vmul.f32 %v545, %v536
      %v558 = vadd.f32 %v556, 0.0
      %v559 = vadd.f32 %v557, 0.0
      %v560 = vmul.f32 %v550, %v520
      %v561 = vmul.f32 %v551, %v520
      %v562 = vadd.f32 %v558, %v560
      %v563 = vadd.f32 %v559, %v561
      %v564 = vperm.slane %v504, 1
      %v565 = vperm.slane %v505, 1
      %v566 = vmul.f32 %v564, %v521
      %v567 = vmul.f32 %v565, %v521
      %v568 = vadd.f32 %v554, %v566
      %v569 = vadd.f32 %v555, %v567
      %v570 = vperm.slane %v510, 1
      %v571 = vperm.slane %v511, 1
      %v572 = vmul.f32 %v570, %v537
      %v573 = vmul.f32 %v571, %v537
      %v574 = vsub.f32 %v568, %v572
      %v575 = vsub.f32 %v569, %v573
      %v576 = vmul.f32 %v564, %v537
      %v577 = vmul.f32 %v565, %v537
      %v578 = vadd.f32 %v562, %v576
      %v579 = vadd.f32 %v563, %v577
      %v580 = vmul.f32 %v570, %v521
      %v581 = vmul.f32 %v571, %v521
      %v582 = vadd.f32 %v578, %v580
      %v583 = vadd.f32 %v579, %v581
      %v584 = vperm.slane %v504, 2
      %v585 = vperm.slane %v505, 2
      %v586 = vmul.f32 %v584, %v522
      %v587 = vmul.f32 %v585, %v522
      %v588 = vadd.f32 %v574, %v586
      %v589 = vadd.f32 %v575, %v587
      %v590 = vperm.slane %v510, 2
      %v591 = vperm.slane %v511, 2
      %v592 = vmul.f32 %v590, %v538
      %v593 = vmul.f32 %v591, %v538
      %v594 = vsub.f32 %v588, %v592
      %v595 = vsub.f32 %v589, %v593
      %v596 = vmul.f32 %v584, %v538
      %v597 = vmul.f32 %v585, %v538
      %v598 = vadd.f32 %v582, %v596
      %v599 = vadd.f32 %v583, %v597
      %v600 = vmul.f32 %v590, %v522
      %v601 = vmul.f32 %v591, %v522
      %v602 = vadd.f32 %v598, %v600
      %v603 = vadd.f32 %v599, %v601
      %v604 = vperm.slane %v504, 3
      %v605 = vperm.slane %v505, 3
      %v606 = vmul.f32 %v604, %v523
      %v607 = vmul.f32 %v605, %v523
      %v608 = vadd.f32 %v594, %v606
      %v609 = vadd.f32 %v595, %v607
      %v610 = vperm.slane %v510, 3
      %v611 = vperm.slane %v511, 3
      %v612 = vmul.f32 %v610, %v539
      %v613 = vmul.f32 %v611, %v539
      %v614 = vsub.f32 %v608, %v612
      %v615 = vsub.f32 %v609, %v613
      %v616 = vmul.f32 %v604, %v539
      %v617 = vmul.f32 %v605, %v539
      %v618 = vadd.f32 %v602, %v616
      %v619 = vadd.f32 %v603, %v617
      %v620 = vmul.f32 %v610, %v523
      %v621 = vmul.f32 %v611, %v523
      %v622 = vadd.f32 %v618, %v620
      %v623 = vadd.f32 %v619, %v621
      %v624 = vperm.slane %v504, 4
      %v625 = vperm.slane %v505, 4
      %v626 = vmul.f32 %v624, %v524
      %v627 = vmul.f32 %v625, %v524
      %v628 = vadd.f32 %v614, %v626
      %v629 = vadd.f32 %v615, %v627
      %v630 = vperm.slane %v510, 4
      %v631 = vperm.slane %v511, 4
      %v632 = vmul.f32 %v630, %v540
      %v633 = vmul.f32 %v631, %v540
      %v634 = vsub.f32 %v628, %v632
      %v635 = vsub.f32 %v629, %v633
      %v636 = vmul.f32 %v624, %v540
      %v637 = vmul.f32 %v625, %v540
      %v638 = vadd.f32 %v622, %v636
      %v639 = vadd.f32 %v623, %v637
      %v640 = vmul.f32 %v630, %v524
      %v641 = vmul.f32 %v631, %v524
      %v642 = vadd.f32 %v638, %v640
      %v643 = vadd.f32 %v639, %v641
      %v644 = vperm.slane %v504, 5
      %v645 = vperm.slane %v505, 5
      %v646 = vmul.f32 %v644, %v525
      %v647 = vmul.f32 %v645, %v525
      %v648 = vadd.f32 %v634, %v646
      %v649 = vadd.f32 %v635, %v647
      %v650 = vperm.slane %v510, 5
      %v651 = vperm.slane %v511, 5
      %v652 = vmul.f32 %v650, %v541
      %v653 = vmul.f32 %v651, %v541
      %v654 = vsub.f32 %v648, %v652
      %v655 = vsub.f32 %v649, %v653
      %v656 = vmul.f32 %v644, %v541
      %v657 = vmul.f32 %v645, %v541
      %v658 = vadd.f32 %v642, %v656
      %v659 = vadd.f32 %v643, %v657
      %v660 = vmul.f32 %v650, %v525
      %v661 = vmul.f32 %v651, %v525
      %v662 = vadd.f32 %v658, %v660
      %v663 = vadd.f32 %v659, %v661
      %v664 = vperm.slane %v504, 6
      %v665 = vperm.slane %v505, 6
      %v666 = vmul.f32 %v664, %v526
      %v667 = vmul.f32 %v665, %v526
      %v668 = vadd.f32 %v654, %v666
      %v669 = vadd.f32 %v655, %v667
      %v670 = vperm.slane %v510, 6
      %v671 = vperm.slane %v511, 6
      %v672 = vmul.f32 %v670, %v542
      %v673 = vmul.f32 %v671, %v542
      %v674 = vsub.f32 %v668, %v672
      %v675 = vsub.f32 %v669, %v673
      %v676 = vmul.f32 %v664, %v542
      %v677 = vmul.f32 %v665, %v542
      %v678 = vadd.f32 %v662, %v676
      %v679 = vadd.f32 %v663, %v677
      %v680 = vmul.f32 %v670, %v526
      %v681 = vmul.f32 %v671, %v526
      %v682 = vadd.f32 %v678, %v680
      %v683 = vadd.f32 %v679, %v681
      %v684 = vperm.slane %v504, 7
      %v685 = vperm.slane %v505, 7
      %v686 = vmul.f32 %v684, %v527
      %v687 = vmul.f32 %v685, %v527
      %v688 = vadd.f32 %v674, %v686
      %v689 = vadd.f32 %v675, %v687
      %v690 = vperm.slane %v510, 7
      %v691 = vperm.slane %v511, 7
      %v692 = vmul.f32 %v690, %v543
      %v693 = vmul.f32 %v691, %v543
      %v694 = vsub.f32 %v688, %v692
      %v695 = vsub.f32 %v689, %v693
      %v696 = vmul.f32 %v684, %v543
      %v697 = vmul.f32 %v685, %v543
      %v698 = vadd.f32 %v682, %v696
      %v699 = vadd.f32 %v683, %v697
      %v700 = vmul.f32 %v690, %v527
      %v701 = vmul.f32 %v691, %v527
      %v702 = vadd.f32 %v698, %v700
      %v703 = vadd.f32 %v699, %v701
      %vm704 = vcmask 130048
      %705 = vst.msk [vmem:[%s471] sm:$0xff] %vm704, %v694
      %706 = vst.msk [vmem:[%s471 + $0x8] sm:$0xff] %vm704, %v695
      %707 = vst.msk [vmem:[%s479] sm:$0xff] %vm704, %v702
      %708 = vst.msk [vmem:[%s479 + $0x8] sm:$0xff] %vm704, %v703
      %p709 = scmp.lt.s32.totalorder %s23, 1
      %s710 = scalar_select %p709, %s23, 1
      %p711 = scmp.lt.s32.totalorder %s24, 0
      %s712 = scalar_select %p711, %s24, 0
      %s713 = smul.addr %s710, 2
      %s714 = sadd.s32 %s712, %s713
      %s715 = smul.addr %s714, 8
      %s716 = scalar_lea.vmem %s6, %s715
      %p717 = scmp.lt.s32.totalorder %s23, 1
      %s718 = scalar_select %p717, %s23, 1
      %p719 = scmp.lt.s32.totalorder %s24, 0
      %s720 = scalar_select %p719, %s24, 0
      %s721 = smul.addr %s718, 2
      %s722 = sadd.s32 %s720, %s721
      %s723 = smul.addr %s722, 8
      %s724 = scalar_lea.vmem %s7, %s723
      // Predicated region
      $region45: #{fourier_up_block_forward.7} parent=43 // pred_check
        %p725 = pneg %p219
      $region46: #{fourier_up_block_forward.7} parent=43 // pred_check_branch
        %727 = sbr.rel (%p725) target = $region48
      $region47: #{fourier_up_block_forward.7} parent=43 // pred_region
        _
      $region48: #{fourier_up_block_forward.7} parent=43 // pred_fallthru
        _
      // Predicated region
      $region49: #{fourier_up_block_forward.7} parent=43 // pred_check
        %p728 = pneg %p247
      $region50: #{fourier_up_block_forward.7} parent=43 // pred_check_branch
        %730 = sbr.rel (%p728) target = $region52
      $region51: #{fourier_up_block_forward.7} parent=43 // pred_region
        _
      $region52: #{fourier_up_block_forward.7} parent=43 // pred_fallthru
        _
    $region44: #{fourier_up_block_forward.7} parent=5 // pred_fallthru
      _
    %p731 = scmp.le.s32.totalorder 2, %s14
    // Predicated region
    $region53: #{fourier_up_block_forward.7} parent=5 // pred_check
      %p732 = pneg %p731
    $region54: #{fourier_up_block_forward.7} parent=5 // pred_check_branch
      %734 = sbr.rel (%p732) target = $region56
    $region55: #{fourier_up_block_forward.7} parent=5 // pred_region
      %s735 = ssub.s32 %s14, 2
      // Predicated region
      $region57: #{fourier_up_block_forward.7} parent=55 // pred_check
        %p736 = pneg %p225
      $region58: #{fourier_up_block_forward.7} parent=55 // pred_check_branch
        %738 = sbr.rel (%p736) target = $region60
      $region59: #{fourier_up_block_forward.7} parent=55 // pred_region
        %p739 = scmp.lt.s32.totalorder %s25, 1
        %s740 = scalar_select %p739, %s25, 1
        %p741 = scmp.lt.s32.totalorder %s26, 0
        %s742 = scalar_select %p741, %s26, 0
        %s743 = smul.addr %s740, 2
        %s744 = sadd.s32 %s742, %s743
        %s745 = smul.addr %s744, 8
        %s746 = scalar_lea.vmem %s6, %s745
      $region60: #{fourier_up_block_forward.7} parent=55 // pred_fallthru
        _
      // Predicated region
      $region61: #{fourier_up_block_forward.7} parent=55 // pred_check
        %p747 = pneg %p253
      $region62: #{fourier_up_block_forward.7} parent=55 // pred_check_branch
        %749 = sbr.rel (%p747) target = $region64
      $region63: #{fourier_up_block_forward.7} parent=55 // pred_region
        %p750 = scmp.lt.s32.totalorder %s25, 1
        %s751 = scalar_select %p750, %s25, 1
        %p752 = scmp.lt.s32.totalorder %s26, 0
        %s753 = scalar_select %p752, %s26, 0
        %s754 = smul.addr %s751, 2
        %s755 = sadd.s32 %s753, %s754
        %s756 = smul.addr %s755, 8
        %s757 = scalar_lea.vmem %s7, %s756
      $region64: #{fourier_up_block_forward.7} parent=55 // pred_fallthru
        _
    $region56: #{fourier_up_block_forward.7} parent=5 // pred_fallthru
      _
  $region6: #{fourier_up_block_forward.7} parent=0 // loop_footer
    %s18 = sadd.s32 1, %s14
  $region7: #{fourier_up_block_forward.7} parent=0 // loop_footer_branch
    %13 = sbr.rel target = $region3
  $region8: #{fourier_up_block_forward.7} parent=0 // loop_exit
    _

</llo_original>
